<compile_context>
chip_gen: v6e
topology: v6e:2x2x1
jax: 0.10.0
libtpu: 0.0.40
codegen_flags: <defaults>
</compile_context>

<pallas_src>
import jax
import jax.numpy as jnp
from jax.experimental import pallas as pl
from jax.experimental.pallas import tpu as pltpu

# ----------------------------- configuration -------------------------------
FEATURE_SIZE = 64
VOCAB_SIZE   = 128       # output vocab of the caption head
MAX_SEQ_LEN  = 8
BATCH        = 2
BERT_HIDDEN  = 768
IMG_HIDDEN   = 256
FUSE_HIDDEN  = 512
BERT_VOCAB   = 1000      # synthetic text-embedding table size
LN_EPS       = 1e-5      # PyTorch nn.LayerNorm default
ROWS         = BATCH * MAX_SEQ_LEN


def _layernorm_f32(x, g, b):
    m = jnp.mean(x, axis=-1, keepdims=True)
    v = jnp.mean((x - m) ** 2, axis=-1, keepdims=True)
    return (x - m) * jax.lax.rsqrt(v + LN_EPS) * g + b


# ----------------------------- fused Pallas kernel --------------------------
def fused_caption_kernel(ids_ref, mask_ref, ximg_ref, table_ref,
                         w_img_ref, b_img_ref, g_img_ref, beta_img_ref,
                         wf_img_ref, wf_txt_ref, bf_ref, gf_ref, betaf_ref,
                         wo_ref, bo_ref,
                         o_ref,
                         txt_buf, dma_sems):
    sem = dma_sems.at[0]

    # 1) kick off the per-row gathers from the HBM embedding table, all on a
    #    single shared DMA semaphore.  They overlap with the image-encoder
    #    compute below.  (All SMEM scalar reads happen before any .wait().)
    copies = [
        pltpu.make_async_copy(table_ref.at[ids_ref[r]], txt_buf.at[r], sem)
        for r in range(ROWS)
    ]
    for c in copies:
        c.start()

    # 2) image encoder on the raw (BATCH, 64) rows:
    #    Linear(64->256) + ReLU + LayerNorm, then project once per batch row
    #    through the image half of the fusion weight (fold of the seq broadcast).
    x = ximg_ref[...].astype(jnp.bfloat16)                               # (B, 64)
    h = jnp.dot(x, w_img_ref[...], preferred_element_type=jnp.float32)   # (B, 256) f32
    h = jnp.maximum(h + b_img_ref[...], 0.0)
    img_emb = _layernorm_f32(h, g_img_ref[...], beta_img_ref[...])       # (B, 256) f32
    img_proj = jnp.dot(img_emb.astype(jnp.bfloat16), wf_img_ref[...],
                       preferred_element_type=jnp.float32)               # (B, 512) f32

    # sublane-broadcast each batch row across its S sequence rows -> (16, 512)
    img_rows = jnp.concatenate(
        [jnp.broadcast_to(img_proj[b:b + 1, :], (MAX_SEQ_LEN, FUSE_HIDDEN))
         for b in range(BATCH)],
        axis=0)

    # 3) wait for the text-embedding row DMAs (shared sem, per-copy waits)
    for c in copies:
        c.wait()

    # 4) fusion + output head over ALL 16 rows with single matmuls.
    txt = (txt_buf[...] * mask_ref[...]).astype(jnp.bfloat16)            # (16, 768)
    f = jnp.dot(txt, wf_txt_ref[...],
                preferred_element_type=jnp.float32)                      # (16, 512) f32
    f = jnp.maximum(f + img_rows + bf_ref[...], 0.0)
    f = _layernorm_f32(f, gf_ref[...], betaf_ref[...])
    o_ref[...] = (jnp.dot(f.astype(jnp.bfloat16), wo_ref[...],
                          preferred_element_type=jnp.float32)
                  + bo_ref[...])                                         # (16, 128) f32


# ------------------------------ wrapper --------------------------------------
def image_caption_forward(params, image_features, input_ids, attention_mask):
    B, S = input_ids.shape
    assert B == BATCH and S == MAX_SEQ_LEN

    # tiny flatten ops only (no padding / no big wrapper intermediates)
    ids_flat = input_ids.reshape(ROWS).astype(jnp.int32)
    mask_flat = attention_mask.reshape(ROWS, 1).astype(jnp.float32)

    vmem = pl.BlockSpec(memory_space=pltpu.MemorySpace.VMEM)
    smem = pl.BlockSpec(memory_space=pltpu.MemorySpace.SMEM)
    hbm = pl.BlockSpec(memory_space=pl.ANY)   # big table stays in HBM; rows DMA'd

    flops = 2 * (BATCH * FEATURE_SIZE * IMG_HIDDEN
                 + BATCH * IMG_HIDDEN * FUSE_HIDDEN
                 + ROWS * BERT_HIDDEN * FUSE_HIDDEN
                 + ROWS * FUSE_HIDDEN * VOCAB_SIZE)
    weight_bytes = 2 * (FEATURE_SIZE * IMG_HIDDEN + IMG_HIDDEN * FUSE_HIDDEN
                        + BERT_HIDDEN * FUSE_HIDDEN + FUSE_HIDDEN * VOCAB_SIZE)
    bytes_accessed = (weight_bytes
                      + 4 * (ROWS * BERT_HIDDEN          # gathered table rows
                             + ROWS * VOCAB_SIZE         # logits out
                             + BATCH * FEATURE_SIZE      # image features
                             + ROWS))                    # mask

    logits_rows = pl.pallas_call(
        fused_caption_kernel,
        out_shape=jax.ShapeDtypeStruct((ROWS, VOCAB_SIZE), jnp.float32),
        in_specs=[smem, vmem, vmem, hbm] + [vmem] * 11,
        out_specs=vmem,
        scratch_shapes=[
            pltpu.VMEM((ROWS, BERT_HIDDEN), jnp.float32),   # gathered text rows
            pltpu.SemaphoreType.DMA((1,)),                  # one shared DMA sem
        ],
        cost_estimate=pl.CostEstimate(flops=flops, transcendentals=32,
                                      bytes_accessed=bytes_accessed),
    )(ids_flat, mask_flat, image_features.astype(jnp.float32),
      params["bert_table"],
      params["w_img"], params["b_img"], params["g_img"], params["beta_img"],
      params["wf_img"], params["wf_txt"], params["bf"], params["gf"],
      params["betaf"], params["wo"], params["bo"])

    return logits_rows.reshape(B, S, VOCAB_SIZE)


# ------------------------- reference (pure JAX) ------------------------------
# Mirrors the kernel's numerics (bf16 matmul operands, f32 accumulation and
# LayerNorm), so the comparison tolerance can be tight.
def reference_forward(params, image_features, input_ids, attention_mask):
    def layernorm(x, g, b):
        m = jnp.mean(x, axis=-1, keepdims=True)
        v = jnp.mean((x - m) ** 2, axis=-1, keepdims=True)
        return (x - m) * jax.lax.rsqrt(v + LN_EPS) * g + b

    x = image_features.astype(jnp.bfloat16)
    h = jnp.dot(x, params["w_img"], preferred_element_type=jnp.float32) + params["b_img"]
    img = layernorm(jnp.maximum(h, 0.0), params["g_img"], params["beta_img"])
    img_proj = jnp.dot(img.astype(jnp.bfloat16), params["wf_img"],
                       preferred_element_type=jnp.float32)               # (B, 512)

    txt = params["bert_table"][input_ids] * attention_mask[..., None].astype(jnp.float32)
    txt_proj = jnp.dot(txt.astype(jnp.bfloat16), params["wf_txt"],
                       preferred_element_type=jnp.float32)               # (B, S, 512)

    fused = txt_proj + img_proj[:, None, :] + params["bf"]
    fused = layernorm(jnp.maximum(fused, 0.0), params["gf"], params["betaf"])
    return jnp.dot(fused.astype(jnp.bfloat16), params["wo"],
                   preferred_element_type=jnp.float32) + params["bo"]


# ------------------------------- main ----------------------------------------
def init_params(key):
    ks = jax.random.split(key, 8)
    bf16 = jnp.bfloat16
    p = {
        # matmul weights in bf16 (f32 accumulate inside the kernel)
        "w_img":  (jax.random.normal(ks[0], (FEATURE_SIZE, IMG_HIDDEN), jnp.float32) * 0.05).astype(bf16),
        "wf_img": (jax.random.normal(ks[1], (IMG_HIDDEN, FUSE_HIDDEN), jnp.float32) * 0.05).astype(bf16),
        "wf_txt": (jax.random.normal(ks[2], (BERT_HIDDEN, FUSE_HIDDEN), jnp.float32) * 0.05).astype(bf16),
        "wo":     (jax.random.normal(ks[3], (FUSE_HIDDEN, VOCAB_SIZE), jnp.float32) * 0.05).astype(bf16),
        # biases / LayerNorm params / embedding table stay f32
        "b_img":    jax.random.normal(ks[4], (1, IMG_HIDDEN), jnp.float32) * 0.01,
        "g_img":    jnp.ones((1, IMG_HIDDEN), jnp.float32),
        "beta_img": jnp.zeros((1, IMG_HIDDEN), jnp.float32),
        "bf":       jax.random.normal(ks[5], (1, FUSE_HIDDEN), jnp.float32) * 0.01,
        "gf":       jnp.ones((1, FUSE_HIDDEN), jnp.float32),
        "betaf":    jnp.zeros((1, FUSE_HIDDEN), jnp.float32),
        "bo":       jax.random.normal(ks[6], (1, VOCAB_SIZE), jnp.float32) * 0.01,
        # f32 on purpose: row-granular DMA into a sublane-packed bf16 buffer is
        # a sub-word strided write; byte saving (~24 KB/call) is not worth it.
        "bert_table": jax.random.normal(ks[7], (BERT_VOCAB, BERT_HIDDEN), jnp.float32) * 0.1,
    }
    return p


if __name__ == "__main__":
    root = jax.random.PRNGKey(0)
    k_params, k_img, k_ids, k_mask = jax.random.split(root, 4)
    params = init_params(k_params)

    image_features = jax.random.normal(k_img, (BATCH, FEATURE_SIZE), jnp.float32)
    input_ids = jax.random.randint(k_ids, (BATCH, MAX_SEQ_LEN), 0, BERT_VOCAB, jnp.int32)
    attention_mask = (jax.random.uniform(k_mask, (BATCH, MAX_SEQ_LEN)) > 0.2).astype(jnp.int32)

    # TODO(synk): the full pretrained BertModel forward has no clean Pallas
    # equivalent; the text encoder is a deterministic embedding lookup masked
    # by attention_mask with the same (B, S, 768) shape/dtype contract.
    logits = image_caption_forward(params, image_features, input_ids, attention_mask)
    logits = jax.block_until_ready(logits)

    ref = reference_forward(params, image_features, input_ids, attention_mask)
    assert logits.shape == (BATCH, MAX_SEQ_LEN, VOCAB_SIZE), logits.shape
    # reference mirrors the kernel's bf16 operand casts -> tight tolerance
    assert jnp.allclose(logits, ref, atol=1e-2, rtol=1e-2), "mismatch vs JAX reference"

    print("KERNEL_OK")
</pallas_src>

<mosaic_0001>
module attributes {stable_mosaic.version = 11 : i64} {
  func.func @fused_caption_kernel(%arg0: memref<16xi32, #tpu.memory_space<smem>>, %arg1: memref<16x1xf32, #tpu.memory_space<vmem>>, %arg2: memref<2x64xf32, #tpu.memory_space<vmem>>, %arg3: memref<1000x768xf32, #tpu.memory_space<any>>, %arg4: memref<64x256xbf16, #tpu.memory_space<vmem>>, %arg5: memref<1x256xf32, #tpu.memory_space<vmem>>, %arg6: memref<1x256xf32, #tpu.memory_space<vmem>>, %arg7: memref<1x256xf32, #tpu.memory_space<vmem>>, %arg8: memref<256x512xbf16, #tpu.memory_space<vmem>>, %arg9: memref<768x512xbf16, #tpu.memory_space<vmem>>, %arg10: memref<1x512xf32, #tpu.memory_space<vmem>>, %arg11: memref<1x512xf32, #tpu.memory_space<vmem>>, %arg12: memref<1x512xf32, #tpu.memory_space<vmem>>, %arg13: memref<512x128xbf16, #tpu.memory_space<vmem>>, %arg14: memref<1x128xf32, #tpu.memory_space<vmem>>, %arg15: memref<16x128xf32, #tpu.memory_space<vmem>>, %arg16: memref<16x768xf32, #tpu.memory_space<vmem>>, %arg17: memref<1x!tpu.dma_semaphore, #tpu.memory_space<semaphore_mem>>) attributes {dimension_semantics = [], scalar_prefetch = 0 : i64, scratch_operands = 2 : i64, tpu.core_type = #tpu.core_type<tc>} {
    %c0 = arith.constant 0 : index
    %0 = memref.load %arg0[%c0] : memref<16xi32, #tpu.memory_space<smem>>
    %c1 = arith.constant 1 : index
    %1 = memref.load %arg0[%c1] : memref<16xi32, #tpu.memory_space<smem>>
    %c2 = arith.constant 2 : index
    %2 = memref.load %arg0[%c2] : memref<16xi32, #tpu.memory_space<smem>>
    %c3 = arith.constant 3 : index
    %3 = memref.load %arg0[%c3] : memref<16xi32, #tpu.memory_space<smem>>
    %c4 = arith.constant 4 : index
    %4 = memref.load %arg0[%c4] : memref<16xi32, #tpu.memory_space<smem>>
    %c5 = arith.constant 5 : index
    %5 = memref.load %arg0[%c5] : memref<16xi32, #tpu.memory_space<smem>>
    %c6 = arith.constant 6 : index
    %6 = memref.load %arg0[%c6] : memref<16xi32, #tpu.memory_space<smem>>
    %c7 = arith.constant 7 : index
    %7 = memref.load %arg0[%c7] : memref<16xi32, #tpu.memory_space<smem>>
    %c8 = arith.constant 8 : index
    %8 = memref.load %arg0[%c8] : memref<16xi32, #tpu.memory_space<smem>>
    %c9 = arith.constant 9 : index
    %9 = memref.load %arg0[%c9] : memref<16xi32, #tpu.memory_space<smem>>
    %c10 = arith.constant 10 : index
    %10 = memref.load %arg0[%c10] : memref<16xi32, #tpu.memory_space<smem>>
    %c11 = arith.constant 11 : index
    %11 = memref.load %arg0[%c11] : memref<16xi32, #tpu.memory_space<smem>>
    %c12 = arith.constant 12 : index
    %12 = memref.load %arg0[%c12] : memref<16xi32, #tpu.memory_space<smem>>
    %c13 = arith.constant 13 : index
    %13 = memref.load %arg0[%c13] : memref<16xi32, #tpu.memory_space<smem>>
    %c14 = arith.constant 14 : index
    %14 = memref.load %arg0[%c14] : memref<16xi32, #tpu.memory_space<smem>>
    %c15 = arith.constant 15 : index
    %15 = memref.load %arg0[%c15] : memref<16xi32, #tpu.memory_space<smem>>
    %c0_i32 = arith.constant 0 : i32
    %c0_i32_0 = arith.constant 0 : i32
    %c0_i32_1 = arith.constant 0 : i32
    %16 = tpu.memref_slice %arg3[%0, %c0_i32_1] : memref<1000x768xf32, #tpu.memory_space<any>> -> memref<1x768xf32, #tpu.memory_space<any>>
    %17 = tpu.memref_squeeze %16 : memref<1x768xf32, #tpu.memory_space<any>> -> memref<768xf32, #tpu.memory_space<any>>
    %c0_i32_2 = arith.constant 0 : i32
    %18 = tpu.memref_slice %arg16[%c0_i32, %c0_i32_2] : memref<16x768xf32, #tpu.memory_space<vmem>> -> memref<1x768xf32, #tpu.memory_space<vmem>>
    %19 = tpu.memref_squeeze %18 : memref<1x768xf32, #tpu.memory_space<vmem>> -> memref<768xf32, #tpu.memory_space<vmem>>
    %20 = tpu.memref_slice %arg17[%c0_i32_0] : memref<1x!tpu.dma_semaphore, #tpu.memory_space<semaphore_mem>> -> memref<1x!tpu.dma_semaphore, #tpu.memory_space<semaphore_mem>>
    %21 = tpu.memref_squeeze %20 : memref<1x!tpu.dma_semaphore, #tpu.memory_space<semaphore_mem>> -> memref<!tpu.dma_semaphore, #tpu.memory_space<semaphore_mem>>
    tpu.enqueue_dma source(%17 : memref<768xf32, #tpu.memory_space<any>>) target(%19 : memref<768xf32, #tpu.memory_space<vmem>>) target_semaphore(%21 : memref<!tpu.dma_semaphore, #tpu.memory_space<semaphore_mem>>)
    %c1_i32 = arith.constant 1 : i32
    %c0_i32_3 = arith.constant 0 : i32
    %c0_i32_4 = arith.constant 0 : i32
    %22 = tpu.memref_slice %arg3[%1, %c0_i32_4] : memref<1000x768xf32, #tpu.memory_space<any>> -> memref<1x768xf32, #tpu.memory_space<any>>
    %23 = tpu.memref_squeeze %22 : memref<1x768xf32, #tpu.memory_space<any>> -> memref<768xf32, #tpu.memory_space<any>>
    %c0_i32_5 = arith.constant 0 : i32
    %24 = tpu.memref_slice %arg16[%c1_i32, %c0_i32_5] : memref<16x768xf32, #tpu.memory_space<vmem>> -> memref<1x768xf32, #tpu.memory_space<vmem>>
    %25 = tpu.memref_squeeze %24 : memref<1x768xf32, #tpu.memory_space<vmem>> -> memref<768xf32, #tpu.memory_space<vmem>>
    %26 = tpu.memref_slice %arg17[%c0_i32_3] : memref<1x!tpu.dma_semaphore, #tpu.memory_space<semaphore_mem>> -> memref<1x!tpu.dma_semaphore, #tpu.memory_space<semaphore_mem>>
    %27 = tpu.memref_squeeze %26 : memref<1x!tpu.dma_semaphore, #tpu.memory_space<semaphore_mem>> -> memref<!tpu.dma_semaphore, #tpu.memory_space<semaphore_mem>>
    tpu.enqueue_dma source(%23 : memref<768xf32, #tpu.memory_space<any>>) target(%25 : memref<768xf32, #tpu.memory_space<vmem>>) target_semaphore(%27 : memref<!tpu.dma_semaphore, #tpu.memory_space<semaphore_mem>>)
    %c2_i32 = arith.constant 2 : i32
    %c0_i32_6 = arith.constant 0 : i32
    %c0_i32_7 = arith.constant 0 : i32
    %28 = tpu.memref_slice %arg3[%2, %c0_i32_7] : memref<1000x768xf32, #tpu.memory_space<any>> -> memref<1x768xf32, #tpu.memory_space<any>>
    %29 = tpu.memref_squeeze %28 : memref<1x768xf32, #tpu.memory_space<any>> -> memref<768xf32, #tpu.memory_space<any>>
    %c0_i32_8 = arith.constant 0 : i32
    %30 = tpu.memref_slice %arg16[%c2_i32, %c0_i32_8] : memref<16x768xf32, #tpu.memory_space<vmem>> -> memref<1x768xf32, #tpu.memory_space<vmem>>
    %31 = tpu.memref_squeeze %30 : memref<1x768xf32, #tpu.memory_space<vmem>> -> memref<768xf32, #tpu.memory_space<vmem>>
    %32 = tpu.memref_slice %arg17[%c0_i32_6] : memref<1x!tpu.dma_semaphore, #tpu.memory_space<semaphore_mem>> -> memref<1x!tpu.dma_semaphore, #tpu.memory_space<semaphore_mem>>
    %33 = tpu.memref_squeeze %32 : memref<1x!tpu.dma_semaphore, #tpu.memory_space<semaphore_mem>> -> memref<!tpu.dma_semaphore, #tpu.memory_space<semaphore_mem>>
    tpu.enqueue_dma source(%29 : memref<768xf32, #tpu.memory_space<any>>) target(%31 : memref<768xf32, #tpu.memory_space<vmem>>) target_semaphore(%33 : memref<!tpu.dma_semaphore, #tpu.memory_space<semaphore_mem>>)
    %c3_i32 = arith.constant 3 : i32
    %c0_i32_9 = arith.constant 0 : i32
    %c0_i32_10 = arith.constant 0 : i32
    %34 = tpu.memref_slice %arg3[%3, %c0_i32_10] : memref<1000x768xf32, #tpu.memory_space<any>> -> memref<1x768xf32, #tpu.memory_space<any>>
    %35 = tpu.memref_squeeze %34 : memref<1x768xf32, #tpu.memory_space<any>> -> memref<768xf32, #tpu.memory_space<any>>
    %c0_i32_11 = arith.constant 0 : i32
    %36 = tpu.memref_slice %arg16[%c3_i32, %c0_i32_11] : memref<16x768xf32, #tpu.memory_space<vmem>> -> memref<1x768xf32, #tpu.memory_space<vmem>>
    %37 = tpu.memref_squeeze %36 : memref<1x768xf32, #tpu.memory_space<vmem>> -> memref<768xf32, #tpu.memory_space<vmem>>
    %38 = tpu.memref_slice %arg17[%c0_i32_9] : memref<1x!tpu.dma_semaphore, #tpu.memory_space<semaphore_mem>> -> memref<1x!tpu.dma_semaphore, #tpu.memory_space<semaphore_mem>>
    %39 = tpu.memref_squeeze %38 : memref<1x!tpu.dma_semaphore, #tpu.memory_space<semaphore_mem>> -> memref<!tpu.dma_semaphore, #tpu.memory_space<semaphore_mem>>
    tpu.enqueue_dma source(%35 : memref<768xf32, #tpu.memory_space<any>>) target(%37 : memref<768xf32, #tpu.memory_space<vmem>>) target_semaphore(%39 : memref<!tpu.dma_semaphore, #tpu.memory_space<semaphore_mem>>)
    %c4_i32 = arith.constant 4 : i32
    %c0_i32_12 = arith.constant 0 : i32
    %c0_i32_13 = arith.constant 0 : i32
    %40 = tpu.memref_slice %arg3[%4, %c0_i32_13] : memref<1000x768xf32, #tpu.memory_space<any>> -> memref<1x768xf32, #tpu.memory_space<any>>
    %41 = tpu.memref_squeeze %40 : memref<1x768xf32, #tpu.memory_space<any>> -> memref<768xf32, #tpu.memory_space<any>>
    %c0_i32_14 = arith.constant 0 : i32
    %42 = tpu.memref_slice %arg16[%c4_i32, %c0_i32_14] : memref<16x768xf32, #tpu.memory_space<vmem>> -> memref<1x768xf32, #tpu.memory_space<vmem>>
    %43 = tpu.memref_squeeze %42 : memref<1x768xf32, #tpu.memory_space<vmem>> -> memref<768xf32, #tpu.memory_space<vmem>>
    %44 = tpu.memref_slice %arg17[%c0_i32_12] : memref<1x!tpu.dma_semaphore, #tpu.memory_space<semaphore_mem>> -> memref<1x!tpu.dma_semaphore, #tpu.memory_space<semaphore_mem>>
    %45 = tpu.memref_squeeze %44 : memref<1x!tpu.dma_semaphore, #tpu.memory_space<semaphore_mem>> -> memref<!tpu.dma_semaphore, #tpu.memory_space<semaphore_mem>>
    tpu.enqueue_dma source(%41 : memref<768xf32, #tpu.memory_space<any>>) target(%43 : memref<768xf32, #tpu.memory_space<vmem>>) target_semaphore(%45 : memref<!tpu.dma_semaphore, #tpu.memory_space<semaphore_mem>>)
    %c5_i32 = arith.constant 5 : i32
    %c0_i32_15 = arith.constant 0 : i32
    %c0_i32_16 = arith.constant 0 : i32
    %46 = tpu.memref_slice %arg3[%5, %c0_i32_16] : memref<1000x768xf32, #tpu.memory_space<any>> -> memref<1x768xf32, #tpu.memory_space<any>>
    %47 = tpu.memref_squeeze %46 : memref<1x768xf32, #tpu.memory_space<any>> -> memref<768xf32, #tpu.memory_space<any>>
    %c0_i32_17 = arith.constant 0 : i32
    %48 = tpu.memref_slice %arg16[%c5_i32, %c0_i32_17] : memref<16x768xf32, #tpu.memory_space<vmem>> -> memref<1x768xf32, #tpu.memory_space<vmem>>
    %49 = tpu.memref_squeeze %48 : memref<1x768xf32, #tpu.memory_space<vmem>> -> memref<768xf32, #tpu.memory_space<vmem>>
    %50 = tpu.memref_slice %arg17[%c0_i32_15] : memref<1x!tpu.dma_semaphore, #tpu.memory_space<semaphore_mem>> -> memref<1x!tpu.dma_semaphore, #tpu.memory_space<semaphore_mem>>
    %51 = tpu.memref_squeeze %50 : memref<1x!tpu.dma_semaphore, #tpu.memory_space<semaphore_mem>> -> memref<!tpu.dma_semaphore, #tpu.memory_space<semaphore_mem>>
    tpu.enqueue_dma source(%47 : memref<768xf32, #tpu.memory_space<any>>) target(%49 : memref<768xf32, #tpu.memory_space<vmem>>) target_semaphore(%51 : memref<!tpu.dma_semaphore, #tpu.memory_space<semaphore_mem>>)
    %c6_i32 = arith.constant 6 : i32
    %c0_i32_18 = arith.constant 0 : i32
    %c0_i32_19 = arith.constant 0 : i32
    %52 = tpu.memref_slice %arg3[%6, %c0_i32_19] : memref<1000x768xf32, #tpu.memory_space<any>> -> memref<1x768xf32, #tpu.memory_space<any>>
    %53 = tpu.memref_squeeze %52 : memref<1x768xf32, #tpu.memory_space<any>> -> memref<768xf32, #tpu.memory_space<any>>
    %c0_i32_20 = arith.constant 0 : i32
    %54 = tpu.memref_slice %arg16[%c6_i32, %c0_i32_20] : memref<16x768xf32, #tpu.memory_space<vmem>> -> memref<1x768xf32, #tpu.memory_space<vmem>>
    %55 = tpu.memref_squeeze %54 : memref<1x768xf32, #tpu.memory_space<vmem>> -> memref<768xf32, #tpu.memory_space<vmem>>
    %56 = tpu.memref_slice %arg17[%c0_i32_18] : memref<1x!tpu.dma_semaphore, #tpu.memory_space<semaphore_mem>> -> memref<1x!tpu.dma_semaphore, #tpu.memory_space<semaphore_mem>>
    %57 = tpu.memref_squeeze %56 : memref<1x!tpu.dma_semaphore, #tpu.memory_space<semaphore_mem>> -> memref<!tpu.dma_semaphore, #tpu.memory_space<semaphore_mem>>
    tpu.enqueue_dma source(%53 : memref<768xf32, #tpu.memory_space<any>>) target(%55 : memref<768xf32, #tpu.memory_space<vmem>>) target_semaphore(%57 : memref<!tpu.dma_semaphore, #tpu.memory_space<semaphore_mem>>)
    %c7_i32 = arith.constant 7 : i32
    %c0_i32_21 = arith.constant 0 : i32
    %c0_i32_22 = arith.constant 0 : i32
    %58 = tpu.memref_slice %arg3[%7, %c0_i32_22] : memref<1000x768xf32, #tpu.memory_space<any>> -> memref<1x768xf32, #tpu.memory_space<any>>
    %59 = tpu.memref_squeeze %58 : memref<1x768xf32, #tpu.memory_space<any>> -> memref<768xf32, #tpu.memory_space<any>>
    %c0_i32_23 = arith.constant 0 : i32
    %60 = tpu.memref_slice %arg16[%c7_i32, %c0_i32_23] : memref<16x768xf32, #tpu.memory_space<vmem>> -> memref<1x768xf32, #tpu.memory_space<vmem>>
    %61 = tpu.memref_squeeze %60 : memref<1x768xf32, #tpu.memory_space<vmem>> -> memref<768xf32, #tpu.memory_space<vmem>>
    %62 = tpu.memref_slice %arg17[%c0_i32_21] : memref<1x!tpu.dma_semaphore, #tpu.memory_space<semaphore_mem>> -> memref<1x!tpu.dma_semaphore, #tpu.memory_space<semaphore_mem>>
    %63 = tpu.memref_squeeze %62 : memref<1x!tpu.dma_semaphore, #tpu.memory_space<semaphore_mem>> -> memref<!tpu.dma_semaphore, #tpu.memory_space<semaphore_mem>>
    tpu.enqueue_dma source(%59 : memref<768xf32, #tpu.memory_space<any>>) target(%61 : memref<768xf32, #tpu.memory_space<vmem>>) target_semaphore(%63 : memref<!tpu.dma_semaphore, #tpu.memory_space<semaphore_mem>>)
    %c8_i32 = arith.constant 8 : i32
    %c0_i32_24 = arith.constant 0 : i32
    %c0_i32_25 = arith.constant 0 : i32
    %64 = tpu.memref_slice %arg3[%8, %c0_i32_25] : memref<1000x768xf32, #tpu.memory_space<any>> -> memref<1x768xf32, #tpu.memory_space<any>>
    %65 = tpu.memref_squeeze %64 : memref<1x768xf32, #tpu.memory_space<any>> -> memref<768xf32, #tpu.memory_space<any>>
    %c0_i32_26 = arith.constant 0 : i32
    %66 = tpu.memref_slice %arg16[%c8_i32, %c0_i32_26] : memref<16x768xf32, #tpu.memory_space<vmem>> -> memref<1x768xf32, #tpu.memory_space<vmem>>
    %67 = tpu.memref_squeeze %66 : memref<1x768xf32, #tpu.memory_space<vmem>> -> memref<768xf32, #tpu.memory_space<vmem>>
    %68 = tpu.memref_slice %arg17[%c0_i32_24] : memref<1x!tpu.dma_semaphore, #tpu.memory_space<semaphore_mem>> -> memref<1x!tpu.dma_semaphore, #tpu.memory_space<semaphore_mem>>
    %69 = tpu.memref_squeeze %68 : memref<1x!tpu.dma_semaphore, #tpu.memory_space<semaphore_mem>> -> memref<!tpu.dma_semaphore, #tpu.memory_space<semaphore_mem>>
    tpu.enqueue_dma source(%65 : memref<768xf32, #tpu.memory_space<any>>) target(%67 : memref<768xf32, #tpu.memory_space<vmem>>) target_semaphore(%69 : memref<!tpu.dma_semaphore, #tpu.memory_space<semaphore_mem>>)
    %c9_i32 = arith.constant 9 : i32
    %c0_i32_27 = arith.constant 0 : i32
    %c0_i32_28 = arith.constant 0 : i32
    %70 = tpu.memref_slice %arg3[%9, %c0_i32_28] : memref<1000x768xf32, #tpu.memory_space<any>> -> memref<1x768xf32, #tpu.memory_space<any>>
    %71 = tpu.memref_squeeze %70 : memref<1x768xf32, #tpu.memory_space<any>> -> memref<768xf32, #tpu.memory_space<any>>
    %c0_i32_29 = arith.constant 0 : i32
    %72 = tpu.memref_slice %arg16[%c9_i32, %c0_i32_29] : memref<16x768xf32, #tpu.memory_space<vmem>> -> memref<1x768xf32, #tpu.memory_space<vmem>>
    %73 = tpu.memref_squeeze %72 : memref<1x768xf32, #tpu.memory_space<vmem>> -> memref<768xf32, #tpu.memory_space<vmem>>
    %74 = tpu.memref_slice %arg17[%c0_i32_27] : memref<1x!tpu.dma_semaphore, #tpu.memory_space<semaphore_mem>> -> memref<1x!tpu.dma_semaphore, #tpu.memory_space<semaphore_mem>>
    %75 = tpu.memref_squeeze %74 : memref<1x!tpu.dma_semaphore, #tpu.memory_space<semaphore_mem>> -> memref<!tpu.dma_semaphore, #tpu.memory_space<semaphore_mem>>
    tpu.enqueue_dma source(%71 : memref<768xf32, #tpu.memory_space<any>>) target(%73 : memref<768xf32, #tpu.memory_space<vmem>>) target_semaphore(%75 : memref<!tpu.dma_semaphore, #tpu.memory_space<semaphore_mem>>)
    %c10_i32 = arith.constant 10 : i32
    %c0_i32_30 = arith.constant 0 : i32
    %c0_i32_31 = arith.constant 0 : i32
    %76 = tpu.memref_slice %arg3[%10, %c0_i32_31] : memref<1000x768xf32, #tpu.memory_space<any>> -> memref<1x768xf32, #tpu.memory_space<any>>
    %77 = tpu.memref_squeeze %76 : memref<1x768xf32, #tpu.memory_space<any>> -> memref<768xf32, #tpu.memory_space<any>>
    %c0_i32_32 = arith.constant 0 : i32
    %78 = tpu.memref_slice %arg16[%c10_i32, %c0_i32_32] : memref<16x768xf32, #tpu.memory_space<vmem>> -> memref<1x768xf32, #tpu.memory_space<vmem>>
    %79 = tpu.memref_squeeze %78 : memref<1x768xf32, #tpu.memory_space<vmem>> -> memref<768xf32, #tpu.memory_space<vmem>>
    %80 = tpu.memref_slice %arg17[%c0_i32_30] : memref<1x!tpu.dma_semaphore, #tpu.memory_space<semaphore_mem>> -> memref<1x!tpu.dma_semaphore, #tpu.memory_space<semaphore_mem>>
    %81 = tpu.memref_squeeze %80 : memref<1x!tpu.dma_semaphore, #tpu.memory_space<semaphore_mem>> -> memref<!tpu.dma_semaphore, #tpu.memory_space<semaphore_mem>>
    tpu.enqueue_dma source(%77 : memref<768xf32, #tpu.memory_space<any>>) target(%79 : memref<768xf32, #tpu.memory_space<vmem>>) target_semaphore(%81 : memref<!tpu.dma_semaphore, #tpu.memory_space<semaphore_mem>>)
    %c11_i32 = arith.constant 11 : i32
    %c0_i32_33 = arith.constant 0 : i32
    %c0_i32_34 = arith.constant 0 : i32
    %82 = tpu.memref_slice %arg3[%11, %c0_i32_34] : memref<1000x768xf32, #tpu.memory_space<any>> -> memref<1x768xf32, #tpu.memory_space<any>>
    %83 = tpu.memref_squeeze %82 : memref<1x768xf32, #tpu.memory_space<any>> -> memref<768xf32, #tpu.memory_space<any>>
    %c0_i32_35 = arith.constant 0 : i32
    %84 = tpu.memref_slice %arg16[%c11_i32, %c0_i32_35] : memref<16x768xf32, #tpu.memory_space<vmem>> -> memref<1x768xf32, #tpu.memory_space<vmem>>
    %85 = tpu.memref_squeeze %84 : memref<1x768xf32, #tpu.memory_space<vmem>> -> memref<768xf32, #tpu.memory_space<vmem>>
    %86 = tpu.memref_slice %arg17[%c0_i32_33] : memref<1x!tpu.dma_semaphore, #tpu.memory_space<semaphore_mem>> -> memref<1x!tpu.dma_semaphore, #tpu.memory_space<semaphore_mem>>
    %87 = tpu.memref_squeeze %86 : memref<1x!tpu.dma_semaphore, #tpu.memory_space<semaphore_mem>> -> memref<!tpu.dma_semaphore, #tpu.memory_space<semaphore_mem>>
    tpu.enqueue_dma source(%83 : memref<768xf32, #tpu.memory_space<any>>) target(%85 : memref<768xf32, #tpu.memory_space<vmem>>) target_semaphore(%87 : memref<!tpu.dma_semaphore, #tpu.memory_space<semaphore_mem>>)
    %c12_i32 = arith.constant 12 : i32
    %c0_i32_36 = arith.constant 0 : i32
    %c0_i32_37 = arith.constant 0 : i32
    %88 = tpu.memref_slice %arg3[%12, %c0_i32_37] : memref<1000x768xf32, #tpu.memory_space<any>> -> memref<1x768xf32, #tpu.memory_space<any>>
    %89 = tpu.memref_squeeze %88 : memref<1x768xf32, #tpu.memory_space<any>> -> memref<768xf32, #tpu.memory_space<any>>
    %c0_i32_38 = arith.constant 0 : i32
    %90 = tpu.memref_slice %arg16[%c12_i32, %c0_i32_38] : memref<16x768xf32, #tpu.memory_space<vmem>> -> memref<1x768xf32, #tpu.memory_space<vmem>>
    %91 = tpu.memref_squeeze %90 : memref<1x768xf32, #tpu.memory_space<vmem>> -> memref<768xf32, #tpu.memory_space<vmem>>
    %92 = tpu.memref_slice %arg17[%c0_i32_36] : memref<1x!tpu.dma_semaphore, #tpu.memory_space<semaphore_mem>> -> memref<1x!tpu.dma_semaphore, #tpu.memory_space<semaphore_mem>>
    %93 = tpu.memref_squeeze %92 : memref<1x!tpu.dma_semaphore, #tpu.memory_space<semaphore_mem>> -> memref<!tpu.dma_semaphore, #tpu.memory_space<semaphore_mem>>
    tpu.enqueue_dma source(%89 : memref<768xf32, #tpu.memory_space<any>>) target(%91 : memref<768xf32, #tpu.memory_space<vmem>>) target_semaphore(%93 : memref<!tpu.dma_semaphore, #tpu.memory_space<semaphore_mem>>)
    %c13_i32 = arith.constant 13 : i32
    %c0_i32_39 = arith.constant 0 : i32
    %c0_i32_40 = arith.constant 0 : i32
    %94 = tpu.memref_slice %arg3[%13, %c0_i32_40] : memref<1000x768xf32, #tpu.memory_space<any>> -> memref<1x768xf32, #tpu.memory_space<any>>
    %95 = tpu.memref_squeeze %94 : memref<1x768xf32, #tpu.memory_space<any>> -> memref<768xf32, #tpu.memory_space<any>>
    %c0_i32_41 = arith.constant 0 : i32
    %96 = tpu.memref_slice %arg16[%c13_i32, %c0_i32_41] : memref<16x768xf32, #tpu.memory_space<vmem>> -> memref<1x768xf32, #tpu.memory_space<vmem>>
    %97 = tpu.memref_squeeze %96 : memref<1x768xf32, #tpu.memory_space<vmem>> -> memref<768xf32, #tpu.memory_space<vmem>>
    %98 = tpu.memref_slice %arg17[%c0_i32_39] : memref<1x!tpu.dma_semaphore, #tpu.memory_space<semaphore_mem>> -> memref<1x!tpu.dma_semaphore, #tpu.memory_space<semaphore_mem>>
    %99 = tpu.memref_squeeze %98 : memref<1x!tpu.dma_semaphore, #tpu.memory_space<semaphore_mem>> -> memref<!tpu.dma_semaphore, #tpu.memory_space<semaphore_mem>>
    tpu.enqueue_dma source(%95 : memref<768xf32, #tpu.memory_space<any>>) target(%97 : memref<768xf32, #tpu.memory_space<vmem>>) target_semaphore(%99 : memref<!tpu.dma_semaphore, #tpu.memory_space<semaphore_mem>>)
    %c14_i32 = arith.constant 14 : i32
    %c0_i32_42 = arith.constant 0 : i32
    %c0_i32_43 = arith.constant 0 : i32
    %100 = tpu.memref_slice %arg3[%14, %c0_i32_43] : memref<1000x768xf32, #tpu.memory_space<any>> -> memref<1x768xf32, #tpu.memory_space<any>>
    %101 = tpu.memref_squeeze %100 : memref<1x768xf32, #tpu.memory_space<any>> -> memref<768xf32, #tpu.memory_space<any>>
    %c0_i32_44 = arith.constant 0 : i32
    %102 = tpu.memref_slice %arg16[%c14_i32, %c0_i32_44] : memref<16x768xf32, #tpu.memory_space<vmem>> -> memref<1x768xf32, #tpu.memory_space<vmem>>
    %103 = tpu.memref_squeeze %102 : memref<1x768xf32, #tpu.memory_space<vmem>> -> memref<768xf32, #tpu.memory_space<vmem>>
    %104 = tpu.memref_slice %arg17[%c0_i32_42] : memref<1x!tpu.dma_semaphore, #tpu.memory_space<semaphore_mem>> -> memref<1x!tpu.dma_semaphore, #tpu.memory_space<semaphore_mem>>
    %105 = tpu.memref_squeeze %104 : memref<1x!tpu.dma_semaphore, #tpu.memory_space<semaphore_mem>> -> memref<!tpu.dma_semaphore, #tpu.memory_space<semaphore_mem>>
    tpu.enqueue_dma source(%101 : memref<768xf32, #tpu.memory_space<any>>) target(%103 : memref<768xf32, #tpu.memory_space<vmem>>) target_semaphore(%105 : memref<!tpu.dma_semaphore, #tpu.memory_space<semaphore_mem>>)
    %c15_i32 = arith.constant 15 : i32
    %c0_i32_45 = arith.constant 0 : i32
    %c0_i32_46 = arith.constant 0 : i32
    %106 = tpu.memref_slice %arg3[%15, %c0_i32_46] : memref<1000x768xf32, #tpu.memory_space<any>> -> memref<1x768xf32, #tpu.memory_space<any>>
    %107 = tpu.memref_squeeze %106 : memref<1x768xf32, #tpu.memory_space<any>> -> memref<768xf32, #tpu.memory_space<any>>
    %c0_i32_47 = arith.constant 0 : i32
    %108 = tpu.memref_slice %arg16[%c15_i32, %c0_i32_47] : memref<16x768xf32, #tpu.memory_space<vmem>> -> memref<1x768xf32, #tpu.memory_space<vmem>>
    %109 = tpu.memref_squeeze %108 : memref<1x768xf32, #tpu.memory_space<vmem>> -> memref<768xf32, #tpu.memory_space<vmem>>
    %110 = tpu.memref_slice %arg17[%c0_i32_45] : memref<1x!tpu.dma_semaphore, #tpu.memory_space<semaphore_mem>> -> memref<1x!tpu.dma_semaphore, #tpu.memory_space<semaphore_mem>>
    %111 = tpu.memref_squeeze %110 : memref<1x!tpu.dma_semaphore, #tpu.memory_space<semaphore_mem>> -> memref<!tpu.dma_semaphore, #tpu.memory_space<semaphore_mem>>
    tpu.enqueue_dma source(%107 : memref<768xf32, #tpu.memory_space<any>>) target(%109 : memref<768xf32, #tpu.memory_space<vmem>>) target_semaphore(%111 : memref<!tpu.dma_semaphore, #tpu.memory_space<semaphore_mem>>)
    %c0_48 = arith.constant 0 : index
    %c0_49 = arith.constant 0 : index
    %112 = vector.load %arg2[%c0_48, %c0_49] : memref<2x64xf32, #tpu.memory_space<vmem>>, vector<2x64xf32>
    %113 = arith.truncf %112 : vector<2x64xf32> to vector<2x64xbf16>
    %c0_50 = arith.constant 0 : index
    %c0_51 = arith.constant 0 : index
    %114 = vector.load %arg4[%c0_50, %c0_51] : memref<64x256xbf16, #tpu.memory_space<vmem>>, vector<64x256xbf16>
    %cst = arith.constant dense<0.000000e+00> : vector<2x256xf32>
    %115 = tpu.matmul %113, %114, %cst {dimension_numbers = #tpu.dot_dimension_numbers<[1], [0], [0], [1], [0, 0, 1, 1], [], []>} : vector<2x64xbf16>, vector<64x256xbf16>, vector<2x256xf32> -> vector<2x256xf32>
    %c0_52 = arith.constant 0 : index
    %c0_53 = arith.constant 0 : index
    %116 = vector.load %arg5[%c0_52, %c0_53] : memref<1x256xf32, #tpu.memory_space<vmem>>, vector<1x256xf32>
    %117 = vector.broadcast %116 : vector<1x256xf32> to vector<2x256xf32>
    %118 = arith.addf %115, %117 : vector<2x256xf32>
    %cst_54 = arith.constant 0.000000e+00 : f32
    %119 = vector.broadcast %cst_54 : f32 to vector<2x256xf32>
    %120 = arith.maximumf %118, %119 : vector<2x256xf32>
    %c0_55 = arith.constant 0 : index
    %c0_56 = arith.constant 0 : index
    %121 = vector.load %arg6[%c0_55, %c0_56] : memref<1x256xf32, #tpu.memory_space<vmem>>, vector<1x256xf32>
    %c0_57 = arith.constant 0 : index
    %c0_58 = arith.constant 0 : index
    %122 = vector.load %arg7[%c0_57, %c0_58] : memref<1x256xf32, #tpu.memory_space<vmem>>, vector<1x256xf32>
    %cst_59 = arith.constant dense<0.000000e+00> : vector<2xf32>
    %123 = vector.multi_reduction <add>, %120, %cst_59 [1] : vector<2x256xf32> to vector<2xf32>
    %124 = vector.shape_cast %123 : vector<2xf32> to vector<2x1xf32>
    %cst_60 = arith.constant 2.560000e+02 : f32
    %125 = vector.broadcast %cst_60 : f32 to vector<2x1xf32>
    %126 = arith.divf %124, %125 : vector<2x1xf32>
    %127 = vector.broadcast %126 : vector<2x1xf32> to vector<2x256xf32>
    %128 = arith.subf %120, %127 : vector<2x256xf32>
    %129 = arith.mulf %128, %128 : vector<2x256xf32>
    %cst_61 = arith.constant dense<0.000000e+00> : vector<2xf32>
    %130 = vector.multi_reduction <add>, %129, %cst_61 [1] : vector<2x256xf32> to vector<2xf32>
    %131 = vector.shape_cast %130 : vector<2xf32> to vector<2x1xf32>
    %cst_62 = arith.constant 2.560000e+02 : f32
    %132 = vector.broadcast %cst_62 : f32 to vector<2x1xf32>
    %133 = arith.divf %131, %132 : vector<2x1xf32>
    %134 = vector.broadcast %126 : vector<2x1xf32> to vector<2x256xf32>
    %135 = arith.subf %120, %134 : vector<2x256xf32>
    %cst_63 = arith.constant 9.99999974E-6 : f32
    %136 = vector.broadcast %cst_63 : f32 to vector<2x1xf32>
    %137 = arith.addf %133, %136 : vector<2x1xf32>
    %138 = math.rsqrt %137 : vector<2x1xf32>
    %139 = vector.broadcast %138 : vector<2x1xf32> to vector<2x256xf32>
    %140 = arith.mulf %135, %139 : vector<2x256xf32>
    %141 = vector.broadcast %121 : vector<1x256xf32> to vector<2x256xf32>
    %142 = arith.mulf %140, %141 : vector<2x256xf32>
    %143 = vector.broadcast %122 : vector<1x256xf32> to vector<2x256xf32>
    %144 = arith.addf %142, %143 : vector<2x256xf32>
    %145 = arith.truncf %144 : vector<2x256xf32> to vector<2x256xbf16>
    %c0_64 = arith.constant 0 : index
    %c0_65 = arith.constant 0 : index
    %146 = vector.load %arg8[%c0_64, %c0_65] : memref<256x512xbf16, #tpu.memory_space<vmem>>, vector<256x512xbf16>
    %cst_66 = arith.constant dense<0.000000e+00> : vector<2x512xf32>
    %147 = tpu.matmul %145, %146, %cst_66 {dimension_numbers = #tpu.dot_dimension_numbers<[1], [0], [0], [1], [0, 0, 1, 1], [], []>} : vector<2x256xbf16>, vector<256x512xbf16>, vector<2x512xf32> -> vector<2x512xf32>
    %148 = vector.extract_strided_slice %147 {offsets = [0, 0], sizes = [1, 512], strides = [1, 1]} : vector<2x512xf32> to vector<1x512xf32>
    %149 = vector.shape_cast %148 : vector<1x512xf32> to vector<1x512xf32>
    %150 = vector.broadcast %149 : vector<1x512xf32> to vector<8x512xf32>
    %151 = vector.extract_strided_slice %147 {offsets = [1, 0], sizes = [1, 512], strides = [1, 1]} : vector<2x512xf32> to vector<1x512xf32>
    %152 = vector.shape_cast %151 : vector<1x512xf32> to vector<1x512xf32>
    %153 = vector.broadcast %152 : vector<1x512xf32> to vector<8x512xf32>
    %154 = tpu.concatenate %150, %153 in 0 : vector<8x512xf32>, vector<8x512xf32> -> vector<16x512xf32>
    %c0_i32_67 = arith.constant 0 : i32
    %c0_i32_68 = arith.constant 0 : i32
    %c0_i32_69 = arith.constant 0 : i32
    %155 = tpu.memref_slice %arg3[%0, %c0_i32_69] : memref<1000x768xf32, #tpu.memory_space<any>> -> memref<1x768xf32, #tpu.memory_space<any>>
    %156 = tpu.memref_squeeze %155 : memref<1x768xf32, #tpu.memory_space<any>> -> memref<768xf32, #tpu.memory_space<any>>
    %c0_i32_70 = arith.constant 0 : i32
    %157 = tpu.memref_slice %arg16[%c0_i32_67, %c0_i32_70] : memref<16x768xf32, #tpu.memory_space<vmem>> -> memref<1x768xf32, #tpu.memory_space<vmem>>
    %158 = tpu.memref_squeeze %157 : memref<1x768xf32, #tpu.memory_space<vmem>> -> memref<768xf32, #tpu.memory_space<vmem>>
    %159 = tpu.memref_slice %arg17[%c0_i32_68] : memref<1x!tpu.dma_semaphore, #tpu.memory_space<semaphore_mem>> -> memref<1x!tpu.dma_semaphore, #tpu.memory_space<semaphore_mem>>
    %160 = tpu.memref_squeeze %159 : memref<1x!tpu.dma_semaphore, #tpu.memory_space<semaphore_mem>> -> memref<!tpu.dma_semaphore, #tpu.memory_space<semaphore_mem>>
    tpu.wait_dma2 semaphore(%160 : memref<!tpu.dma_semaphore, #tpu.memory_space<semaphore_mem>>) src(%156 : memref<768xf32, #tpu.memory_space<any>>) dst(%158 : memref<768xf32, #tpu.memory_space<vmem>>)
    %c1_i32_71 = arith.constant 1 : i32
    %c0_i32_72 = arith.constant 0 : i32
    %c0_i32_73 = arith.constant 0 : i32
    %161 = tpu.memref_slice %arg3[%1, %c0_i32_73] : memref<1000x768xf32, #tpu.memory_space<any>> -> memref<1x768xf32, #tpu.memory_space<any>>
    %162 = tpu.memref_squeeze %161 : memref<1x768xf32, #tpu.memory_space<any>> -> memref<768xf32, #tpu.memory_space<any>>
    %c0_i32_74 = arith.constant 0 : i32
    %163 = tpu.memref_slice %arg16[%c1_i32_71, %c0_i32_74] : memref<16x768xf32, #tpu.memory_space<vmem>> -> memref<1x768xf32, #tpu.memory_space<vmem>>
    %164 = tpu.memref_squeeze %163 : memref<1x768xf32, #tpu.memory_space<vmem>> -> memref<768xf32, #tpu.memory_space<vmem>>
    %165 = tpu.memref_slice %arg17[%c0_i32_72] : memref<1x!tpu.dma_semaphore, #tpu.memory_space<semaphore_mem>> -> memref<1x!tpu.dma_semaphore, #tpu.memory_space<semaphore_mem>>
    %166 = tpu.memref_squeeze %165 : memref<1x!tpu.dma_semaphore, #tpu.memory_space<semaphore_mem>> -> memref<!tpu.dma_semaphore, #tpu.memory_space<semaphore_mem>>
    tpu.wait_dma2 semaphore(%166 : memref<!tpu.dma_semaphore, #tpu.memory_space<semaphore_mem>>) src(%162 : memref<768xf32, #tpu.memory_space<any>>) dst(%164 : memref<768xf32, #tpu.memory_space<vmem>>)
    %c2_i32_75 = arith.constant 2 : i32
    %c0_i32_76 = arith.constant 0 : i32
    %c0_i32_77 = arith.constant 0 : i32
    %167 = tpu.memref_slice %arg3[%2, %c0_i32_77] : memref<1000x768xf32, #tpu.memory_space<any>> -> memref<1x768xf32, #tpu.memory_space<any>>
    %168 = tpu.memref_squeeze %167 : memref<1x768xf32, #tpu.memory_space<any>> -> memref<768xf32, #tpu.memory_space<any>>
    %c0_i32_78 = arith.constant 0 : i32
    %169 = tpu.memref_slice %arg16[%c2_i32_75, %c0_i32_78] : memref<16x768xf32, #tpu.memory_space<vmem>> -> memref<1x768xf32, #tpu.memory_space<vmem>>
    %170 = tpu.memref_squeeze %169 : memref<1x768xf32, #tpu.memory_space<vmem>> -> memref<768xf32, #tpu.memory_space<vmem>>
    %171 = tpu.memref_slice %arg17[%c0_i32_76] : memref<1x!tpu.dma_semaphore, #tpu.memory_space<semaphore_mem>> -> memref<1x!tpu.dma_semaphore, #tpu.memory_space<semaphore_mem>>
    %172 = tpu.memref_squeeze %171 : memref<1x!tpu.dma_semaphore, #tpu.memory_space<semaphore_mem>> -> memref<!tpu.dma_semaphore, #tpu.memory_space<semaphore_mem>>
    tpu.wait_dma2 semaphore(%172 : memref<!tpu.dma_semaphore, #tpu.memory_space<semaphore_mem>>) src(%168 : memref<768xf32, #tpu.memory_space<any>>) dst(%170 : memref<768xf32, #tpu.memory_space<vmem>>)
    %c3_i32_79 = arith.constant 3 : i32
    %c0_i32_80 = arith.constant 0 : i32
    %c0_i32_81 = arith.constant 0 : i32
    %173 = tpu.memref_slice %arg3[%3, %c0_i32_81] : memref<1000x768xf32, #tpu.memory_space<any>> -> memref<1x768xf32, #tpu.memory_space<any>>
    %174 = tpu.memref_squeeze %173 : memref<1x768xf32, #tpu.memory_space<any>> -> memref<768xf32, #tpu.memory_space<any>>
    %c0_i32_82 = arith.constant 0 : i32
    %175 = tpu.memref_slice %arg16[%c3_i32_79, %c0_i32_82] : memref<16x768xf32, #tpu.memory_space<vmem>> -> memref<1x768xf32, #tpu.memory_space<vmem>>
    %176 = tpu.memref_squeeze %175 : memref<1x768xf32, #tpu.memory_space<vmem>> -> memref<768xf32, #tpu.memory_space<vmem>>
    %177 = tpu.memref_slice %arg17[%c0_i32_80] : memref<1x!tpu.dma_semaphore, #tpu.memory_space<semaphore_mem>> -> memref<1x!tpu.dma_semaphore, #tpu.memory_space<semaphore_mem>>
    %178 = tpu.memref_squeeze %177 : memref<1x!tpu.dma_semaphore, #tpu.memory_space<semaphore_mem>> -> memref<!tpu.dma_semaphore, #tpu.memory_space<semaphore_mem>>
    tpu.wait_dma2 semaphore(%178 : memref<!tpu.dma_semaphore, #tpu.memory_space<semaphore_mem>>) src(%174 : memref<768xf32, #tpu.memory_space<any>>) dst(%176 : memref<768xf32, #tpu.memory_space<vmem>>)
    %c4_i32_83 = arith.constant 4 : i32
    %c0_i32_84 = arith.constant 0 : i32
    %c0_i32_85 = arith.constant 0 : i32
    %179 = tpu.memref_slice %arg3[%4, %c0_i32_85] : memref<1000x768xf32, #tpu.memory_space<any>> -> memref<1x768xf32, #tpu.memory_space<any>>
    %180 = tpu.memref_squeeze %179 : memref<1x768xf32, #tpu.memory_space<any>> -> memref<768xf32, #tpu.memory_space<any>>
    %c0_i32_86 = arith.constant 0 : i32
    %181 = tpu.memref_slice %arg16[%c4_i32_83, %c0_i32_86] : memref<16x768xf32, #tpu.memory_space<vmem>> -> memref<1x768xf32, #tpu.memory_space<vmem>>
    %182 = tpu.memref_squeeze %181 : memref<1x768xf32, #tpu.memory_space<vmem>> -> memref<768xf32, #tpu.memory_space<vmem>>
    %183 = tpu.memref_slice %arg17[%c0_i32_84] : memref<1x!tpu.dma_semaphore, #tpu.memory_space<semaphore_mem>> -> memref<1x!tpu.dma_semaphore, #tpu.memory_space<semaphore_mem>>
    %184 = tpu.memref_squeeze %183 : memref<1x!tpu.dma_semaphore, #tpu.memory_space<semaphore_mem>> -> memref<!tpu.dma_semaphore, #tpu.memory_space<semaphore_mem>>
    tpu.wait_dma2 semaphore(%184 : memref<!tpu.dma_semaphore, #tpu.memory_space<semaphore_mem>>) src(%180 : memref<768xf32, #tpu.memory_space<any>>) dst(%182 : memref<768xf32, #tpu.memory_space<vmem>>)
    %c5_i32_87 = arith.constant 5 : i32
    %c0_i32_88 = arith.constant 0 : i32
    %c0_i32_89 = arith.constant 0 : i32
    %185 = tpu.memref_slice %arg3[%5, %c0_i32_89] : memref<1000x768xf32, #tpu.memory_space<any>> -> memref<1x768xf32, #tpu.memory_space<any>>
    %186 = tpu.memref_squeeze %185 : memref<1x768xf32, #tpu.memory_space<any>> -> memref<768xf32, #tpu.memory_space<any>>
    %c0_i32_90 = arith.constant 0 : i32
    %187 = tpu.memref_slice %arg16[%c5_i32_87, %c0_i32_90] : memref<16x768xf32, #tpu.memory_space<vmem>> -> memref<1x768xf32, #tpu.memory_space<vmem>>
    %188 = tpu.memref_squeeze %187 : memref<1x768xf32, #tpu.memory_space<vmem>> -> memref<768xf32, #tpu.memory_space<vmem>>
    %189 = tpu.memref_slice %arg17[%c0_i32_88] : memref<1x!tpu.dma_semaphore, #tpu.memory_space<semaphore_mem>> -> memref<1x!tpu.dma_semaphore, #tpu.memory_space<semaphore_mem>>
    %190 = tpu.memref_squeeze %189 : memref<1x!tpu.dma_semaphore, #tpu.memory_space<semaphore_mem>> -> memref<!tpu.dma_semaphore, #tpu.memory_space<semaphore_mem>>
    tpu.wait_dma2 semaphore(%190 : memref<!tpu.dma_semaphore, #tpu.memory_space<semaphore_mem>>) src(%186 : memref<768xf32, #tpu.memory_space<any>>) dst(%188 : memref<768xf32, #tpu.memory_space<vmem>>)
    %c6_i32_91 = arith.constant 6 : i32
    %c0_i32_92 = arith.constant 0 : i32
    %c0_i32_93 = arith.constant 0 : i32
    %191 = tpu.memref_slice %arg3[%6, %c0_i32_93] : memref<1000x768xf32, #tpu.memory_space<any>> -> memref<1x768xf32, #tpu.memory_space<any>>
    %192 = tpu.memref_squeeze %191 : memref<1x768xf32, #tpu.memory_space<any>> -> memref<768xf32, #tpu.memory_space<any>>
    %c0_i32_94 = arith.constant 0 : i32
    %193 = tpu.memref_slice %arg16[%c6_i32_91, %c0_i32_94] : memref<16x768xf32, #tpu.memory_space<vmem>> -> memref<1x768xf32, #tpu.memory_space<vmem>>
    %194 = tpu.memref_squeeze %193 : memref<1x768xf32, #tpu.memory_space<vmem>> -> memref<768xf32, #tpu.memory_space<vmem>>
    %195 = tpu.memref_slice %arg17[%c0_i32_92] : memref<1x!tpu.dma_semaphore, #tpu.memory_space<semaphore_mem>> -> memref<1x!tpu.dma_semaphore, #tpu.memory_space<semaphore_mem>>
    %196 = tpu.memref_squeeze %195 : memref<1x!tpu.dma_semaphore, #tpu.memory_space<semaphore_mem>> -> memref<!tpu.dma_semaphore, #tpu.memory_space<semaphore_mem>>
    tpu.wait_dma2 semaphore(%196 : memref<!tpu.dma_semaphore, #tpu.memory_space<semaphore_mem>>) src(%192 : memref<768xf32, #tpu.memory_space<any>>) dst(%194 : memref<768xf32, #tpu.memory_space<vmem>>)
    %c7_i32_95 = arith.constant 7 : i32
    %c0_i32_96 = arith.constant 0 : i32
    %c0_i32_97 = arith.constant 0 : i32
    %197 = tpu.memref_slice %arg3[%7, %c0_i32_97] : memref<1000x768xf32, #tpu.memory_space<any>> -> memref<1x768xf32, #tpu.memory_space<any>>
    %198 = tpu.memref_squeeze %197 : memref<1x768xf32, #tpu.memory_space<any>> -> memref<768xf32, #tpu.memory_space<any>>
    %c0_i32_98 = arith.constant 0 : i32
    %199 = tpu.memref_slice %arg16[%c7_i32_95, %c0_i32_98] : memref<16x768xf32, #tpu.memory_space<vmem>> -> memref<1x768xf32, #tpu.memory_space<vmem>>
    %200 = tpu.memref_squeeze %199 : memref<1x768xf32, #tpu.memory_space<vmem>> -> memref<768xf32, #tpu.memory_space<vmem>>
    %201 = tpu.memref_slice %arg17[%c0_i32_96] : memref<1x!tpu.dma_semaphore, #tpu.memory_space<semaphore_mem>> -> memref<1x!tpu.dma_semaphore, #tpu.memory_space<semaphore_mem>>
    %202 = tpu.memref_squeeze %201 : memref<1x!tpu.dma_semaphore, #tpu.memory_space<semaphore_mem>> -> memref<!tpu.dma_semaphore, #tpu.memory_space<semaphore_mem>>
    tpu.wait_dma2 semaphore(%202 : memref<!tpu.dma_semaphore, #tpu.memory_space<semaphore_mem>>) src(%198 : memref<768xf32, #tpu.memory_space<any>>) dst(%200 : memref<768xf32, #tpu.memory_space<vmem>>)
    %c8_i32_99 = arith.constant 8 : i32
    %c0_i32_100 = arith.constant 0 : i32
    %c0_i32_101 = arith.constant 0 : i32
    %203 = tpu.memref_slice %arg3[%8, %c0_i32_101] : memref<1000x768xf32, #tpu.memory_space<any>> -> memref<1x768xf32, #tpu.memory_space<any>>
    %204 = tpu.memref_squeeze %203 : memref<1x768xf32, #tpu.memory_space<any>> -> memref<768xf32, #tpu.memory_space<any>>
    %c0_i32_102 = arith.constant 0 : i32
    %205 = tpu.memref_slice %arg16[%c8_i32_99, %c0_i32_102] : memref<16x768xf32, #tpu.memory_space<vmem>> -> memref<1x768xf32, #tpu.memory_space<vmem>>
    %206 = tpu.memref_squeeze %205 : memref<1x768xf32, #tpu.memory_space<vmem>> -> memref<768xf32, #tpu.memory_space<vmem>>
    %207 = tpu.memref_slice %arg17[%c0_i32_100] : memref<1x!tpu.dma_semaphore, #tpu.memory_space<semaphore_mem>> -> memref<1x!tpu.dma_semaphore, #tpu.memory_space<semaphore_mem>>
    %208 = tpu.memref_squeeze %207 : memref<1x!tpu.dma_semaphore, #tpu.memory_space<semaphore_mem>> -> memref<!tpu.dma_semaphore, #tpu.memory_space<semaphore_mem>>
    tpu.wait_dma2 semaphore(%208 : memref<!tpu.dma_semaphore, #tpu.memory_space<semaphore_mem>>) src(%204 : memref<768xf32, #tpu.memory_space<any>>) dst(%206 : memref<768xf32, #tpu.memory_space<vmem>>)
    %c9_i32_103 = arith.constant 9 : i32
    %c0_i32_104 = arith.constant 0 : i32
    %c0_i32_105 = arith.constant 0 : i32
    %209 = tpu.memref_slice %arg3[%9, %c0_i32_105] : memref<1000x768xf32, #tpu.memory_space<any>> -> memref<1x768xf32, #tpu.memory_space<any>>
    %210 = tpu.memref_squeeze %209 : memref<1x768xf32, #tpu.memory_space<any>> -> memref<768xf32, #tpu.memory_space<any>>
    %c0_i32_106 = arith.constant 0 : i32
    %211 = tpu.memref_slice %arg16[%c9_i32_103, %c0_i32_106] : memref<16x768xf32, #tpu.memory_space<vmem>> -> memref<1x768xf32, #tpu.memory_space<vmem>>
    %212 = tpu.memref_squeeze %211 : memref<1x768xf32, #tpu.memory_space<vmem>> -> memref<768xf32, #tpu.memory_space<vmem>>
    %213 = tpu.memref_slice %arg17[%c0_i32_104] : memref<1x!tpu.dma_semaphore, #tpu.memory_space<semaphore_mem>> -> memref<1x!tpu.dma_semaphore, #tpu.memory_space<semaphore_mem>>
    %214 = tpu.memref_squeeze %213 : memref<1x!tpu.dma_semaphore, #tpu.memory_space<semaphore_mem>> -> memref<!tpu.dma_semaphore, #tpu.memory_space<semaphore_mem>>
    tpu.wait_dma2 semaphore(%214 : memref<!tpu.dma_semaphore, #tpu.memory_space<semaphore_mem>>) src(%210 : memref<768xf32, #tpu.memory_space<any>>) dst(%212 : memref<768xf32, #tpu.memory_space<vmem>>)
    %c10_i32_107 = arith.constant 10 : i32
    %c0_i32_108 = arith.constant 0 : i32
    %c0_i32_109 = arith.constant 0 : i32
    %215 = tpu.memref_slice %arg3[%10, %c0_i32_109] : memref<1000x768xf32, #tpu.memory_space<any>> -> memref<1x768xf32, #tpu.memory_space<any>>
    %216 = tpu.memref_squeeze %215 : memref<1x768xf32, #tpu.memory_space<any>> -> memref<768xf32, #tpu.memory_space<any>>
    %c0_i32_110 = arith.constant 0 : i32
    %217 = tpu.memref_slice %arg16[%c10_i32_107, %c0_i32_110] : memref<16x768xf32, #tpu.memory_space<vmem>> -> memref<1x768xf32, #tpu.memory_space<vmem>>
    %218 = tpu.memref_squeeze %217 : memref<1x768xf32, #tpu.memory_space<vmem>> -> memref<768xf32, #tpu.memory_space<vmem>>
    %219 = tpu.memref_slice %arg17[%c0_i32_108] : memref<1x!tpu.dma_semaphore, #tpu.memory_space<semaphore_mem>> -> memref<1x!tpu.dma_semaphore, #tpu.memory_space<semaphore_mem>>
    %220 = tpu.memref_squeeze %219 : memref<1x!tpu.dma_semaphore, #tpu.memory_space<semaphore_mem>> -> memref<!tpu.dma_semaphore, #tpu.memory_space<semaphore_mem>>
    tpu.wait_dma2 semaphore(%220 : memref<!tpu.dma_semaphore, #tpu.memory_space<semaphore_mem>>) src(%216 : memref<768xf32, #tpu.memory_space<any>>) dst(%218 : memref<768xf32, #tpu.memory_space<vmem>>)
    %c11_i32_111 = arith.constant 11 : i32
    %c0_i32_112 = arith.constant 0 : i32
    %c0_i32_113 = arith.constant 0 : i32
    %221 = tpu.memref_slice %arg3[%11, %c0_i32_113] : memref<1000x768xf32, #tpu.memory_space<any>> -> memref<1x768xf32, #tpu.memory_space<any>>
    %222 = tpu.memref_squeeze %221 : memref<1x768xf32, #tpu.memory_space<any>> -> memref<768xf32, #tpu.memory_space<any>>
    %c0_i32_114 = arith.constant 0 : i32
    %223 = tpu.memref_slice %arg16[%c11_i32_111, %c0_i32_114] : memref<16x768xf32, #tpu.memory_space<vmem>> -> memref<1x768xf32, #tpu.memory_space<vmem>>
    %224 = tpu.memref_squeeze %223 : memref<1x768xf32, #tpu.memory_space<vmem>> -> memref<768xf32, #tpu.memory_space<vmem>>
    %225 = tpu.memref_slice %arg17[%c0_i32_112] : memref<1x!tpu.dma_semaphore, #tpu.memory_space<semaphore_mem>> -> memref<1x!tpu.dma_semaphore, #tpu.memory_space<semaphore_mem>>
    %226 = tpu.memref_squeeze %225 : memref<1x!tpu.dma_semaphore, #tpu.memory_space<semaphore_mem>> -> memref<!tpu.dma_semaphore, #tpu.memory_space<semaphore_mem>>
    tpu.wait_dma2 semaphore(%226 : memref<!tpu.dma_semaphore, #tpu.memory_space<semaphore_mem>>) src(%222 : memref<768xf32, #tpu.memory_space<any>>) dst(%224 : memref<768xf32, #tpu.memory_space<vmem>>)
    %c12_i32_115 = arith.constant 12 : i32
    %c0_i32_116 = arith.constant 0 : i32
    %c0_i32_117 = arith.constant 0 : i32
    %227 = tpu.memref_slice %arg3[%12, %c0_i32_117] : memref<1000x768xf32, #tpu.memory_space<any>> -> memref<1x768xf32, #tpu.memory_space<any>>
    %228 = tpu.memref_squeeze %227 : memref<1x768xf32, #tpu.memory_space<any>> -> memref<768xf32, #tpu.memory_space<any>>
    %c0_i32_118 = arith.constant 0 : i32
    %229 = tpu.memref_slice %arg16[%c12_i32_115, %c0_i32_118] : memref<16x768xf32, #tpu.memory_space<vmem>> -> memref<1x768xf32, #tpu.memory_space<vmem>>
    %230 = tpu.memref_squeeze %229 : memref<1x768xf32, #tpu.memory_space<vmem>> -> memref<768xf32, #tpu.memory_space<vmem>>
    %231 = tpu.memref_slice %arg17[%c0_i32_116] : memref<1x!tpu.dma_semaphore, #tpu.memory_space<semaphore_mem>> -> memref<1x!tpu.dma_semaphore, #tpu.memory_space<semaphore_mem>>
    %232 = tpu.memref_squeeze %231 : memref<1x!tpu.dma_semaphore, #tpu.memory_space<semaphore_mem>> -> memref<!tpu.dma_semaphore, #tpu.memory_space<semaphore_mem>>
    tpu.wait_dma2 semaphore(%232 : memref<!tpu.dma_semaphore, #tpu.memory_space<semaphore_mem>>) src(%228 : memref<768xf32, #tpu.memory_space<any>>) dst(%230 : memref<768xf32, #tpu.memory_space<vmem>>)
    %c13_i32_119 = arith.constant 13 : i32
    %c0_i32_120 = arith.constant 0 : i32
    %c0_i32_121 = arith.constant 0 : i32
    %233 = tpu.memref_slice %arg3[%13, %c0_i32_121] : memref<1000x768xf32, #tpu.memory_space<any>> -> memref<1x768xf32, #tpu.memory_space<any>>
    %234 = tpu.memref_squeeze %233 : memref<1x768xf32, #tpu.memory_space<any>> -> memref<768xf32, #tpu.memory_space<any>>
    %c0_i32_122 = arith.constant 0 : i32
    %235 = tpu.memref_slice %arg16[%c13_i32_119, %c0_i32_122] : memref<16x768xf32, #tpu.memory_space<vmem>> -> memref<1x768xf32, #tpu.memory_space<vmem>>
    %236 = tpu.memref_squeeze %235 : memref<1x768xf32, #tpu.memory_space<vmem>> -> memref<768xf32, #tpu.memory_space<vmem>>
    %237 = tpu.memref_slice %arg17[%c0_i32_120] : memref<1x!tpu.dma_semaphore, #tpu.memory_space<semaphore_mem>> -> memref<1x!tpu.dma_semaphore, #tpu.memory_space<semaphore_mem>>
    %238 = tpu.memref_squeeze %237 : memref<1x!tpu.dma_semaphore, #tpu.memory_space<semaphore_mem>> -> memref<!tpu.dma_semaphore, #tpu.memory_space<semaphore_mem>>
    tpu.wait_dma2 semaphore(%238 : memref<!tpu.dma_semaphore, #tpu.memory_space<semaphore_mem>>) src(%234 : memref<768xf32, #tpu.memory_space<any>>) dst(%236 : memref<768xf32, #tpu.memory_space<vmem>>)
    %c14_i32_123 = arith.constant 14 : i32
    %c0_i32_124 = arith.constant 0 : i32
    %c0_i32_125 = arith.constant 0 : i32
    %239 = tpu.memref_slice %arg3[%14, %c0_i32_125] : memref<1000x768xf32, #tpu.memory_space<any>> -> memref<1x768xf32, #tpu.memory_space<any>>
    %240 = tpu.memref_squeeze %239 : memref<1x768xf32, #tpu.memory_space<any>> -> memref<768xf32, #tpu.memory_space<any>>
    %c0_i32_126 = arith.constant 0 : i32
    %241 = tpu.memref_slice %arg16[%c14_i32_123, %c0_i32_126] : memref<16x768xf32, #tpu.memory_space<vmem>> -> memref<1x768xf32, #tpu.memory_space<vmem>>
    %242 = tpu.memref_squeeze %241 : memref<1x768xf32, #tpu.memory_space<vmem>> -> memref<768xf32, #tpu.memory_space<vmem>>
    %243 = tpu.memref_slice %arg17[%c0_i32_124] : memref<1x!tpu.dma_semaphore, #tpu.memory_space<semaphore_mem>> -> memref<1x!tpu.dma_semaphore, #tpu.memory_space<semaphore_mem>>
    %244 = tpu.memref_squeeze %243 : memref<1x!tpu.dma_semaphore, #tpu.memory_space<semaphore_mem>> -> memref<!tpu.dma_semaphore, #tpu.memory_space<semaphore_mem>>
    tpu.wait_dma2 semaphore(%244 : memref<!tpu.dma_semaphore, #tpu.memory_space<semaphore_mem>>) src(%240 : memref<768xf32, #tpu.memory_space<any>>) dst(%242 : memref<768xf32, #tpu.memory_space<vmem>>)
    %c15_i32_127 = arith.constant 15 : i32
    %c0_i32_128 = arith.constant 0 : i32
    %c0_i32_129 = arith.constant 0 : i32
    %245 = tpu.memref_slice %arg3[%15, %c0_i32_129] : memref<1000x768xf32, #tpu.memory_space<any>> -> memref<1x768xf32, #tpu.memory_space<any>>
    %246 = tpu.memref_squeeze %245 : memref<1x768xf32, #tpu.memory_space<any>> -> memref<768xf32, #tpu.memory_space<any>>
    %c0_i32_130 = arith.constant 0 : i32
    %247 = tpu.memref_slice %arg16[%c15_i32_127, %c0_i32_130] : memref<16x768xf32, #tpu.memory_space<vmem>> -> memref<1x768xf32, #tpu.memory_space<vmem>>
    %248 = tpu.memref_squeeze %247 : memref<1x768xf32, #tpu.memory_space<vmem>> -> memref<768xf32, #tpu.memory_space<vmem>>
    %249 = tpu.memref_slice %arg17[%c0_i32_128] : memref<1x!tpu.dma_semaphore, #tpu.memory_space<semaphore_mem>> -> memref<1x!tpu.dma_semaphore, #tpu.memory_space<semaphore_mem>>
    %250 = tpu.memref_squeeze %249 : memref<1x!tpu.dma_semaphore, #tpu.memory_space<semaphore_mem>> -> memref<!tpu.dma_semaphore, #tpu.memory_space<semaphore_mem>>
    tpu.wait_dma2 semaphore(%250 : memref<!tpu.dma_semaphore, #tpu.memory_space<semaphore_mem>>) src(%246 : memref<768xf32, #tpu.memory_space<any>>) dst(%248 : memref<768xf32, #tpu.memory_space<vmem>>)
    %c0_131 = arith.constant 0 : index
    %c0_132 = arith.constant 0 : index
    %251 = vector.load %arg16[%c0_131, %c0_132] : memref<16x768xf32, #tpu.memory_space<vmem>>, vector<16x768xf32>
    %c0_133 = arith.constant 0 : index
    %c0_134 = arith.constant 0 : index
    %252 = vector.load %arg1[%c0_133, %c0_134] : memref<16x1xf32, #tpu.memory_space<vmem>>, vector<16x1xf32>
    %253 = vector.broadcast %252 : vector<16x1xf32> to vector<16x768xf32>
    %254 = arith.mulf %251, %253 : vector<16x768xf32>
    %255 = arith.truncf %254 : vector<16x768xf32> to vector<16x768xbf16>
    %c0_135 = arith.constant 0 : index
    %c0_136 = arith.constant 0 : index
    %256 = vector.load %arg9[%c0_135, %c0_136] : memref<768x512xbf16, #tpu.memory_space<vmem>>, vector<768x512xbf16>
    %cst_137 = arith.constant dense<0.000000e+00> : vector<16x512xf32>
    %257 = tpu.matmul %255, %256, %cst_137 {dimension_numbers = #tpu.dot_dimension_numbers<[1], [0], [0], [1], [0, 0, 1, 1], [], []>} : vector<16x768xbf16>, vector<768x512xbf16>, vector<16x512xf32> -> vector<16x512xf32>
    %258 = arith.addf %257, %154 : vector<16x512xf32>
    %c0_138 = arith.constant 0 : index
    %c0_139 = arith.constant 0 : index
    %259 = vector.load %arg10[%c0_138, %c0_139] : memref<1x512xf32, #tpu.memory_space<vmem>>, vector<1x512xf32>
    %260 = vector.broadcast %259 : vector<1x512xf32> to vector<16x512xf32>
    %261 = arith.addf %258, %260 : vector<16x512xf32>
    %cst_140 = arith.constant 0.000000e+00 : f32
    %262 = vector.broadcast %cst_140 : f32 to vector<16x512xf32>
    %263 = arith.maximumf %261, %262 : vector<16x512xf32>
    %c0_141 = arith.constant 0 : index
    %c0_142 = arith.constant 0 : index
    %264 = vector.load %arg11[%c0_141, %c0_142] : memref<1x512xf32, #tpu.memory_space<vmem>>, vector<1x512xf32>
    %c0_143 = arith.constant 0 : index
    %c0_144 = arith.constant 0 : index
    %265 = vector.load %arg12[%c0_143, %c0_144] : memref<1x512xf32, #tpu.memory_space<vmem>>, vector<1x512xf32>
    %cst_145 = arith.constant dense<0.000000e+00> : vector<16xf32>
    %266 = vector.multi_reduction <add>, %263, %cst_145 [1] : vector<16x512xf32> to vector<16xf32>
    %267 = vector.shape_cast %266 : vector<16xf32> to vector<16x1xf32>
    %cst_146 = arith.constant 5.120000e+02 : f32
    %268 = vector.broadcast %cst_146 : f32 to vector<16x1xf32>
    %269 = arith.divf %267, %268 : vector<16x1xf32>
    %270 = vector.broadcast %269 : vector<16x1xf32> to vector<16x512xf32>
    %271 = arith.subf %263, %270 : vector<16x512xf32>
    %272 = arith.mulf %271, %271 : vector<16x512xf32>
    %cst_147 = arith.constant dense<0.000000e+00> : vector<16xf32>
    %273 = vector.multi_reduction <add>, %272, %cst_147 [1] : vector<16x512xf32> to vector<16xf32>
    %274 = vector.shape_cast %273 : vector<16xf32> to vector<16x1xf32>
    %cst_148 = arith.constant 5.120000e+02 : f32
    %275 = vector.broadcast %cst_148 : f32 to vector<16x1xf32>
    %276 = arith.divf %274, %275 : vector<16x1xf32>
    %277 = vector.broadcast %269 : vector<16x1xf32> to vector<16x512xf32>
    %278 = arith.subf %263, %277 : vector<16x512xf32>
    %cst_149 = arith.constant 9.99999974E-6 : f32
    %279 = vector.broadcast %cst_149 : f32 to vector<16x1xf32>
    %280 = arith.addf %276, %279 : vector<16x1xf32>
    %281 = math.rsqrt %280 : vector<16x1xf32>
    %282 = vector.broadcast %281 : vector<16x1xf32> to vector<16x512xf32>
    %283 = arith.mulf %278, %282 : vector<16x512xf32>
    %284 = vector.broadcast %264 : vector<1x512xf32> to vector<16x512xf32>
    %285 = arith.mulf %283, %284 : vector<16x512xf32>
    %286 = vector.broadcast %265 : vector<1x512xf32> to vector<16x512xf32>
    %287 = arith.addf %285, %286 : vector<16x512xf32>
    %288 = arith.truncf %287 : vector<16x512xf32> to vector<16x512xbf16>
    %c0_150 = arith.constant 0 : index
    %c0_151 = arith.constant 0 : index
    %289 = vector.load %arg13[%c0_150, %c0_151] : memref<512x128xbf16, #tpu.memory_space<vmem>>, vector<512x128xbf16>
    %cst_152 = arith.constant dense<0.000000e+00> : vector<16x128xf32>
    %290 = tpu.matmul %288, %289, %cst_152 {dimension_numbers = #tpu.dot_dimension_numbers<[1], [0], [0], [1], [0, 0, 1, 1], [], []>} : vector<16x512xbf16>, vector<512x128xbf16>, vector<16x128xf32> -> vector<16x128xf32>
    %c0_153 = arith.constant 0 : index
    %c0_154 = arith.constant 0 : index
    %291 = vector.load %arg14[%c0_153, %c0_154] : memref<1x128xf32, #tpu.memory_space<vmem>>, vector<1x128xf32>
    %292 = vector.broadcast %291 : vector<1x128xf32> to vector<16x128xf32>
    %293 = arith.addf %290, %292 : vector<16x128xf32>
    %c0_155 = arith.constant 0 : index
    %c0_156 = arith.constant 0 : index
    %294 = vector.load %arg15[%c0_155, %c0_156] : memref<16x128xf32, #tpu.memory_space<vmem>>, vector<16x128xf32>
    tpu.vector_store %arg15[%c0_155, %c0_156], %293 {strides = array<i32>} : memref<16x128xf32, #tpu.memory_space<vmem>>, vector<16x128xf32>,
    return
  }
}

</mosaic_0001>

<llo_original>
// kernel: tpu_custom_call.1
$region0: #{tpu_custom_call.1}
  #allocation0 [shape = 'u32[]', space=smem, size = 0x4, offset = 0x4, fixed_abs, tag = 'smem constant byte address 0x4 - core index']
  #allocation1 [shape = 'u32[144,128]{1,0:T(1,128)}', space=vmem, size = 0x12000, scoped, tag = 'internal scratch']
  #allocation2 [shape = 'f32[16,768]{1,0:T(8,128)}', space=vmem, size = 0xc000, scoped, tag = 'scratch operand']
  #allocation3 [shape = 's32[1]{0}', space=sflag, size = 0x4, scoped, tag = 'scratch operand']
  #allocation27 [shape = 's32[]', space=sflag, size = 0x4, offset = 0, fixed_abs, tag = 'sflag constant byte address 0x0 - dummy sync flag']
  #allocation28 [shape = 's32[]', space=sflag, size = 0x4, offset = 0, fixed_abs, tag = 'sflag constant byte address 0x0 - dummy sync flag']
  #allocation29 [shape = 's32[]', space=sflag, size = 0x4, offset = 0, fixed_abs, tag = 'sflag constant byte address 0x0 - dummy sync flag']
  #allocation30 [shape = 's32[]', space=sflag, size = 0x4, offset = 0, fixed_abs, tag = 'sflag constant byte address 0x0 - dummy sync flag']
  #allocation31 [shape = 's32[]', space=sflag, size = 0x4, offset = 0, fixed_abs, tag = 'sflag constant byte address 0x0 - dummy sync flag']
  #allocation32 [shape = 's32[]', space=sflag, size = 0x4, offset = 0, fixed_abs, tag = 'sflag constant byte address 0x0 - dummy sync flag']
  #allocation33 [shape = 's32[]', space=sflag, size = 0x4, offset = 0, fixed_abs, tag = 'sflag constant byte address 0x0 - dummy sync flag']
  #allocation34 [shape = 's32[]', space=sflag, size = 0x4, offset = 0, fixed_abs, tag = 'sflag constant byte address 0x0 - dummy sync flag']
  #allocation35 [shape = 's32[]', space=sflag, size = 0x4, offset = 0, fixed_abs, tag = 'sflag constant byte address 0x0 - dummy sync flag']
  #allocation36 [shape = 's32[]', space=sflag, size = 0x4, offset = 0, fixed_abs, tag = 'sflag constant byte address 0x0 - dummy sync flag']
  #allocation37 [shape = 's32[]', space=sflag, size = 0x4, offset = 0, fixed_abs, tag = 'sflag constant byte address 0x0 - dummy sync flag']
  #allocation38 [shape = 's32[]', space=sflag, size = 0x4, offset = 0, fixed_abs, tag = 'sflag constant byte address 0x0 - dummy sync flag']
  #allocation39 [shape = 's32[]', space=sflag, size = 0x4, offset = 0, fixed_abs, tag = 'sflag constant byte address 0x0 - dummy sync flag']
  #allocation40 [shape = 's32[]', space=sflag, size = 0x4, offset = 0, fixed_abs, tag = 'sflag constant byte address 0x0 - dummy sync flag']
  #allocation41 [shape = 's32[]', space=sflag, size = 0x4, offset = 0, fixed_abs, tag = 'sflag constant byte address 0x0 - dummy sync flag']
  #allocation42 [shape = 's32[]', space=sflag, size = 0x4, offset = 0, fixed_abs, tag = 'sflag constant byte address 0x0 - dummy sync flag']
  %s0 = inlined_call_operand.hbm [shape: s32[16], index: 0, kind: input, shape index: {}]
  %s1 = inlined_call_operand.vmem [shape: f32[16,1], index: 1, kind: input, shape index: {}]
  %s2 = inlined_call_operand.hbm [shape: f32[2,64], index: 2, kind: input, shape index: {}]
  %s3 = inlined_call_operand.hbm [shape: f32[1000,768], index: 3, kind: input, shape index: {}]
  %s4 = inlined_call_operand.hbm [shape: bf16[64,256], index: 4, kind: input, shape index: {}]
  %s5 = inlined_call_operand.hbm [shape: f32[1,256], index: 5, kind: input, shape index: {}]
  %s6 = inlined_call_operand.hbm [shape: f32[1,256], index: 6, kind: input, shape index: {}]
  %s7 = inlined_call_operand.hbm [shape: f32[1,256], index: 7, kind: input, shape index: {}]
  %s8 = inlined_call_operand.hbm [shape: bf16[256,512], index: 8, kind: input, shape index: {}]
  %s9 = inlined_call_operand.hbm [shape: bf16[768,512], index: 9, kind: input, shape index: {}]
  %s10 = inlined_call_operand.hbm [shape: f32[1,512], index: 10, kind: input, shape index: {}]
  %s11 = inlined_call_operand.hbm [shape: f32[1,512], index: 11, kind: input, shape index: {}]
  %s12 = inlined_call_operand.hbm [shape: f32[1,512], index: 12, kind: input, shape index: {}]
  %s13 = inlined_call_operand.hbm [shape: bf16[512,128], index: 13, kind: input, shape index: {}]
  %s14 = inlined_call_operand.hbm [shape: f32[1,128], index: 14, kind: input, shape index: {}]
  %s15 = inlined_call_operand.hbm [shape: f32[16,128], index: 15, kind: output, shape index: {}]
  %s16 = sld [smem:[#allocation0]]
  $region118: #{tpu_custom_call.1} parent=0
    _
  %s18 = ssub.s32 1, %s16
  %s19 = scalar_select 0, %s18, %s16
  $region1: #{tpu_custom_call.1} parent=0
    #allocation4 [shape = 'u8[512]{0}', space=smem, size = 0x200, scoped, tag = 'input window, operand 0, single buffered']
    #allocation5 [shape = 's32[1]{0}', space=sflag, size = 0x4, scoped, tag = 'scoped memory for tpu_custom_call.1']
    #allocation6 [shape = 's32[1]{0}', space=sflag, size = 0x4, scoped, tag = 'scoped memory for tpu_custom_call.1']
    #allocation7 [shape = 's32[1]{0}', space=sflag, size = 0x4, scoped, tag = 'scoped memory for tpu_custom_call.1']
    #allocation8 [shape = 'u8[1024]{0}', space=vmem, size = 0x400, scoped, tag = 'input window, operand 2, single buffered']
    #allocation9 [shape = 'u8[32768]{0}', space=vmem, size = 0x8000, scoped, tag = 'input window, operand 4, single buffered']
    #allocation10 [shape = 's32[1]{0}', space=sflag, size = 0x4, scoped, tag = 'scoped memory for tpu_custom_call.1']
    #allocation11 [shape = 'u8[1024]{0}', space=vmem, size = 0x400, scoped, tag = 'input window, operand 5, single buffered']
    #allocation12 [shape = 'u8[1024]{0}', space=vmem, size = 0x400, scoped, tag = 'input window, operand 6, single buffered']
    #allocation13 [shape = 's32[1]{0}', space=sflag, size = 0x4, scoped, tag = 'scoped memory for tpu_custom_call.1']
    #allocation14 [shape = 'u8[1024]{0}', space=vmem, size = 0x400, scoped, tag = 'input window, operand 7, single buffered']
    #allocation15 [shape = 'u8[262144]{0}', space=vmem, size = 0x40000, scoped, tag = 'input window, operand 8, single buffered']
    #allocation16 [shape = 's32[1]{0}', space=sflag, size = 0x4, scoped, tag = 'scoped memory for tpu_custom_call.1']
    #allocation17 [shape = 'u8[786432]{0}', space=vmem, size = 0xc0000, scoped, tag = 'input window, operand 9, single buffered']
    #allocation18 [shape = 'u8[2048]{0}', space=vmem, size = 0x800, scoped, tag = 'input window, operand 10, single buffered']
    #allocation19 [shape = 's32[1]{0}', space=sflag, size = 0x4, scoped, tag = 'scoped memory for tpu_custom_call.1']
    #allocation20 [shape = 'u8[2048]{0}', space=vmem, size = 0x800, scoped, tag = 'input window, operand 11, single buffered']
    #allocation21 [shape = 'u8[2048]{0}', space=vmem, size = 0x800, scoped, tag = 'input window, operand 12, single buffered']
    #allocation22 [shape = 's32[1]{0}', space=sflag, size = 0x4, scoped, tag = 'scoped memory for tpu_custom_call.1']
    #allocation23 [shape = 'u8[131072]{0}', space=vmem, size = 0x20000, scoped, tag = 'input window, operand 13, single buffered']
    #allocation24 [shape = 'u8[512]{0}', space=vmem, size = 0x400, scoped, tag = 'input window, operand 14, single buffered']
    #allocation25 [shape = 's32[1]{0}', space=sflag, size = 0x4, scoped, tag = 'scoped memory for tpu_custom_call.1']
    #allocation26 [shape = 'u8[8192]{0}', space=vmem, size = 0x2000, scoped, tag = 'output window, operand 0, single buffered']
    %20 = vsyncpa [#allocation7], 0
    %21 = vsyncpa [#allocation5], 0
    %22 = vsyncpa [#allocation10], 0
    %23 = vsyncpa [#allocation13], 0
    %24 = vsyncpa [#allocation16], 0
    %25 = vsyncpa [#allocation19], 0
    %26 = vsyncpa [#allocation22], 0
    %27 = vsyncpa [#allocation25], 0
    %28 = vsyncpa [#allocation6], 0
    // Predicated region
    $region2: #{tpu_custom_call.1} parent=1 // pred_check
      _
    $region3: #{tpu_custom_call.1} parent=1 // pred_check_branch
      %30 = sbr.rel (0) target = $region5
    $region4: #{tpu_custom_call.1} parent=1 // pred_region
      %s32 = ssub.s32 16, 16
      %33 = vsyncadd [#allocation7], %s32
      %36 = dma.hbm_to_smem %s0, 16, [#allocation4], [#allocation7]
    $region5: #{tpu_custom_call.1} parent=1 // pred_fallthru
      _
    // Predicated region
    $region6: #{tpu_custom_call.1} parent=1 // pred_check
      _
    $region7: #{tpu_custom_call.1} parent=1 // pred_check_branch
      %38 = sbr.rel (0) target = $region9
    $region8: #{tpu_custom_call.1} parent=1 // pred_region
      _
    $region9: #{tpu_custom_call.1} parent=1 // pred_fallthru
      _
    // Predicated region
    $region10: #{tpu_custom_call.1} parent=1 // pred_check
      _
    $region11: #{tpu_custom_call.1} parent=1 // pred_check_branch
      %40 = sbr.rel (0) target = $region13
    $region12: #{tpu_custom_call.1} parent=1 // pred_region
      %s42 = ssub.s32 32, 32
      %43 = vsyncadd [#allocation5], %s42
      %s45 = sshll.u32 [#allocation8], 4
      %s46 = int_to_ptr.vmem [resolvable:$true] %s45
      %48 = dma.hbm_to_vmem [thread:$0]  %s2, 32, %s46, [#allocation5]
    $region13: #{tpu_custom_call.1} parent=1 // pred_fallthru
      _
    // Predicated region
    $region14: #{tpu_custom_call.1} parent=1 // pred_check
      _
    $region15: #{tpu_custom_call.1} parent=1 // pred_check_branch
      %50 = sbr.rel (0) target = $region17
    $region16: #{tpu_custom_call.1} parent=1 // pred_region
      %s52 = ssub.s32 1024, 1024
      %53 = vsyncadd [#allocation10], %s52
      %s54 = sshll.u32 [#allocation9], 4
      %s55 = int_to_ptr.vmem [resolvable:$true] %s54
      %60 = dma.hbm_to_vmem [thread:$0]  %s4, 1024, %s55, [#allocation10], 128, 128, 8
    $region17: #{tpu_custom_call.1} parent=1 // pred_fallthru
      _
    // Predicated region
    $region18: #{tpu_custom_call.1} parent=1 // pred_check
      _
    $region19: #{tpu_custom_call.1} parent=1 // pred_check_branch
      %62 = sbr.rel (0) target = $region21
    $region20: #{tpu_custom_call.1} parent=1 // pred_region
      %s64 = ssub.s32 32, 32
      %65 = vsyncadd [#allocation10], %s64
      %s67 = sshll.u32 [#allocation11], 4
      %s68 = int_to_ptr.vmem [resolvable:$true] %s67
      %70 = dma.hbm_to_vmem [thread:$0]  %s5, 32, %s68, [#allocation10]
    $region21: #{tpu_custom_call.1} parent=1 // pred_fallthru
      _
    // Predicated region
    $region22: #{tpu_custom_call.1} parent=1 // pred_check
      _
    $region23: #{tpu_custom_call.1} parent=1 // pred_check_branch
      %72 = sbr.rel (0) target = $region25
    $region24: #{tpu_custom_call.1} parent=1 // pred_region
      %s74 = ssub.s32 32, 32
      %75 = vsyncadd [#allocation13], %s74
      %s77 = sshll.u32 [#allocation12], 4
      %s78 = int_to_ptr.vmem [resolvable:$true] %s77
      %80 = dma.hbm_to_vmem [thread:$0]  %s6, 32, %s78, [#allocation13]
    $region25: #{tpu_custom_call.1} parent=1 // pred_fallthru
      _
    // Predicated region
    $region26: #{tpu_custom_call.1} parent=1 // pred_check
      _
    $region27: #{tpu_custom_call.1} parent=1 // pred_check_branch
      %82 = sbr.rel (0) target = $region29
    $region28: #{tpu_custom_call.1} parent=1 // pred_region
      %s84 = ssub.s32 32, 32
      %85 = vsyncadd [#allocation13], %s84
      %s87 = sshll.u32 [#allocation14], 4
      %s88 = int_to_ptr.vmem [resolvable:$true] %s87
      %90 = dma.hbm_to_vmem [thread:$0]  %s7, 32, %s88, [#allocation13]
    $region29: #{tpu_custom_call.1} parent=1 // pred_fallthru
      _
    // Predicated region
    $region30: #{tpu_custom_call.1} parent=1 // pred_check
      _
    $region31: #{tpu_custom_call.1} parent=1 // pred_check_branch
      %92 = sbr.rel (0) target = $region33
    $region32: #{tpu_custom_call.1} parent=1 // pred_region
      %s94 = ssub.s32 8192, 8192
      %95 = vsyncadd [#allocation16], %s94
      %s96 = sshll.u32 [#allocation15], 4
      %s97 = int_to_ptr.vmem [resolvable:$true] %s96
      %102 = dma.hbm_to_vmem [thread:$0]  %s8, 8192, %s97, [#allocation16], 256, 256, 16
    $region33: #{tpu_custom_call.1} parent=1 // pred_fallthru
      _
    // Predicated region
    $region34: #{tpu_custom_call.1} parent=1 // pred_check
      _
    $region35: #{tpu_custom_call.1} parent=1 // pred_check_branch
      %104 = sbr.rel (0) target = $region37
    $region36: #{tpu_custom_call.1} parent=1 // pred_region
      %s106 = ssub.s32 24576, 24576
      %107 = vsyncadd [#allocation16], %s106
      %s108 = sshll.u32 [#allocation17], 4
      %s109 = int_to_ptr.vmem [resolvable:$true] %s108
      %114 = dma.hbm_to_vmem [thread:$0]  %s9, 24576, %s109, [#allocation16], 256, 256, 16
    $region37: #{tpu_custom_call.1} parent=1 // pred_fallthru
      _
    // Predicated region
    $region38: #{tpu_custom_call.1} parent=1 // pred_check
      _
    $region39: #{tpu_custom_call.1} parent=1 // pred_check_branch
      %116 = sbr.rel (0) target = $region41
    $region40: #{tpu_custom_call.1} parent=1 // pred_region
      %s118 = ssub.s32 64, 64
      %119 = vsyncadd [#allocation19], %s118
      %s121 = sshll.u32 [#allocation18], 4
      %s122 = int_to_ptr.vmem [resolvable:$true] %s121
      %124 = dma.hbm_to_vmem [thread:$0]  %s10, 64, %s122, [#allocation19]
    $region41: #{tpu_custom_call.1} parent=1 // pred_fallthru
      _
    // Predicated region
    $region42: #{tpu_custom_call.1} parent=1 // pred_check
      _
    $region43: #{tpu_custom_call.1} parent=1 // pred_check_branch
      %126 = sbr.rel (0) target = $region45
    $region44: #{tpu_custom_call.1} parent=1 // pred_region
      %s128 = ssub.s32 64, 64
      %129 = vsyncadd [#allocation19], %s128
      %s131 = sshll.u32 [#allocation20], 4
      %s132 = int_to_ptr.vmem [resolvable:$true] %s131
      %134 = dma.hbm_to_vmem [thread:$0]  %s11, 64, %s132, [#allocation19]
    $region45: #{tpu_custom_call.1} parent=1 // pred_fallthru
      _
    // Predicated region
    $region46: #{tpu_custom_call.1} parent=1 // pred_check
      _
    $region47: #{tpu_custom_call.1} parent=1 // pred_check_branch
      %136 = sbr.rel (0) target = $region49
    $region48: #{tpu_custom_call.1} parent=1 // pred_region
      %s138 = ssub.s32 64, 64
      %139 = vsyncadd [#allocation22], %s138
      %s141 = sshll.u32 [#allocation21], 4
      %s142 = int_to_ptr.vmem [resolvable:$true] %s141
      %144 = dma.hbm_to_vmem [thread:$0]  %s12, 64, %s142, [#allocation22]
    $region49: #{tpu_custom_call.1} parent=1 // pred_fallthru
      _
    // Predicated region
    $region50: #{tpu_custom_call.1} parent=1 // pred_check
      _
    $region51: #{tpu_custom_call.1} parent=1 // pred_check_branch
      %146 = sbr.rel (0) target = $region53
    $region52: #{tpu_custom_call.1} parent=1 // pred_region
      %s148 = ssub.s32 4096, 4096
      %149 = vsyncadd [#allocation22], %s148
      %s150 = sshll.u32 [#allocation23], 4
      %s151 = int_to_ptr.vmem [resolvable:$true] %s150
      %156 = dma.hbm_to_vmem [thread:$0]  %s13, 4096, %s151, [#allocation22], 64, 64, 4
    $region53: #{tpu_custom_call.1} parent=1 // pred_fallthru
      _
    // Predicated region
    $region54: #{tpu_custom_call.1} parent=1 // pred_check
      _
    $region55: #{tpu_custom_call.1} parent=1 // pred_check_branch
      %158 = sbr.rel (0) target = $region57
    $region56: #{tpu_custom_call.1} parent=1 // pred_region
      %s160 = ssub.s32 16, 16
      %161 = vsyncadd [#allocation25], %s160
      %s163 = sshll.u32 [#allocation24], 4
      %s164 = int_to_ptr.vmem [resolvable:$true] %s163
      %166 = dma.hbm_to_vmem [thread:$0]  %s14, 16, %s164, [#allocation25]
    $region57: #{tpu_custom_call.1} parent=1 // pred_fallthru
      _
    // Predicated region
    $region58: #{tpu_custom_call.1} parent=1 // pred_check
      _
    $region59: #{tpu_custom_call.1} parent=1 // pred_check_branch
      %168 = sbr.rel (0) target = $region61
    $region60: #{tpu_custom_call.1} parent=1 // pred_region
      %169 = dma.done [#allocation7], 16
    $region61: #{tpu_custom_call.1} parent=1 // pred_fallthru
      _
    // Predicated region
    $region62: #{tpu_custom_call.1} parent=1 // pred_check
      _
    $region63: #{tpu_custom_call.1} parent=1 // pred_check_branch
      %171 = sbr.rel (0) target = $region65
    $region64: #{tpu_custom_call.1} parent=1 // pred_region
      %172 = dma.done [#allocation5], 32
    $region65: #{tpu_custom_call.1} parent=1 // pred_fallthru
      _
    // Predicated region
    $region66: #{tpu_custom_call.1} parent=1 // pred_check
      _
    $region67: #{tpu_custom_call.1} parent=1 // pred_check_branch
      %174 = sbr.rel (0) target = $region69
    $region68: #{tpu_custom_call.1} parent=1 // pred_region
      %175 = dma.done [#allocation10], 1024
    $region69: #{tpu_custom_call.1} parent=1 // pred_fallthru
      _
    // Predicated region
    $region70: #{tpu_custom_call.1} parent=1 // pred_check
      _
    $region71: #{tpu_custom_call.1} parent=1 // pred_check_branch
      %177 = sbr.rel (0) target = $region73
    $region72: #{tpu_custom_call.1} parent=1 // pred_region
      %178 = dma.done [#allocation10], 32
    $region73: #{tpu_custom_call.1} parent=1 // pred_fallthru
      _
    // Predicated region
    $region74: #{tpu_custom_call.1} parent=1 // pred_check
      _
    $region75: #{tpu_custom_call.1} parent=1 // pred_check_branch
      %180 = sbr.rel (0) target = $region77
    $region76: #{tpu_custom_call.1} parent=1 // pred_region
      %181 = dma.done [#allocation13], 32
    $region77: #{tpu_custom_call.1} parent=1 // pred_fallthru
      _
    // Predicated region
    $region78: #{tpu_custom_call.1} parent=1 // pred_check
      _
    $region79: #{tpu_custom_call.1} parent=1 // pred_check_branch
      %183 = sbr.rel (0) target = $region81
    $region80: #{tpu_custom_call.1} parent=1 // pred_region
      %184 = dma.done [#allocation13], 32
    $region81: #{tpu_custom_call.1} parent=1 // pred_fallthru
      _
    // Predicated region
    $region82: #{tpu_custom_call.1} parent=1 // pred_check
      _
    $region83: #{tpu_custom_call.1} parent=1 // pred_check_branch
      %186 = sbr.rel (0) target = $region85
    $region84: #{tpu_custom_call.1} parent=1 // pred_region
      %187 = dma.done [#allocation16], 8192
    $region85: #{tpu_custom_call.1} parent=1 // pred_fallthru
      _
    // Predicated region
    $region86: #{tpu_custom_call.1} parent=1 // pred_check
      _
    $region87: #{tpu_custom_call.1} parent=1 // pred_check_branch
      %189 = sbr.rel (0) target = $region89
    $region88: #{tpu_custom_call.1} parent=1 // pred_region
      %190 = dma.done [#allocation16], 24576
    $region89: #{tpu_custom_call.1} parent=1 // pred_fallthru
      _
    // Predicated region
    $region90: #{tpu_custom_call.1} parent=1 // pred_check
      _
    $region91: #{tpu_custom_call.1} parent=1 // pred_check_branch
      %192 = sbr.rel (0) target = $region93
    $region92: #{tpu_custom_call.1} parent=1 // pred_region
      %193 = dma.done [#allocation19], 64
    $region93: #{tpu_custom_call.1} parent=1 // pred_fallthru
      _
    // Predicated region
    $region94: #{tpu_custom_call.1} parent=1 // pred_check
      _
    $region95: #{tpu_custom_call.1} parent=1 // pred_check_branch
      %195 = sbr.rel (0) target = $region97
    $region96: #{tpu_custom_call.1} parent=1 // pred_region
      %196 = dma.done [#allocation19], 64
    $region97: #{tpu_custom_call.1} parent=1 // pred_fallthru
      _
    // Predicated region
    $region98: #{tpu_custom_call.1} parent=1 // pred_check
      _
    $region99: #{tpu_custom_call.1} parent=1 // pred_check_branch
      %198 = sbr.rel (0) target = $region101
    $region100: #{tpu_custom_call.1} parent=1 // pred_region
      %199 = dma.done [#allocation22], 64
    $region101: #{tpu_custom_call.1} parent=1 // pred_fallthru
      _
    // Predicated region
    $region102: #{tpu_custom_call.1} parent=1 // pred_check
      _
    $region103: #{tpu_custom_call.1} parent=1 // pred_check_branch
      %201 = sbr.rel (0) target = $region105
    $region104: #{tpu_custom_call.1} parent=1 // pred_region
      %202 = dma.done [#allocation22], 4096
    $region105: #{tpu_custom_call.1} parent=1 // pred_fallthru
      _
    // Predicated region
    $region106: #{tpu_custom_call.1} parent=1 // pred_check
      _
    $region107: #{tpu_custom_call.1} parent=1 // pred_check_branch
      %204 = sbr.rel (0) target = $region109
    $region108: #{tpu_custom_call.1} parent=1 // pred_region
      %205 = dma.done [#allocation25], 16
    $region109: #{tpu_custom_call.1} parent=1 // pred_fallthru
      _
    %206 = sfence
    %s208 = sld [smem:[#allocation4]]
    %s209 = sld [smem:[#allocation4 + $0x1]]
    %s210 = sld [smem:[#allocation4 + $0x2]]
    %s211 = sld [smem:[#allocation4 + $0x3]]
    %s212 = sld [smem:[#allocation4 + $0x4]]
    %s213 = sld [smem:[#allocation4 + $0x5]]
    %s214 = sld [smem:[#allocation4 + $0x6]]
    %s215 = sld [smem:[#allocation4 + $0x7]]
    %s216 = sld [smem:[#allocation4 + $0x8]]
    %s217 = sld [smem:[#allocation4 + $0x9]]
    %s218 = sld [smem:[#allocation4 + $0xa]]
    %s219 = sld [smem:[#allocation4 + $0xb]]
    %s220 = sld [smem:[#allocation4 + $0xc]]
    %s221 = sld [smem:[#allocation4 + $0xd]]
    %s222 = sld [smem:[#allocation4 + $0xe]]
    %s223 = sld [smem:[#allocation4 + $0xf]]
    %s224 = sshrl.u32 %s208, 3
    %s225 = sand.u32 %s208, 7
    %s226 = smul.u32 %s224, 48
    %s227 = sadd.s32 %s225, %s226
    %s228 = smul.addr %s227, 16
    %s229 = scalar_lea.hbm %s3, %s228
    %s231 = sshll.u32 [#allocation2], 4
    %s232 = int_to_ptr.vmem [resolvable:$true] %s231
    %234 = dma.hbm_to_vmem [thread:$0]  %s229, 96, %s232, [#allocation3], 128, 128, 1
    %s235 = sshrl.u32 %s209, 3
    %s236 = sand.u32 %s209, 7
    %s237 = smul.u32 %s235, 48
    %s238 = sadd.s32 %s236, %s237
    %s239 = smul.addr %s238, 16
    %s240 = scalar_lea.hbm %s3, %s239
    %s241 = scalar_lea.vmem [#allocation2], 1
    %s243 = sshll.u32 %s241, 4
    %s244 = int_to_ptr.vmem [resolvable:$true] %s243
    %246 = dma.hbm_to_vmem [thread:$0]  %s240, 96, %s244, [#allocation3], 128, 128, 1
    %s247 = sshrl.u32 %s210, 3
    %s248 = sand.u32 %s210, 7
    %s249 = smul.u32 %s247, 48
    %s250 = sadd.s32 %s248, %s249
    %s251 = smul.addr %s250, 16
    %s252 = scalar_lea.hbm %s3, %s251
    %s253 = scalar_lea.vmem [#allocation2], 2
    %s255 = sshll.u32 %s253, 4
    %s256 = int_to_ptr.vmem [resolvable:$true] %s255
    %258 = dma.hbm_to_vmem [thread:$0]  %s252, 96, %s256, [#allocation3], 128, 128, 1
    %s259 = sshrl.u32 %s211, 3
    %s260 = sand.u32 %s211, 7
    %s261 = smul.u32 %s259, 48
    %s262 = sadd.s32 %s260, %s261
    %s263 = smul.addr %s262, 16
    %s264 = scalar_lea.hbm %s3, %s263
    %s265 = scalar_lea.vmem [#allocation2], 3
    %s267 = sshll.u32 %s265, 4
    %s268 = int_to_ptr.vmem [resolvable:$true] %s267
    %270 = dma.hbm_to_vmem [thread:$0]  %s264, 96, %s268, [#allocation3], 128, 128, 1
    %s271 = sshrl.u32 %s212, 3
    %s272 = sand.u32 %s212, 7
    %s273 = smul.u32 %s271, 48
    %s274 = sadd.s32 %s272, %s273
    %s275 = smul.addr %s274, 16
    %s276 = scalar_lea.hbm %s3, %s275
    %s277 = scalar_lea.vmem [#allocation2], 4
    %s279 = sshll.u32 %s277, 4
    %s280 = int_to_ptr.vmem [resolvable:$true] %s279
    %282 = dma.hbm_to_vmem [thread:$0]  %s276, 96, %s280, [#allocation3], 128, 128, 1
    %s283 = sshrl.u32 %s213, 3
    %s284 = sand.u32 %s213, 7
    %s285 = smul.u32 %s283, 48
    %s286 = sadd.s32 %s284, %s285
    %s287 = smul.addr %s286, 16
    %s288 = scalar_lea.hbm %s3, %s287
    %s289 = scalar_lea.vmem [#allocation2], 5
    %s291 = sshll.u32 %s289, 4
    %s292 = int_to_ptr.vmem [resolvable:$true] %s291
    %294 = dma.hbm_to_vmem [thread:$0]  %s288, 96, %s292, [#allocation3], 128, 128, 1
    %s295 = sshrl.u32 %s214, 3
    %s296 = sand.u32 %s214, 7
    %s297 = smul.u32 %s295, 48
    %s298 = sadd.s32 %s296, %s297
    %s299 = smul.addr %s298, 16
    %s300 = scalar_lea.hbm %s3, %s299
    %s301 = scalar_lea.vmem [#allocation2], 6
    %s303 = sshll.u32 %s301, 4
    %s304 = int_to_ptr.vmem [resolvable:$true] %s303
    %306 = dma.hbm_to_vmem [thread:$0]  %s300, 96, %s304, [#allocation3], 128, 128, 1
    %s307 = sshrl.u32 %s215, 3
    %s308 = sand.u32 %s215, 7
    %s309 = smul.u32 %s307, 48
    %s310 = sadd.s32 %s308, %s309
    %s311 = smul.addr %s310, 16
    %s312 = scalar_lea.hbm %s3, %s311
    %s313 = scalar_lea.vmem [#allocation2], 7
    %s315 = sshll.u32 %s313, 4
    %s316 = int_to_ptr.vmem [resolvable:$true] %s315
    %318 = dma.hbm_to_vmem [thread:$0]  %s312, 96, %s316, [#allocation3], 128, 128, 1
    %s319 = sshrl.u32 %s216, 3
    %s320 = sand.u32 %s216, 7
    %s321 = smul.u32 %s319, 48
    %s322 = sadd.s32 %s320, %s321
    %s323 = smul.addr %s322, 16
    %s324 = scalar_lea.hbm %s3, %s323
    %s325 = scalar_lea.vmem [#allocation2], 48
    %s327 = sshll.u32 %s325, 4
    %s328 = int_to_ptr.vmem [resolvable:$true] %s327
    %330 = dma.hbm_to_vmem [thread:$0]  %s324, 96, %s328, [#allocation3], 128, 128, 1
    %s331 = sshrl.u32 %s217, 3
    %s332 = sand.u32 %s217, 7
    %s333 = smul.u32 %s331, 48
    %s334 = sadd.s32 %s332, %s333
    %s335 = smul.addr %s334, 16
    %s336 = scalar_lea.hbm %s3, %s335
    %s337 = scalar_lea.vmem [#allocation2], 49
    %s339 = sshll.u32 %s337, 4
    %s340 = int_to_ptr.vmem [resolvable:$true] %s339
    %342 = dma.hbm_to_vmem [thread:$0]  %s336, 96, %s340, [#allocation3], 128, 128, 1
    %s343 = sshrl.u32 %s218, 3
    %s344 = sand.u32 %s218, 7
    %s345 = smul.u32 %s343, 48
    %s346 = sadd.s32 %s344, %s345
    %s347 = smul.addr %s346, 16
    %s348 = scalar_lea.hbm %s3, %s347
    %s349 = scalar_lea.vmem [#allocation2], 50
    %s351 = sshll.u32 %s349, 4
    %s352 = int_to_ptr.vmem [resolvable:$true] %s351
    %354 = dma.hbm_to_vmem [thread:$0]  %s348, 96, %s352, [#allocation3], 128, 128, 1
    %s355 = sshrl.u32 %s219, 3
    %s356 = sand.u32 %s219, 7
    %s357 = smul.u32 %s355, 48
    %s358 = sadd.s32 %s356, %s357
    %s359 = smul.addr %s358, 16
    %s360 = scalar_lea.hbm %s3, %s359
    %s361 = scalar_lea.vmem [#allocation2], 51
    %s363 = sshll.u32 %s361, 4
    %s364 = int_to_ptr.vmem [resolvable:$true] %s363
    %366 = dma.hbm_to_vmem [thread:$0]  %s360, 96, %s364, [#allocation3], 128, 128, 1
    %s367 = sshrl.u32 %s220, 3
    %s368 = sand.u32 %s220, 7
    %s369 = smul.u32 %s367, 48
    %s370 = sadd.s32 %s368, %s369
    %s371 = smul.addr %s370, 16
    %s372 = scalar_lea.hbm %s3, %s371
    %s373 = scalar_lea.vmem [#allocation2], 52
    %s375 = sshll.u32 %s373, 4
    %s376 = int_to_ptr.vmem [resolvable:$true] %s375
    %378 = dma.hbm_to_vmem [thread:$0]  %s372, 96, %s376, [#allocation3], 128, 128, 1
    %s379 = sshrl.u32 %s221, 3
    %s380 = sand.u32 %s221, 7
    %s381 = smul.u32 %s379, 48
    %s382 = sadd.s32 %s380, %s381
    %s383 = smul.addr %s382, 16
    %s384 = scalar_lea.hbm %s3, %s383
    %s385 = scalar_lea.vmem [#allocation2], 53
    %s387 = sshll.u32 %s385, 4
    %s388 = int_to_ptr.vmem [resolvable:$true] %s387
    %390 = dma.hbm_to_vmem [thread:$0]  %s384, 96, %s388, [#allocation3], 128, 128, 1
    %s391 = sshrl.u32 %s222, 3
    %s392 = sand.u32 %s222, 7
    %s393 = smul.u32 %s391, 48
    %s394 = sadd.s32 %s392, %s393
    %s395 = smul.addr %s394, 16
    %s396 = scalar_lea.hbm %s3, %s395
    %s397 = scalar_lea.vmem [#allocation2], 54
    %s399 = sshll.u32 %s397, 4
    %s400 = int_to_ptr.vmem [resolvable:$true] %s399
    %402 = dma.hbm_to_vmem [thread:$0]  %s396, 96, %s400, [#allocation3], 128, 128, 1
    %s403 = sshrl.u32 %s223, 3
    %s404 = sand.u32 %s223, 7
    %s405 = smul.u32 %s403, 48
    %s406 = sadd.s32 %s404, %s405
    %s407 = smul.addr %s406, 16
    %s408 = scalar_lea.hbm %s3, %s407
    %s409 = scalar_lea.vmem [#allocation2], 55
    %s411 = sshll.u32 %s409, 4
    %s412 = int_to_ptr.vmem [resolvable:$true] %s411
    %414 = dma.hbm_to_vmem [thread:$0]  %s408, 96, %s412, [#allocation3], 128, 128, 1
    %v415 = vld [vmem:[#allocation8] sm:$0x3]
    %v416 = vpack.c.bf16 %v415, %v415
    %v417 = vld [vmem:[#allocation9] sm:$0xff]
    %v418 = vld [vmem:[#allocation9 + $0x8] sm:$0xff]
    %v419 = vld [vmem:[#allocation9 + $0x10] sm:$0xff]
    %v420 = vld [vmem:[#allocation9 + $0x18] sm:$0xff]
    %v421 = vld [vmem:[#allocation9 + $0x20] sm:$0xff]
    %v422 = vld [vmem:[#allocation9 + $0x28] sm:$0xff]
    %v423 = vld [vmem:[#allocation9 + $0x30] sm:$0xff]
    %v424 = vld [vmem:[#allocation9 + $0x38] sm:$0xff]
    %v425 = vld [vmem:[#allocation11] sm:$0x3]
    %v427 = vlaneseq
    %v428 = vshrl.u32 %v427, 7
    %v429 = vsub.s32 0, %v428
    %v430 = vrot.slane %v425, %v429
    %v431 = vlaneseq
    %v432 = vshrl.u32 %v431, 7
    %v433 = vsub.s32 1, %v432
    %v434 = vrot.slane %v425, %v433
    %v445 = vunpack.c.l.b16 %v417
    %v446 = vunpack.c.h.b16 %v417
    %v447 = vunpack.c.l.b16 %v418
    %v448 = vunpack.c.h.b16 %v418
    %v449 = vunpack.c.l.b16 %v419
    %v450 = vunpack.c.h.b16 %v419
    %v451 = vunpack.c.l.b16 %v420
    %v452 = vunpack.c.h.b16 %v420
    %v453 = vunpack.c.l.b16 %v421
    %v454 = vunpack.c.h.b16 %v421
    %v455 = vunpack.c.l.b16 %v422
    %v456 = vunpack.c.h.b16 %v422
    %v457 = vunpack.c.l.b16 %v423
    %v458 = vunpack.c.h.b16 %v423
    %v459 = vunpack.c.l.b16 %v424
    %v460 = vunpack.c.h.b16 %v424
    %v461 = vpack.c.b16 %v447, %v445
    %v462 = vpack.c.b16 %v448, %v446
    %v463 = vpack.c.b16 %v451, %v449
    %v464 = vpack.c.b16 %v452, %v450
    %v465 = vpack.c.b16 %v455, %v453
    %v466 = vpack.c.b16 %v456, %v454
    %v467 = vpack.c.b16 %v459, %v457
    %v468 = vpack.c.b16 %v460, %v458
    %vm477 = vcmask 523264
    %v479 = vsel %vm477, %v416, 0
    %481 = vmatprep.subr.bf16.mxu0 0
    %482 = vmatpush1.bf16.msra.mxu0 0
    %483 = vmatprep.subr.bf16.mxu0 0
    %484 = vmatpush1.bf16.msra.mxu0 0
    %485 = vmatprep.subr.bf16.mxu0 0
    %486 = vmatpush1.bf16.msra.mxu0 0
    %487 = vmatprep.subr.bf16.mxu0 0
    %488 = vmatpush1.bf16.msra.mxu0 0
    %489 = vmatprep.subr.bf16.mxu0 %v468
    %490 = vmatpush1.bf16.msra.mxu0 %v467
    %491 = vmatprep.subr.bf16.mxu0 %v466
    %492 = vmatpush1.bf16.msra.mxu0 %v465
    %493 = vmatprep.subr.bf16.mxu0 %v464
    %494 = vmatpush1.bf16.msra.mxu0 %v463
    %495 = vmatprep.subr.bf16.mxu0 %v462
    %496 = vmatpush1.bf16.msra.mxu0 %v461
    %497 = vmatprep.subr.bf16.mxu0 0
    %498 = vmatpush2.bf16.msra.mxu0 0
    %499 = vmatprep.subr.bf16.mxu0 0
    %500 = vmatpush2.bf16.msra.mxu0 0
    %501 = vmatprep.subr.bf16.mxu0 0
    %502 = vmatpush2.bf16.msra.mxu0 0
    %503 = vmatprep.subr.bf16.mxu0 0
    %504 = vmatpush2.bf16.msra.mxu0 0
    %505 = vmatprep.subr.bf16.mxu0 0
    %506 = vmatpush2.bf16.msra.mxu0 0
    %507 = vmatprep.subr.bf16.mxu0 0
    %508 = vmatpush2.bf16.msra.mxu0 0
    %509 = vmatprep.subr.bf16.mxu0 0
    %510 = vmatpush2.bf16.msra.mxu0 0
    %511 = vmatprep.subr.bf16.mxu0 0
    %512 = vmatpush2.bf16.msra.mxu0 0
    %513 = vmatprep.mubr.bf16.mxu0 0
    %514 = vmatmul.mubr.bf16.gmra.mxu0 %v479
    %v515 = vpop.f32.mrf.mxu0
    %v516 = vadd.f32 %v430, %v515
    %v517 = vpop.f32.mrf.mxu0
    %v518 = vadd.f32 %v434, %v517
    %v519 = vpop.f32.mrf.mxu0
    %v520 = vpop.f32.mrf.mxu0
    %521 = vdwg.mxu0
    %v522 = vmax.f32 %v516, 0.0
    %v523 = vmax.f32 %v518, 0.0
    %v524 = vld [vmem:[#allocation12] sm:$0x3]
    %v525 = vld [vmem:[#allocation14] sm:$0x3]
    %vm526 = vcmask 1041408
    %v527 = vsel %vm526, %v522, 0.0
    %v528 = vsel %vm526, %v523, 0.0
    %v529 = vadd.f32 %v527, %v528
    %530 = vadd.xlane.f32.xlu0 %v529
    %v531 = vpop.xlane.xlu0 %530
    %v532 = vrcp.pop 256.0
    %v533 = vmul.f32 %v531, %v532
    %v534 = vsub.f32 %v522, %v533
    %v535 = vsub.f32 %v523, %v533
    %v536 = vmul.f32 %v534, %v534
    %v537 = vmul.f32 %v535, %v535
    %v538 = vsel %vm526, %v536, 0.0
    %v539 = vsel %vm526, %v537, 0.0
    %v540 = vadd.f32 %v538, %v539
    %541 = vadd.xlane.f32.xlu0 %v540
    %v542 = vpop.xlane.xlu0 %541
    %v543 = vmul.f32 %v542, %v532
    %v544 = vadd.f32 %v543, 1e-05
    %v545 = vrsqrt.pop %v544
    %v546 = vmul.f32 %v534, %v545
    %v547 = vmul.f32 %v535, %v545
    %v549 = vlaneseq
    %v550 = vshrl.u32 %v549, 7
    %v551 = vsub.s32 0, %v550
    %v552 = vrot.slane %v524, %v551
    %v553 = vlaneseq
    %v554 = vshrl.u32 %v553, 7
    %v555 = vsub.s32 1, %v554
    %v556 = vrot.slane %v524, %v555
    %v559 = vmul.f32 %v546, %v552
    %v560 = vmul.f32 %v547, %v556
    %v562 = vlaneseq
    %v563 = vshrl.u32 %v562, 7
    %v564 = vsub.s32 0, %v563
    %v565 = vrot.slane %v525, %v564
    %v566 = vlaneseq
    %v567 = vshrl.u32 %v566, 7
    %v568 = vsub.s32 1, %v567
    %v569 = vrot.slane %v525, %v568
    %v572 = vadd.f32 %v559, %v565
    %v573 = vadd.f32 %v560, %v569
    %v574 = vpack.c.bf16 %v572, %v572
    %v575 = vpack.c.bf16 %v573, %v573
    %v576 = vld [vmem:[#allocation15] sm:$0xff]
    %v577 = vld [vmem:[#allocation15 + $0x8] sm:$0xff]
    %v578 = vld [vmem:[#allocation15 + $0x10] sm:$0xff]
    %v579 = vld [vmem:[#allocation15 + $0x18] sm:$0xff]
    %v580 = vld [vmem:[#allocation15 + $0x20] sm:$0xff]
    %v581 = vld [vmem:[#allocation15 + $0x28] sm:$0xff]
    %v582 = vld [vmem:[#allocation15 + $0x30] sm:$0xff]
    %v583 = vld [vmem:[#allocation15 + $0x38] sm:$0xff]
    %v584 = vld [vmem:[#allocation15 + $0x40] sm:$0xff]
    %v585 = vld [vmem:[#allocation15 + $0x48] sm:$0xff]
    %v586 = vld [vmem:[#allocation15 + $0x50] sm:$0xff]
    %v587 = vld [vmem:[#allocation15 + $0x58] sm:$0xff]
    %v588 = vld [vmem:[#allocation15 + $0x60] sm:$0xff]
    %v589 = vld [vmem:[#allocation15 + $0x68] sm:$0xff]
    %v590 = vld [vmem:[#allocation15 + $0x70] sm:$0xff]
    %v591 = vld [vmem:[#allocation15 + $0x78] sm:$0xff]
    %v592 = vld [vmem:[#allocation15 + $0x80] sm:$0xff]
    %v593 = vld [vmem:[#allocation15 + $0x88] sm:$0xff]
    %v594 = vld [vmem:[#allocation15 + $0x90] sm:$0xff]
    %v595 = vld [vmem:[#allocation15 + $0x98] sm:$0xff]
    %v596 = vld [vmem:[#allocation15 + $0xa0] sm:$0xff]
    %v597 = vld [vmem:[#allocation15 + $0xa8] sm:$0xff]
    %v598 = vld [vmem:[#allocation15 + $0xb0] sm:$0xff]
    %v599 = vld [vmem:[#allocation15 + $0xb8] sm:$0xff]
    %v600 = vld [vmem:[#allocation15 + $0xc0] sm:$0xff]
    %v601 = vld [vmem:[#allocation15 + $0xc8] sm:$0xff]
    %v602 = vld [vmem:[#allocation15 + $0xd0] sm:$0xff]
    %v603 = vld [vmem:[#allocation15 + $0xd8] sm:$0xff]
    %v604 = vld [vmem:[#allocation15 + $0xe0] sm:$0xff]
    %v605 = vld [vmem:[#allocation15 + $0xe8] sm:$0xff]
    %v606 = vld [vmem:[#allocation15 + $0xf0] sm:$0xff]
    %v607 = vld [vmem:[#allocation15 + $0xf8] sm:$0xff]
    %v608 = vld [vmem:[#allocation15 + $0x100] sm:$0xff]
    %v609 = vld [vmem:[#allocation15 + $0x108] sm:$0xff]
    %v610 = vld [vmem:[#allocation15 + $0x110] sm:$0xff]
    %v611 = vld [vmem:[#allocation15 + $0x118] sm:$0xff]
    %v612 = vld [vmem:[#allocation15 + $0x120] sm:$0xff]
    %v613 = vld [vmem:[#allocation15 + $0x128] sm:$0xff]
    %v614 = vld [vmem:[#allocation15 + $0x130] sm:$0xff]
    %v615 = vld [vmem:[#allocation15 + $0x138] sm:$0xff]
    %v616 = vld [vmem:[#allocation15 + $0x140] sm:$0xff]
    %v617 = vld [vmem:[#allocation15 + $0x148] sm:$0xff]
    %v618 = vld [vmem:[#allocation15 + $0x150] sm:$0xff]
    %v619 = vld [vmem:[#allocation15 + $0x158] sm:$0xff]
    %v620 = vld [vmem:[#allocation15 + $0x160] sm:$0xff]
    %v621 = vld [vmem:[#allocation15 + $0x168] sm:$0xff]
    %v622 = vld [vmem:[#allocation15 + $0x170] sm:$0xff]
    %v623 = vld [vmem:[#allocation15 + $0x178] sm:$0xff]
    %v624 = vld [vmem:[#allocation15 + $0x180] sm:$0xff]
    %v625 = vld [vmem:[#allocation15 + $0x188] sm:$0xff]
    %v626 = vld [vmem:[#allocation15 + $0x190] sm:$0xff]
    %v627 = vld [vmem:[#allocation15 + $0x198] sm:$0xff]
    %v628 = vld [vmem:[#allocation15 + $0x1a0] sm:$0xff]
    %v629 = vld [vmem:[#allocation15 + $0x1a8] sm:$0xff]
    %v630 = vld [vmem:[#allocation15 + $0x1b0] sm:$0xff]
    %v631 = vld [vmem:[#allocation15 + $0x1b8] sm:$0xff]
    %v632 = vld [vmem:[#allocation15 + $0x1c0] sm:$0xff]
    %v633 = vld [vmem:[#allocation15 + $0x1c8] sm:$0xff]
    %v634 = vld [vmem:[#allocation15 + $0x1d0] sm:$0xff]
    %v635 = vld [vmem:[#allocation15 + $0x1d8] sm:$0xff]
    %v636 = vld [vmem:[#allocation15 + $0x1e0] sm:$0xff]
    %v637 = vld [vmem:[#allocation15 + $0x1e8] sm:$0xff]
    %v638 = vld [vmem:[#allocation15 + $0x1f0] sm:$0xff]
    %v639 = vld [vmem:[#allocation15 + $0x1f8] sm:$0xff]
    %v704 = vunpack.c.l.b16 %v576
    %v705 = vunpack.c.h.b16 %v576
    %v706 = vunpack.c.l.b16 %v577
    %v707 = vunpack.c.h.b16 %v577
    %v708 = vunpack.c.l.b16 %v578
    %v709 = vunpack.c.h.b16 %v578
    %v710 = vunpack.c.l.b16 %v579
    %v711 = vunpack.c.h.b16 %v579
    %v712 = vunpack.c.l.b16 %v580
    %v713 = vunpack.c.h.b16 %v580
    %v714 = vunpack.c.l.b16 %v581
    %v715 = vunpack.c.h.b16 %v581
    %v716 = vunpack.c.l.b16 %v582
    %v717 = vunpack.c.h.b16 %v582
    %v718 = vunpack.c.l.b16 %v583
    %v719 = vunpack.c.h.b16 %v583
    %v720 = vunpack.c.l.b16 %v584
    %v721 = vunpack.c.h.b16 %v584
    %v722 = vunpack.c.l.b16 %v585
    %v723 = vunpack.c.h.b16 %v585
    %v724 = vunpack.c.l.b16 %v586
    %v725 = vunpack.c.h.b16 %v586
    %v726 = vunpack.c.l.b16 %v587
    %v727 = vunpack.c.h.b16 %v587
    %v728 = vunpack.c.l.b16 %v588
    %v729 = vunpack.c.h.b16 %v588
    %v730 = vunpack.c.l.b16 %v589
    %v731 = vunpack.c.h.b16 %v589
    %v732 = vunpack.c.l.b16 %v590
    %v733 = vunpack.c.h.b16 %v590
    %v734 = vunpack.c.l.b16 %v591
    %v735 = vunpack.c.h.b16 %v591
    %v736 = vunpack.c.l.b16 %v592
    %v737 = vunpack.c.h.b16 %v592
    %v738 = vunpack.c.l.b16 %v593
    %v739 = vunpack.c.h.b16 %v593
    %v740 = vunpack.c.l.b16 %v594
    %v741 = vunpack.c.h.b16 %v594
    %v742 = vunpack.c.l.b16 %v595
    %v743 = vunpack.c.h.b16 %v595
    %v744 = vunpack.c.l.b16 %v596
    %v745 = vunpack.c.h.b16 %v596
    %v746 = vunpack.c.l.b16 %v597
    %v747 = vunpack.c.h.b16 %v597
    %v748 = vunpack.c.l.b16 %v598
    %v749 = vunpack.c.h.b16 %v598
    %v750 = vunpack.c.l.b16 %v599
    %v751 = vunpack.c.h.b16 %v599
    %v752 = vunpack.c.l.b16 %v600
    %v753 = vunpack.c.h.b16 %v600
    %v754 = vunpack.c.l.b16 %v601
    %v755 = vunpack.c.h.b16 %v601
    %v756 = vunpack.c.l.b16 %v602
    %v757 = vunpack.c.h.b16 %v602
    %v758 = vunpack.c.l.b16 %v603
    %v759 = vunpack.c.h.b16 %v603
    %v760 = vunpack.c.l.b16 %v604
    %v761 = vunpack.c.h.b16 %v604
    %v762 = vunpack.c.l.b16 %v605
    %v763 = vunpack.c.h.b16 %v605
    %v764 = vunpack.c.l.b16 %v606
    %v765 = vunpack.c.h.b16 %v606
    %v766 = vunpack.c.l.b16 %v607
    %v767 = vunpack.c.h.b16 %v607
    %v768 = vunpack.c.l.b16 %v608
    %v769 = vunpack.c.h.b16 %v608
    %v770 = vunpack.c.l.b16 %v609
    %v771 = vunpack.c.h.b16 %v609
    %v772 = vunpack.c.l.b16 %v610
    %v773 = vunpack.c.h.b16 %v610
    %v774 = vunpack.c.l.b16 %v611
    %v775 = vunpack.c.h.b16 %v611
    %v776 = vunpack.c.l.b16 %v612
    %v777 = vunpack.c.h.b16 %v612
    %v778 = vunpack.c.l.b16 %v613
    %v779 = vunpack.c.h.b16 %v613
    %v780 = vunpack.c.l.b16 %v614
    %v781 = vunpack.c.h.b16 %v614
    %v782 = vunpack.c.l.b16 %v615
    %v783 = vunpack.c.h.b16 %v615
    %v784 = vunpack.c.l.b16 %v616
    %v785 = vunpack.c.h.b16 %v616
    %v786 = vunpack.c.l.b16 %v617
    %v787 = vunpack.c.h.b16 %v617
    %v788 = vunpack.c.l.b16 %v618
    %v789 = vunpack.c.h.b16 %v618
    %v790 = vunpack.c.l.b16 %v619
    %v791 = vunpack.c.h.b16 %v619
    %v792 = vunpack.c.l.b16 %v620
    %v793 = vunpack.c.h.b16 %v620
    %v794 = vunpack.c.l.b16 %v621
    %v795 = vunpack.c.h.b16 %v621
    %v796 = vunpack.c.l.b16 %v622
    %v797 = vunpack.c.h.b16 %v622
    %v798 = vunpack.c.l.b16 %v623
    %v799 = vunpack.c.h.b16 %v623
    %v800 = vunpack.c.l.b16 %v624
    %v801 = vunpack.c.h.b16 %v624
    %v802 = vunpack.c.l.b16 %v625
    %v803 = vunpack.c.h.b16 %v625
    %v804 = vunpack.c.l.b16 %v626
    %v805 = vunpack.c.h.b16 %v626
    %v806 = vunpack.c.l.b16 %v627
    %v807 = vunpack.c.h.b16 %v627
    %v808 = vunpack.c.l.b16 %v628
    %v809 = vunpack.c.h.b16 %v628
    %v810 = vunpack.c.l.b16 %v629
    %v811 = vunpack.c.h.b16 %v629
    %v812 = vunpack.c.l.b16 %v630
    %v813 = vunpack.c.h.b16 %v630
    %v814 = vunpack.c.l.b16 %v631
    %v815 = vunpack.c.h.b16 %v631
    %v816 = vunpack.c.l.b16 %v632
    %v817 = vunpack.c.h.b16 %v632
    %v818 = vunpack.c.l.b16 %v633
    %v819 = vunpack.c.h.b16 %v633
    %v820 = vunpack.c.l.b16 %v634
    %v821 = vunpack.c.h.b16 %v634
    %v822 = vunpack.c.l.b16 %v635
    %v823 = vunpack.c.h.b16 %v635
    %v824 = vunpack.c.l.b16 %v636
    %v825 = vunpack.c.h.b16 %v636
    %v826 = vunpack.c.l.b16 %v637
    %v827 = vunpack.c.h.b16 %v637
    %v828 = vunpack.c.l.b16 %v638
    %v829 = vunpack.c.h.b16 %v638
    %v830 = vunpack.c.l.b16 %v639
    %v831 = vunpack.c.h.b16 %v639
    %v832 = vpack.c.b16 %v708, %v704
    %v833 = vpack.c.b16 %v709, %v705
    %v834 = vpack.c.b16 %v710, %v706
    %v835 = vpack.c.b16 %v711, %v707
    %v836 = vpack.c.b16 %v716, %v712
    %v837 = vpack.c.b16 %v717, %v713
    %v838 = vpack.c.b16 %v718, %v714
    %v839 = vpack.c.b16 %v719, %v715
    %v840 = vpack.c.b16 %v724, %v720
    %v841 = vpack.c.b16 %v725, %v721
    %v842 = vpack.c.b16 %v726, %v722
    %v843 = vpack.c.b16 %v727, %v723
    %v844 = vpack.c.b16 %v732, %v728
    %v845 = vpack.c.b16 %v733, %v729
    %v846 = vpack.c.b16 %v734, %v730
    %v847 = vpack.c.b16 %v735, %v731
    %v848 = vpack.c.b16 %v740, %v736
    %v849 = vpack.c.b16 %v741, %v737
    %v850 = vpack.c.b16 %v742, %v738
    %v851 = vpack.c.b16 %v743, %v739
    %v852 = vpack.c.b16 %v748, %v744
    %v853 = vpack.c.b16 %v749, %v745
    %v854 = vpack.c.b16 %v750, %v746
    %v855 = vpack.c.b16 %v751, %v747
    %v856 = vpack.c.b16 %v756, %v752
    %v857 = vpack.c.b16 %v757, %v753
    %v858 = vpack.c.b16 %v758, %v754
    %v859 = vpack.c.b16 %v759, %v755
    %v860 = vpack.c.b16 %v764, %v760
    %v861 = vpack.c.b16 %v765, %v761
    %v862 = vpack.c.b16 %v766, %v762
    %v863 = vpack.c.b16 %v767, %v763
    %v864 = vpack.c.b16 %v772, %v768
    %v865 = vpack.c.b16 %v773, %v769
    %v866 = vpack.c.b16 %v774, %v770
    %v867 = vpack.c.b16 %v775, %v771
    %v868 = vpack.c.b16 %v780, %v776
    %v869 = vpack.c.b16 %v781, %v777
    %v870 = vpack.c.b16 %v782, %v778
    %v871 = vpack.c.b16 %v783, %v779
    %v872 = vpack.c.b16 %v788, %v784
    %v873 = vpack.c.b16 %v789, %v785
    %v874 = vpack.c.b16 %v790, %v786
    %v875 = vpack.c.b16 %v791, %v787
    %v876 = vpack.c.b16 %v796, %v792
    %v877 = vpack.c.b16 %v797, %v793
    %v878 = vpack.c.b16 %v798, %v794
    %v879 = vpack.c.b16 %v799, %v795
    %v880 = vpack.c.b16 %v804, %v800
    %v881 = vpack.c.b16 %v805, %v801
    %v882 = vpack.c.b16 %v806, %v802
    %v883 = vpack.c.b16 %v807, %v803
    %v884 = vpack.c.b16 %v812, %v808
    %v885 = vpack.c.b16 %v813, %v809
    %v886 = vpack.c.b16 %v814, %v810
    %v887 = vpack.c.b16 %v815, %v811
    %v888 = vpack.c.b16 %v820, %v816
    %v889 = vpack.c.b16 %v821, %v817
    %v890 = vpack.c.b16 %v822, %v818
    %v891 = vpack.c.b16 %v823, %v819
    %v892 = vpack.c.b16 %v828, %v824
    %v893 = vpack.c.b16 %v829, %v825
    %v894 = vpack.c.b16 %v830, %v826
    %v895 = vpack.c.b16 %v831, %v827
    %960 = vmatprep.subr.bf16.mxu0 %v861
    %961 = vmatpush1.bf16.msra.mxu0 %v860
    %962 = vmatprep.subr.bf16.mxu0 %v857
    %963 = vmatpush1.bf16.msra.mxu0 %v856
    %964 = vmatprep.subr.bf16.mxu0 %v853
    %965 = vmatpush1.bf16.msra.mxu0 %v852
    %966 = vmatprep.subr.bf16.mxu0 %v849
    %967 = vmatpush1.bf16.msra.mxu0 %v848
    %968 = vmatprep.subr.bf16.mxu0 %v845
    %969 = vmatpush1.bf16.msra.mxu0 %v844
    %970 = vmatprep.subr.bf16.mxu0 %v841
    %971 = vmatpush1.bf16.msra.mxu0 %v840
    %972 = vmatprep.subr.bf16.mxu0 %v837
    %973 = vmatpush1.bf16.msra.mxu0 %v836
    %974 = vmatprep.subr.bf16.mxu0 %v833
    %975 = vmatpush1.bf16.msra.mxu0 %v832
    %976 = vmatprep.subr.bf16.mxu0 %v893
    %977 = vmatpush2.bf16.msra.mxu0 %v892
    %978 = vmatprep.subr.bf16.mxu0 %v889
    %979 = vmatpush2.bf16.msra.mxu0 %v888
    %980 = vmatprep.subr.bf16.mxu0 %v885
    %981 = vmatpush2.bf16.msra.mxu0 %v884
    %982 = vmatprep.subr.bf16.mxu0 %v881
    %983 = vmatpush2.bf16.msra.mxu0 %v880
    %984 = vmatprep.subr.bf16.mxu0 %v877
    %985 = vmatpush2.bf16.msra.mxu0 %v876
    %986 = vmatprep.subr.bf16.mxu0 %v873
    %987 = vmatpush2.bf16.msra.mxu0 %v872
    %988 = vmatprep.subr.bf16.mxu0 %v869
    %989 = vmatpush2.bf16.msra.mxu0 %v868
    %990 = vmatprep.subr.bf16.mxu0 %v865
    %991 = vmatpush2.bf16.msra.mxu0 %v864
    %992 = vmatprep.mubr.bf16.mxu0 %v575
    %993 = vmatmul.mubr.bf16.gmra.mxu0 %v574
    %v994 = vpop.f32.mrf.mxu0
    %v995 = vadd.f32 0.0, %v994
    %v996 = vpop.f32.mrf.mxu0
    %v997 = vadd.f32 0.0, %v996
    %v998 = vpop.f32.mrf.mxu0
    %v999 = vpop.f32.mrf.mxu0
    %1000 = vdwg.mxu0
    %1001 = vmatprep.subr.bf16.mxu0 %v863
    %1002 = vmatpush1.bf16.msra.mxu0 %v862
    %1003 = vmatprep.subr.bf16.mxu0 %v859
    %1004 = vmatpush1.bf16.msra.mxu0 %v858
    %1005 = vmatprep.subr.bf16.mxu0 %v855
    %1006 = vmatpush1.bf16.msra.mxu0 %v854
    %1007 = vmatprep.subr.bf16.mxu0 %v851
    %1008 = vmatpush1.bf16.msra.mxu0 %v850
    %1009 = vmatprep.subr.bf16.mxu0 %v847
    %1010 = vmatpush1.bf16.msra.mxu0 %v846
    %1011 = vmatprep.subr.bf16.mxu0 %v843
    %1012 = vmatpush1.bf16.msra.mxu0 %v842
    %1013 = vmatprep.subr.bf16.mxu0 %v839
    %1014 = vmatpush1.bf16.msra.mxu0 %v838
    %1015 = vmatprep.subr.bf16.mxu0 %v835
    %1016 = vmatpush1.bf16.msra.mxu0 %v834
    %1017 = vmatprep.subr.bf16.mxu0 %v895
    %1018 = vmatpush2.bf16.msra.mxu0 %v894
    %1019 = vmatprep.subr.bf16.mxu0 %v891
    %1020 = vmatpush2.bf16.msra.mxu0 %v890
    %1021 = vmatprep.subr.bf16.mxu0 %v887
    %1022 = vmatpush2.bf16.msra.mxu0 %v886
    %1023 = vmatprep.subr.bf16.mxu0 %v883
    %1024 = vmatpush2.bf16.msra.mxu0 %v882
    %1025 = vmatprep.subr.bf16.mxu0 %v879
    %1026 = vmatpush2.bf16.msra.mxu0 %v878
    %1027 = vmatprep.subr.bf16.mxu0 %v875
    %1028 = vmatpush2.bf16.msra.mxu0 %v874
    %1029 = vmatprep.subr.bf16.mxu0 %v871
    %1030 = vmatpush2.bf16.msra.mxu0 %v870
    %1031 = vmatprep.subr.bf16.mxu0 %v867
    %1032 = vmatpush2.bf16.msra.mxu0 %v866
    %1033 = vmatprep.mubr.bf16.mxu0 %v575
    %1034 = vmatmul.mubr.bf16.gmra.mxu0 %v574
    %v1035 = vpop.f32.mrf.mxu0
    %v1036 = vadd.f32 0.0, %v1035
    %v1037 = vpop.f32.mrf.mxu0
    %v1038 = vadd.f32 0.0, %v1037
    %v1039 = vpop.f32.mrf.mxu0
    %v1040 = vpop.f32.mrf.mxu0
    %1041 = vdwg.mxu0
    %v1042 = vlaneseq
    %v1043 = vshrl.u32 %v1042, 7
    %v1044 = vsub.s32 0, %v1043
    %v1045 = vrot.slane %v995, %v1044
    %v1046 = vlaneseq
    %v1047 = vshrl.u32 %v1046, 7
    %v1048 = vsub.s32 0, %v1047
    %v1049 = vrot.slane %v997, %v1048
    %v1050 = vlaneseq
    %v1051 = vshrl.u32 %v1050, 7
    %v1052 = vsub.s32 0, %v1051
    %v1053 = vrot.slane %v1036, %v1052
    %v1054 = vlaneseq
    %v1055 = vshrl.u32 %v1054, 7
    %v1056 = vsub.s32 0, %v1055
    %v1057 = vrot.slane %v1038, %v1056
    %v1058 = vlaneseq
    %v1059 = vshrl.u32 %v1058, 7
    %v1060 = vsub.s32 1, %v1059
    %v1061 = vrot.slane %v995, %v1060
    %v1062 = vlaneseq
    %v1063 = vshrl.u32 %v1062, 7
    %v1064 = vsub.s32 1, %v1063
    %v1065 = vrot.slane %v997, %v1064
    %v1066 = vlaneseq
    %v1067 = vshrl.u32 %v1066, 7
    %v1068 = vsub.s32 1, %v1067
    %v1069 = vrot.slane %v1036, %v1068
    %v1070 = vlaneseq
    %v1071 = vshrl.u32 %v1070, 7
    %v1072 = vsub.s32 1, %v1071
    %v1073 = vrot.slane %v1038, %v1072
    %1075 = dma.done [#allocation3], 96
    %1077 = dma.done [#allocation3], 96
    %1079 = dma.done [#allocation3], 96
    %1081 = dma.done [#allocation3], 96
    %1083 = dma.done [#allocation3], 96
    %1085 = dma.done [#allocation3], 96
    %1087 = dma.done [#allocation3], 96
    %1089 = dma.done [#allocation3], 96
    %1091 = dma.done [#allocation3], 96
    %1093 = dma.done [#allocation3], 96
    %1095 = dma.done [#allocation3], 96
    %1097 = dma.done [#allocation3], 96
    %1099 = dma.done [#allocation3], 96
    %1101 = dma.done [#allocation3], 96
    %1103 = dma.done [#allocation3], 96
    %1105 = dma.done [#allocation3], 96
    %v1106 = vld [vmem:[#allocation2] sm:$0xff]
    %v1107 = vld [vmem:[#allocation2 + $0x8] sm:$0xff]
    %v1108 = vld [vmem:[#allocation2 + $0x10] sm:$0xff]
    %v1109 = vld [vmem:[#allocation2 + $0x18] sm:$0xff]
    %v1110 = vld [vmem:[#allocation2 + $0x20] sm:$0xff]
    %v1111 = vld [vmem:[#allocation2 + $0x28] sm:$0xff]
    %v1112 = vld [vmem:[#allocation2 + $0x30] sm:$0xff]
    %v1113 = vld [vmem:[#allocation2 + $0x38] sm:$0xff]
    %v1114 = vld [vmem:[#allocation2 + $0x40] sm:$0xff]
    %v1115 = vld [vmem:[#allocation2 + $0x48] sm:$0xff]
    %v1116 = vld [vmem:[#allocation2 + $0x50] sm:$0xff]
    %v1117 = vld [vmem:[#allocation2 + $0x58] sm:$0xff]
    %v1118 = vld [vmem:[%s1] sm:$0xff]
    %v1119 = vld [vmem:[%s1 + $0x8] sm:$0xff]
    %1121 = vset.pattern.permute.xlu0 0
    %1122 = vperm.xlu0 %1121, %v1118
    %v1123 = vpop.permute.xlu0 %1122
    %1126 = vset.pattern.permute.xlu0 0
    %1127 = vperm.xlu0 %1126, %v1119
    %v1128 = vpop.permute.xlu0 %1127
    %v1130 = vmul.f32 %v1106, %v1123
    %v1131 = vmul.f32 %v1107, %v1123
    %v1132 = vmul.f32 %v1108, %v1123
    %v1133 = vmul.f32 %v1109, %v1123
    %v1134 = vmul.f32 %v1110, %v1123
    %v1135 = vmul.f32 %v1111, %v1123
    %v1136 = vmul.f32 %v1112, %v1128
    %v1137 = vmul.f32 %v1113, %v1128
    %v1138 = vmul.f32 %v1114, %v1128
    %v1139 = vmul.f32 %v1115, %v1128
    %v1140 = vmul.f32 %v1116, %v1128
    %v1141 = vmul.f32 %v1117, %v1128
    %v1142 = vpack.c.bf16 %v1136, %v1130
    %v1143 = vpack.c.bf16 %v1137, %v1131
    %v1144 = vpack.c.bf16 %v1138, %v1132
    %v1145 = vpack.c.bf16 %v1139, %v1133
    %v1146 = vpack.c.bf16 %v1140, %v1134
    %v1147 = vpack.c.bf16 %v1141, %v1135
    %v1148 = vld [vmem:[#allocation17] sm:$0xff]
    %v1149 = vld [vmem:[#allocation17 + $0x8] sm:$0xff]
    %v1150 = vld [vmem:[#allocation17 + $0x10] sm:$0xff]
    %v1151 = vld [vmem:[#allocation17 + $0x18] sm:$0xff]
    %v1152 = vld [vmem:[#allocation17 + $0x20] sm:$0xff]
    %v1153 = vld [vmem:[#allocation17 + $0x28] sm:$0xff]
    %v1154 = vld [vmem:[#allocation17 + $0x30] sm:$0xff]
    %v1155 = vld [vmem:[#allocation17 + $0x38] sm:$0xff]
    %v1156 = vld [vmem:[#allocation17 + $0x40] sm:$0xff]
    %v1157 = vld [vmem:[#allocation17 + $0x48] sm:$0xff]
    %v1158 = vld [vmem:[#allocation17 + $0x50] sm:$0xff]
    %v1159 = vld [vmem:[#allocation17 + $0x58] sm:$0xff]
    %v1160 = vld [vmem:[#allocation17 + $0x60] sm:$0xff]
    %v1161 = vld [vmem:[#allocation17 + $0x68] sm:$0xff]
    %v1162 = vld [vmem:[#allocation17 + $0x70] sm:$0xff]
    %v1163 = vld [vmem:[#allocation17 + $0x78] sm:$0xff]
    %v1164 = vld [vmem:[#allocation17 + $0x80] sm:$0xff]
    %v1165 = vld [vmem:[#allocation17 + $0x88] sm:$0xff]
    %v1166 = vld [vmem:[#allocation17 + $0x90] sm:$0xff]
    %v1167 = vld [vmem:[#allocation17 + $0x98] sm:$0xff]
    %v1168 = vld [vmem:[#allocation17 + $0xa0] sm:$0xff]
    %v1169 = vld [vmem:[#allocation17 + $0xa8] sm:$0xff]
    %v1170 = vld [vmem:[#allocation17 + $0xb0] sm:$0xff]
    %v1171 = vld [vmem:[#allocation17 + $0xb8] sm:$0xff]
    %v1172 = vld [vmem:[#allocation17 + $0xc0] sm:$0xff]
    %v1173 = vld [vmem:[#allocation17 + $0xc8] sm:$0xff]
    %v1174 = vld [vmem:[#allocation17 + $0xd0] sm:$0xff]
    %v1175 = vld [vmem:[#allocation17 + $0xd8] sm:$0xff]
    %v1176 = vld [vmem:[#allocation17 + $0xe0] sm:$0xff]
    %v1177 = vld [vmem:[#allocation17 + $0xe8] sm:$0xff]
    %v1178 = vld [vmem:[#allocation17 + $0xf0] sm:$0xff]
    %v1179 = vld [vmem:[#allocation17 + $0xf8] sm:$0xff]
    %v1180 = vld [vmem:[#allocation17 + $0x100] sm:$0xff]
    %v1181 = vld [vmem:[#allocation17 + $0x108] sm:$0xff]
    %v1182 = vld [vmem:[#allocation17 + $0x110] sm:$0xff]
    %v1183 = vld [vmem:[#allocation17 + $0x118] sm:$0xff]
    %v1184 = vld [vmem:[#allocation17 + $0x120] sm:$0xff]
    %v1185 = vld [vmem:[#allocation17 + $0x128] sm:$0xff]
    %v1186 = vld [vmem:[#allocation17 + $0x130] sm:$0xff]
    %v1187 = vld [vmem:[#allocation17 + $0x138] sm:$0xff]
    %v1188 = vld [vmem:[#allocation17 + $0x140] sm:$0xff]
    %v1189 = vld [vmem:[#allocation17 + $0x148] sm:$0xff]
    %v1190 = vld [vmem:[#allocation17 + $0x150] sm:$0xff]
    %v1191 = vld [vmem:[#allocation17 + $0x158] sm:$0xff]
    %v1192 = vld [vmem:[#allocation17 + $0x160] sm:$0xff]
    %v1193 = vld [vmem:[#allocation17 + $0x168] sm:$0xff]
    %v1194 = vld [vmem:[#allocation17 + $0x170] sm:$0xff]
    %v1195 = vld [vmem:[#allocation17 + $0x178] sm:$0xff]
    %v1196 = vld [vmem:[#allocation17 + $0x180] sm:$0xff]
    %v1197 = vld [vmem:[#allocation17 + $0x188] sm:$0xff]
    %v1198 = vld [vmem:[#allocation17 + $0x190] sm:$0xff]
    %v1199 = vld [vmem:[#allocation17 + $0x198] sm:$0xff]
    %v1200 = vld [vmem:[#allocation17 + $0x1a0] sm:$0xff]
    %v1201 = vld [vmem:[#allocation17 + $0x1a8] sm:$0xff]
    %v1202 = vld [vmem:[#allocation17 + $0x1b0] sm:$0xff]
    %v1203 = vld [vmem:[#allocation17 + $0x1b8] sm:$0xff]
    %v1204 = vld [vmem:[#allocation17 + $0x1c0] sm:$0xff]
    %v1205 = vld [vmem:[#allocation17 + $0x1c8] sm:$0xff]
    %v1206 = vld [vmem:[#allocation17 + $0x1d0] sm:$0xff]
    %v1207 = vld [vmem:[#allocation17 + $0x1d8] sm:$0xff]
    %v1208 = vld [vmem:[#allocation17 + $0x1e0] sm:$0xff]
    %v1209 = vld [vmem:[#allocation17 + $0x1e8] sm:$0xff]
    %v1210 = vld [vmem:[#allocation17 + $0x1f0] sm:$0xff]
    %v1211 = vld [vmem:[#allocation17 + $0x1f8] sm:$0xff]
    %v1212 = vld [vmem:[#allocation17 + $0x200] sm:$0xff]
    %v1213 = vld [vmem:[#allocation17 + $0x208] sm:$0xff]
    %v1214 = vld [vmem:[#allocation17 + $0x210] sm:$0xff]
    %v1215 = vld [vmem:[#allocation17 + $0x218] sm:$0xff]
    %v1216 = vld [vmem:[#allocation17 + $0x220] sm:$0xff]
    %v1217 = vld [vmem:[#allocation17 + $0x228] sm:$0xff]
    %v1218 = vld [vmem:[#allocation17 + $0x230] sm:$0xff]
    %v1219 = vld [vmem:[#allocation17 + $0x238] sm:$0xff]
    %v1220 = vld [vmem:[#allocation17 + $0x240] sm:$0xff]
    %v1221 = vld [vmem:[#allocation17 + $0x248] sm:$0xff]
    %v1222 = vld [vmem:[#allocation17 + $0x250] sm:$0xff]
    %v1223 = vld [vmem:[#allocation17 + $0x258] sm:$0xff]
    %v1224 = vld [vmem:[#allocation17 + $0x260] sm:$0xff]
    %v1225 = vld [vmem:[#allocation17 + $0x268] sm:$0xff]
    %v1226 = vld [vmem:[#allocation17 + $0x270] sm:$0xff]
    %v1227 = vld [vmem:[#allocation17 + $0x278] sm:$0xff]
    %v1228 = vld [vmem:[#allocation17 + $0x280] sm:$0xff]
    %v1229 = vld [vmem:[#allocation17 + $0x288] sm:$0xff]
    %v1230 = vld [vmem:[#allocation17 + $0x290] sm:$0xff]
    %v1231 = vld [vmem:[#allocation17 + $0x298] sm:$0xff]
    %v1232 = vld [vmem:[#allocation17 + $0x2a0] sm:$0xff]
    %v1233 = vld [vmem:[#allocation17 + $0x2a8] sm:$0xff]
    %v1234 = vld [vmem:[#allocation17 + $0x2b0] sm:$0xff]
    %v1235 = vld [vmem:[#allocation17 + $0x2b8] sm:$0xff]
    %v1236 = vld [vmem:[#allocation17 + $0x2c0] sm:$0xff]
    %v1237 = vld [vmem:[#allocation17 + $0x2c8] sm:$0xff]
    %v1238 = vld [vmem:[#allocation17 + $0x2d0] sm:$0xff]
    %v1239 = vld [vmem:[#allocation17 + $0x2d8] sm:$0xff]
    %v1240 = vld [vmem:[#allocation17 + $0x2e0] sm:$0xff]
    %v1241 = vld [vmem:[#allocation17 + $0x2e8] sm:$0xff]
    %v1242 = vld [vmem:[#allocation17 + $0x2f0] sm:$0xff]
    %v1243 = vld [vmem:[#allocation17 + $0x2f8] sm:$0xff]
    %v1244 = vld [vmem:[#allocation17 + $0x300] sm:$0xff]
    %v1245 = vld [vmem:[#allocation17 + $0x308] sm:$0xff]
    %v1246 = vld [vmem:[#allocation17 + $0x310] sm:$0xff]
    %v1247 = vld [vmem:[#allocation17 + $0x318] sm:$0xff]
    %v1248 = vld [vmem:[#allocation17 + $0x320] sm:$0xff]
    %v1249 = vld [vmem:[#allocation17 + $0x328] sm:$0xff]
    %v1250 = vld [vmem:[#allocation17 + $0x330] sm:$0xff]
    %v1251 = vld [vmem:[#allocation17 + $0x338] sm:$0xff]
    %v1252 = vld [vmem:[#allocation17 + $0x340] sm:$0xff]
    %v1253 = vld [vmem:[#allocation17 + $0x348] sm:$0xff]
    %v1254 = vld [vmem:[#allocation17 + $0x350] sm:$0xff]
    %v1255 = vld [vmem:[#allocation17 + $0x358] sm:$0xff]
    %v1256 = vld [vmem:[#allocation17 + $0x360] sm:$0xff]
    %v1257 = vld [vmem:[#allocation17 + $0x368] sm:$0xff]
    %v1258 = vld [vmem:[#allocation17 + $0x370] sm:$0xff]
    %v1259 = vld [vmem:[#allocation17 + $0x378] sm:$0xff]
    %v1260 = vld [vmem:[#allocation17 + $0x380] sm:$0xff]
    %v1261 = vld [vmem:[#allocation17 + $0x388] sm:$0xff]
    %v1262 = vld [vmem:[#allocation17 + $0x390] sm:$0xff]
    %v1263 = vld [vmem:[#allocation17 + $0x398] sm:$0xff]
    %v1264 = vld [vmem:[#allocation17 + $0x3a0] sm:$0xff]
    %v1265 = vld [vmem:[#allocation17 + $0x3a8] sm:$0xff]
    %v1266 = vld [vmem:[#allocation17 + $0x3b0] sm:$0xff]
    %v1267 = vld [vmem:[#allocation17 + $0x3b8] sm:$0xff]
    %v1268 = vld [vmem:[#allocation17 + $0x3c0] sm:$0xff]
    %v1269 = vld [vmem:[#allocation17 + $0x3c8] sm:$0xff]
    %v1270 = vld [vmem:[#allocation17 + $0x3d0] sm:$0xff]
    %v1271 = vld [vmem:[#allocation17 + $0x3d8] sm:$0xff]
    %v1272 = vld [vmem:[#allocation17 + $0x3e0] sm:$0xff]
    %v1273 = vld [vmem:[#allocation17 + $0x3e8] sm:$0xff]
    %v1274 = vld [vmem:[#allocation17 + $0x3f0] sm:$0xff]
    %v1275 = vld [vmem:[#allocation17 + $0x3f8] sm:$0xff]
    %v1276 = vld [vmem:[#allocation17 + $0x400] sm:$0xff]
    %v1277 = vld [vmem:[#allocation17 + $0x408] sm:$0xff]
    %v1278 = vld [vmem:[#allocation17 + $0x410] sm:$0xff]
    %v1279 = vld [vmem:[#allocation17 + $0x418] sm:$0xff]
    %v1280 = vld [vmem:[#allocation17 + $0x420] sm:$0xff]
    %v1281 = vld [vmem:[#allocation17 + $0x428] sm:$0xff]
    %v1282 = vld [vmem:[#allocation17 + $0x430] sm:$0xff]
    %v1283 = vld [vmem:[#allocation17 + $0x438] sm:$0xff]
    %v1284 = vld [vmem:[#allocation17 + $0x440] sm:$0xff]
    %v1285 = vld [vmem:[#allocation17 + $0x448] sm:$0xff]
    %v1286 = vld [vmem:[#allocation17 + $0x450] sm:$0xff]
    %v1287 = vld [vmem:[#allocation17 + $0x458] sm:$0xff]
    %v1288 = vld [vmem:[#allocation17 + $0x460] sm:$0xff]
    %v1289 = vld [vmem:[#allocation17 + $0x468] sm:$0xff]
    %v1290 = vld [vmem:[#allocation17 + $0x470] sm:$0xff]
    %v1291 = vld [vmem:[#allocation17 + $0x478] sm:$0xff]
    %v1292 = vld [vmem:[#allocation17 + $0x480] sm:$0xff]
    %v1293 = vld [vmem:[#allocation17 + $0x488] sm:$0xff]
    %v1294 = vld [vmem:[#allocation17 + $0x490] sm:$0xff]
    %v1295 = vld [vmem:[#allocation17 + $0x498] sm:$0xff]
    %v1296 = vld [vmem:[#allocation17 + $0x4a0] sm:$0xff]
    %v1297 = vld [vmem:[#allocation17 + $0x4a8] sm:$0xff]
    %v1298 = vld [vmem:[#allocation17 + $0x4b0] sm:$0xff]
    %v1299 = vld [vmem:[#allocation17 + $0x4b8] sm:$0xff]
    %v1300 = vld [vmem:[#allocation17 + $0x4c0] sm:$0xff]
    %v1301 = vld [vmem:[#allocation17 + $0x4c8] sm:$0xff]
    %v1302 = vld [vmem:[#allocation17 + $0x4d0] sm:$0xff]
    %v1303 = vld [vmem:[#allocation17 + $0x4d8] sm:$0xff]
    %v1304 = vld [vmem:[#allocation17 + $0x4e0] sm:$0xff]
    %v1305 = vld [vmem:[#allocation17 + $0x4e8] sm:$0xff]
    %v1306 = vld [vmem:[#allocation17 + $0x4f0] sm:$0xff]
    %v1307 = vld [vmem:[#allocation17 + $0x4f8] sm:$0xff]
    %v1308 = vld [vmem:[#allocation17 + $0x500] sm:$0xff]
    %v1309 = vld [vmem:[#allocation17 + $0x508] sm:$0xff]
    %v1310 = vld [vmem:[#allocation17 + $0x510] sm:$0xff]
    %v1311 = vld [vmem:[#allocation17 + $0x518] sm:$0xff]
    %v1312 = vld [vmem:[#allocation17 + $0x520] sm:$0xff]
    %v1313 = vld [vmem:[#allocation17 + $0x528] sm:$0xff]
    %v1314 = vld [vmem:[#allocation17 + $0x530] sm:$0xff]
    %v1315 = vld [vmem:[#allocation17 + $0x538] sm:$0xff]
    %v1316 = vld [vmem:[#allocation17 + $0x540] sm:$0xff]
    %v1317 = vld [vmem:[#allocation17 + $0x548] sm:$0xff]
    %v1318 = vld [vmem:[#allocation17 + $0x550] sm:$0xff]
    %v1319 = vld [vmem:[#allocation17 + $0x558] sm:$0xff]
    %v1320 = vld [vmem:[#allocation17 + $0x560] sm:$0xff]
    %v1321 = vld [vmem:[#allocation17 + $0x568] sm:$0xff]
    %v1322 = vld [vmem:[#allocation17 + $0x570] sm:$0xff]
    %v1323 = vld [vmem:[#allocation17 + $0x578] sm:$0xff]
    %v1324 = vld [vmem:[#allocation17 + $0x580] sm:$0xff]
    %v1325 = vld [vmem:[#allocation17 + $0x588] sm:$0xff]
    %v1326 = vld [vmem:[#allocation17 + $0x590] sm:$0xff]
    %v1327 = vld [vmem:[#allocation17 + $0x598] sm:$0xff]
    %v1328 = vld [vmem:[#allocation17 + $0x5a0] sm:$0xff]
    %v1329 = vld [vmem:[#allocation17 + $0x5a8] sm:$0xff]
    %v1330 = vld [vmem:[#allocation17 + $0x5b0] sm:$0xff]
    %v1331 = vld [vmem:[#allocation17 + $0x5b8] sm:$0xff]
    %v1332 = vld [vmem:[#allocation17 + $0x5c0] sm:$0xff]
    %v1333 = vld [vmem:[#allocation17 + $0x5c8] sm:$0xff]
    %v1334 = vld [vmem:[#allocation17 + $0x5d0] sm:$0xff]
    %v1335 = vld [vmem:[#allocation17 + $0x5d8] sm:$0xff]
    %v1336 = vld [vmem:[#allocation17 + $0x5e0] sm:$0xff]
    %v1337 = vld [vmem:[#allocation17 + $0x5e8] sm:$0xff]
    %v1338 = vld [vmem:[#allocation17 + $0x5f0] sm:$0xff]
    %v1339 = vld [vmem:[#allocation17 + $0x5f8] sm:$0xff]
    %v1532 = vunpack.c.l.b16 %v1148
    %v1533 = vunpack.c.h.b16 %v1148
    %v1534 = vunpack.c.l.b16 %v1149
    %v1535 = vunpack.c.h.b16 %v1149
    %v1536 = vunpack.c.l.b16 %v1150
    %v1537 = vunpack.c.h.b16 %v1150
    %v1538 = vunpack.c.l.b16 %v1151
    %v1539 = vunpack.c.h.b16 %v1151
    %v1540 = vunpack.c.l.b16 %v1152
    %v1541 = vunpack.c.h.b16 %v1152
    %v1542 = vunpack.c.l.b16 %v1153
    %v1543 = vunpack.c.h.b16 %v1153
    %v1544 = vunpack.c.l.b16 %v1154
    %v1545 = vunpack.c.h.b16 %v1154
    %v1546 = vunpack.c.l.b16 %v1155
    %v1547 = vunpack.c.h.b16 %v1155
    %v1548 = vunpack.c.l.b16 %v1156
    %v1549 = vunpack.c.h.b16 %v1156
    %v1550 = vunpack.c.l.b16 %v1157
    %v1551 = vunpack.c.h.b16 %v1157
    %v1552 = vunpack.c.l.b16 %v1158
    %v1553 = vunpack.c.h.b16 %v1158
    %v1554 = vunpack.c.l.b16 %v1159
    %v1555 = vunpack.c.h.b16 %v1159
    %v1556 = vunpack.c.l.b16 %v1160
    %v1557 = vunpack.c.h.b16 %v1160
    %v1558 = vunpack.c.l.b16 %v1161
    %v1559 = vunpack.c.h.b16 %v1161
    %v1560 = vunpack.c.l.b16 %v1162
    %v1561 = vunpack.c.h.b16 %v1162
    %v1562 = vunpack.c.l.b16 %v1163
    %v1563 = vunpack.c.h.b16 %v1163
    %v1564 = vunpack.c.l.b16 %v1164
    %v1565 = vunpack.c.h.b16 %v1164
    %v1566 = vunpack.c.l.b16 %v1165
    %v1567 = vunpack.c.h.b16 %v1165
    %v1568 = vunpack.c.l.b16 %v1166
    %v1569 = vunpack.c.h.b16 %v1166
    %v1570 = vunpack.c.l.b16 %v1167
    %v1571 = vunpack.c.h.b16 %v1167
    %v1572 = vunpack.c.l.b16 %v1168
    %v1573 = vunpack.c.h.b16 %v1168
    %v1574 = vunpack.c.l.b16 %v1169
    %v1575 = vunpack.c.h.b16 %v1169
    %v1576 = vunpack.c.l.b16 %v1170
    %v1577 = vunpack.c.h.b16 %v1170
    %v1578 = vunpack.c.l.b16 %v1171
    %v1579 = vunpack.c.h.b16 %v1171
    %v1580 = vunpack.c.l.b16 %v1172
    %v1581 = vunpack.c.h.b16 %v1172
    %v1582 = vunpack.c.l.b16 %v1173
    %v1583 = vunpack.c.h.b16 %v1173
    %v1584 = vunpack.c.l.b16 %v1174
    %v1585 = vunpack.c.h.b16 %v1174
    %v1586 = vunpack.c.l.b16 %v1175
    %v1587 = vunpack.c.h.b16 %v1175
    %v1588 = vunpack.c.l.b16 %v1176
    %v1589 = vunpack.c.h.b16 %v1176
    %v1590 = vunpack.c.l.b16 %v1177
    %v1591 = vunpack.c.h.b16 %v1177
    %v1592 = vunpack.c.l.b16 %v1178
    %v1593 = vunpack.c.h.b16 %v1178
    %v1594 = vunpack.c.l.b16 %v1179
    %v1595 = vunpack.c.h.b16 %v1179
    %v1596 = vunpack.c.l.b16 %v1180
    %v1597 = vunpack.c.h.b16 %v1180
    %v1598 = vunpack.c.l.b16 %v1181
    %v1599 = vunpack.c.h.b16 %v1181
    %v1600 = vunpack.c.l.b16 %v1182
    %v1601 = vunpack.c.h.b16 %v1182
    %v1602 = vunpack.c.l.b16 %v1183
    %v1603 = vunpack.c.h.b16 %v1183
    %v1604 = vunpack.c.l.b16 %v1184
    %v1605 = vunpack.c.h.b16 %v1184
    %v1606 = vunpack.c.l.b16 %v1185
    %v1607 = vunpack.c.h.b16 %v1185
    %v1608 = vunpack.c.l.b16 %v1186
    %v1609 = vunpack.c.h.b16 %v1186
    %v1610 = vunpack.c.l.b16 %v1187
    %v1611 = vunpack.c.h.b16 %v1187
    %v1612 = vunpack.c.l.b16 %v1188
    %v1613 = vunpack.c.h.b16 %v1188
    %v1614 = vunpack.c.l.b16 %v1189
    %v1615 = vunpack.c.h.b16 %v1189
    %v1616 = vunpack.c.l.b16 %v1190
    %v1617 = vunpack.c.h.b16 %v1190
    %v1618 = vunpack.c.l.b16 %v1191
    %v1619 = vunpack.c.h.b16 %v1191
    %v1620 = vunpack.c.l.b16 %v1192
    %v1621 = vunpack.c.h.b16 %v1192
    %v1622 = vunpack.c.l.b16 %v1193
    %v1623 = vunpack.c.h.b16 %v1193
    %v1624 = vunpack.c.l.b16 %v1194
    %v1625 = vunpack.c.h.b16 %v1194
    %v1626 = vunpack.c.l.b16 %v1195
    %v1627 = vunpack.c.h.b16 %v1195
    %v1628 = vunpack.c.l.b16 %v1196
    %v1629 = vunpack.c.h.b16 %v1196
    %v1630 = vunpack.c.l.b16 %v1197
    %v1631 = vunpack.c.h.b16 %v1197
    %v1632 = vunpack.c.l.b16 %v1198
    %v1633 = vunpack.c.h.b16 %v1198
    %v1634 = vunpack.c.l.b16 %v1199
    %v1635 = vunpack.c.h.b16 %v1199
    %v1636 = vunpack.c.l.b16 %v1200
    %v1637 = vunpack.c.h.b16 %v1200
    %v1638 = vunpack.c.l.b16 %v1201
    %v1639 = vunpack.c.h.b16 %v1201
    %v1640 = vunpack.c.l.b16 %v1202
    %v1641 = vunpack.c.h.b16 %v1202
    %v1642 = vunpack.c.l.b16 %v1203
    %v1643 = vunpack.c.h.b16 %v1203
    %v1644 = vunpack.c.l.b16 %v1204
    %v1645 = vunpack.c.h.b16 %v1204
    %v1646 = vunpack.c.l.b16 %v1205
    %v1647 = vunpack.c.h.b16 %v1205
    %v1648 = vunpack.c.l.b16 %v1206
    %v1649 = vunpack.c.h.b16 %v1206
    %v1650 = vunpack.c.l.b16 %v1207
    %v1651 = vunpack.c.h.b16 %v1207
    %v1652 = vunpack.c.l.b16 %v1208
    %v1653 = vunpack.c.h.b16 %v1208
    %v1654 = vunpack.c.l.b16 %v1209
    %v1655 = vunpack.c.h.b16 %v1209
    %v1656 = vunpack.c.l.b16 %v1210
    %v1657 = vunpack.c.h.b16 %v1210
    %v1658 = vunpack.c.l.b16 %v1211
    %v1659 = vunpack.c.h.b16 %v1211
    %v1660 = vunpack.c.l.b16 %v1212
    %v1661 = vunpack.c.h.b16 %v1212
    %v1662 = vunpack.c.l.b16 %v1213
    %v1663 = vunpack.c.h.b16 %v1213
    %v1664 = vunpack.c.l.b16 %v1214
    %v1665 = vunpack.c.h.b16 %v1214
    %v1666 = vunpack.c.l.b16 %v1215
    %v1667 = vunpack.c.h.b16 %v1215
    %v1668 = vunpack.c.l.b16 %v1216
    %v1669 = vunpack.c.h.b16 %v1216
    %v1670 = vunpack.c.l.b16 %v1217
    %v1671 = vunpack.c.h.b16 %v1217
    %v1672 = vunpack.c.l.b16 %v1218
    %v1673 = vunpack.c.h.b16 %v1218
    %v1674 = vunpack.c.l.b16 %v1219
    %v1675 = vunpack.c.h.b16 %v1219
    %v1676 = vunpack.c.l.b16 %v1220
    %v1677 = vunpack.c.h.b16 %v1220
    %v1678 = vunpack.c.l.b16 %v1221
    %v1679 = vunpack.c.h.b16 %v1221
    %v1680 = vunpack.c.l.b16 %v1222
    %v1681 = vunpack.c.h.b16 %v1222
    %v1682 = vunpack.c.l.b16 %v1223
    %v1683 = vunpack.c.h.b16 %v1223
    %v1684 = vunpack.c.l.b16 %v1224
    %v1685 = vunpack.c.h.b16 %v1224
    %v1686 = vunpack.c.l.b16 %v1225
    %v1687 = vunpack.c.h.b16 %v1225
    %v1688 = vunpack.c.l.b16 %v1226
    %v1689 = vunpack.c.h.b16 %v1226
    %v1690 = vunpack.c.l.b16 %v1227
    %v1691 = vunpack.c.h.b16 %v1227
    %v1692 = vunpack.c.l.b16 %v1228
    %v1693 = vunpack.c.h.b16 %v1228
    %v1694 = vunpack.c.l.b16 %v1229
    %v1695 = vunpack.c.h.b16 %v1229
    %v1696 = vunpack.c.l.b16 %v1230
    %v1697 = vunpack.c.h.b16 %v1230
    %v1698 = vunpack.c.l.b16 %v1231
    %v1699 = vunpack.c.h.b16 %v1231
    %v1700 = vunpack.c.l.b16 %v1232
    %v1701 = vunpack.c.h.b16 %v1232
    %v1702 = vunpack.c.l.b16 %v1233
    %v1703 = vunpack.c.h.b16 %v1233
    %v1704 = vunpack.c.l.b16 %v1234
    %v1705 = vunpack.c.h.b16 %v1234
    %v1706 = vunpack.c.l.b16 %v1235
    %v1707 = vunpack.c.h.b16 %v1235
    %v1708 = vunpack.c.l.b16 %v1236
    %v1709 = vunpack.c.h.b16 %v1236
    %v1710 = vunpack.c.l.b16 %v1237
    %v1711 = vunpack.c.h.b16 %v1237
    %v1712 = vunpack.c.l.b16 %v1238
    %v1713 = vunpack.c.h.b16 %v1238
    %v1714 = vunpack.c.l.b16 %v1239
    %v1715 = vunpack.c.h.b16 %v1239
    %v1716 = vunpack.c.l.b16 %v1240
    %v1717 = vunpack.c.h.b16 %v1240
    %v1718 = vunpack.c.l.b16 %v1241
    %v1719 = vunpack.c.h.b16 %v1241
    %v1720 = vunpack.c.l.b16 %v1242
    %v1721 = vunpack.c.h.b16 %v1242
    %v1722 = vunpack.c.l.b16 %v1243
    %v1723 = vunpack.c.h.b16 %v1243
    %v1724 = vunpack.c.l.b16 %v1244
    %v1725 = vunpack.c.h.b16 %v1244
    %v1726 = vunpack.c.l.b16 %v1245
    %v1727 = vunpack.c.h.b16 %v1245
    %v1728 = vunpack.c.l.b16 %v1246
    %v1729 = vunpack.c.h.b16 %v1246
    %v1730 = vunpack.c.l.b16 %v1247
    %v1731 = vunpack.c.h.b16 %v1247
    %v1732 = vunpack.c.l.b16 %v1248
    %v1733 = vunpack.c.h.b16 %v1248
    %v1734 = vunpack.c.l.b16 %v1249
    %v1735 = vunpack.c.h.b16 %v1249
    %v1736 = vunpack.c.l.b16 %v1250
    %v1737 = vunpack.c.h.b16 %v1250
    %v1738 = vunpack.c.l.b16 %v1251
    %v1739 = vunpack.c.h.b16 %v1251
    %v1740 = vunpack.c.l.b16 %v1252
    %v1741 = vunpack.c.h.b16 %v1252
    %v1742 = vunpack.c.l.b16 %v1253
    %v1743 = vunpack.c.h.b16 %v1253
    %v1744 = vunpack.c.l.b16 %v1254
    %v1745 = vunpack.c.h.b16 %v1254
    %v1746 = vunpack.c.l.b16 %v1255
    %v1747 = vunpack.c.h.b16 %v1255
    %v1748 = vunpack.c.l.b16 %v1256
    %v1749 = vunpack.c.h.b16 %v1256
    %v1750 = vunpack.c.l.b16 %v1257
    %v1751 = vunpack.c.h.b16 %v1257
    %v1752 = vunpack.c.l.b16 %v1258
    %v1753 = vunpack.c.h.b16 %v1258
    %v1754 = vunpack.c.l.b16 %v1259
    %v1755 = vunpack.c.h.b16 %v1259
    %v1756 = vunpack.c.l.b16 %v1260
    %v1757 = vunpack.c.h.b16 %v1260
    %v1758 = vunpack.c.l.b16 %v1261
    %v1759 = vunpack.c.h.b16 %v1261
    %v1760 = vunpack.c.l.b16 %v1262
    %v1761 = vunpack.c.h.b16 %v1262
    %v1762 = vunpack.c.l.b16 %v1263
    %v1763 = vunpack.c.h.b16 %v1263
    %v1764 = vunpack.c.l.b16 %v1264
    %v1765 = vunpack.c.h.b16 %v1264
    %v1766 = vunpack.c.l.b16 %v1265
    %v1767 = vunpack.c.h.b16 %v1265
    %v1768 = vunpack.c.l.b16 %v1266
    %v1769 = vunpack.c.h.b16 %v1266
    %v1770 = vunpack.c.l.b16 %v1267
    %v1771 = vunpack.c.h.b16 %v1267
    %v1772 = vunpack.c.l.b16 %v1268
    %v1773 = vunpack.c.h.b16 %v1268
    %v1774 = vunpack.c.l.b16 %v1269
    %v1775 = vunpack.c.h.b16 %v1269
    %v1776 = vunpack.c.l.b16 %v1270
    %v1777 = vunpack.c.h.b16 %v1270
    %v1778 = vunpack.c.l.b16 %v1271
    %v1779 = vunpack.c.h.b16 %v1271
    %v1780 = vunpack.c.l.b16 %v1272
    %v1781 = vunpack.c.h.b16 %v1272
    %v1782 = vunpack.c.l.b16 %v1273
    %v1783 = vunpack.c.h.b16 %v1273
    %v1784 = vunpack.c.l.b16 %v1274
    %v1785 = vunpack.c.h.b16 %v1274
    %v1786 = vunpack.c.l.b16 %v1275
    %v1787 = vunpack.c.h.b16 %v1275
    %v1788 = vunpack.c.l.b16 %v1276
    %v1789 = vunpack.c.h.b16 %v1276
    %v1790 = vunpack.c.l.b16 %v1277
    %v1791 = vunpack.c.h.b16 %v1277
    %v1792 = vunpack.c.l.b16 %v1278
    %v1793 = vunpack.c.h.b16 %v1278
    %v1794 = vunpack.c.l.b16 %v1279
    %v1795 = vunpack.c.h.b16 %v1279
    %v1796 = vunpack.c.l.b16 %v1280
    %v1797 = vunpack.c.h.b16 %v1280
    %v1798 = vunpack.c.l.b16 %v1281
    %v1799 = vunpack.c.h.b16 %v1281
    %v1800 = vunpack.c.l.b16 %v1282
    %v1801 = vunpack.c.h.b16 %v1282
    %v1802 = vunpack.c.l.b16 %v1283
    %v1803 = vunpack.c.h.b16 %v1283
    %v1804 = vunpack.c.l.b16 %v1284
    %v1805 = vunpack.c.h.b16 %v1284
    %v1806 = vunpack.c.l.b16 %v1285
    %v1807 = vunpack.c.h.b16 %v1285
    %v1808 = vunpack.c.l.b16 %v1286
    %v1809 = vunpack.c.h.b16 %v1286
    %v1810 = vunpack.c.l.b16 %v1287
    %v1811 = vunpack.c.h.b16 %v1287
    %v1812 = vunpack.c.l.b16 %v1288
    %v1813 = vunpack.c.h.b16 %v1288
    %v1814 = vunpack.c.l.b16 %v1289
    %v1815 = vunpack.c.h.b16 %v1289
    %v1816 = vunpack.c.l.b16 %v1290
    %v1817 = vunpack.c.h.b16 %v1290
    %v1818 = vunpack.c.l.b16 %v1291
    %v1819 = vunpack.c.h.b16 %v1291
    %v1820 = vunpack.c.l.b16 %v1292
    %v1821 = vunpack.c.h.b16 %v1292
    %v1822 = vunpack.c.l.b16 %v1293
    %v1823 = vunpack.c.h.b16 %v1293
    %v1824 = vunpack.c.l.b16 %v1294
    %v1825 = vunpack.c.h.b16 %v1294
    %v1826 = vunpack.c.l.b16 %v1295
    %v1827 = vunpack.c.h.b16 %v1295
    %v1828 = vunpack.c.l.b16 %v1296
    %v1829 = vunpack.c.h.b16 %v1296
    %v1830 = vunpack.c.l.b16 %v1297
    %v1831 = vunpack.c.h.b16 %v1297
    %v1832 = vunpack.c.l.b16 %v1298
    %v1833 = vunpack.c.h.b16 %v1298
    %v1834 = vunpack.c.l.b16 %v1299
    %v1835 = vunpack.c.h.b16 %v1299
    %v1836 = vunpack.c.l.b16 %v1300
    %v1837 = vunpack.c.h.b16 %v1300
    %v1838 = vunpack.c.l.b16 %v1301
    %v1839 = vunpack.c.h.b16 %v1301
    %v1840 = vunpack.c.l.b16 %v1302
    %v1841 = vunpack.c.h.b16 %v1302
    %v1842 = vunpack.c.l.b16 %v1303
    %v1843 = vunpack.c.h.b16 %v1303
    %v1844 = vunpack.c.l.b16 %v1304
    %v1845 = vunpack.c.h.b16 %v1304
    %v1846 = vunpack.c.l.b16 %v1305
    %v1847 = vunpack.c.h.b16 %v1305
    %v1848 = vunpack.c.l.b16 %v1306
    %v1849 = vunpack.c.h.b16 %v1306
    %v1850 = vunpack.c.l.b16 %v1307
    %v1851 = vunpack.c.h.b16 %v1307
    %v1852 = vunpack.c.l.b16 %v1308
    %v1853 = vunpack.c.h.b16 %v1308
    %v1854 = vunpack.c.l.b16 %v1309
    %v1855 = vunpack.c.h.b16 %v1309
    %v1856 = vunpack.c.l.b16 %v1310
    %v1857 = vunpack.c.h.b16 %v1310
    %v1858 = vunpack.c.l.b16 %v1311
    %v1859 = vunpack.c.h.b16 %v1311
    %v1860 = vunpack.c.l.b16 %v1312
    %v1861 = vunpack.c.h.b16 %v1312
    %v1862 = vunpack.c.l.b16 %v1313
    %v1863 = vunpack.c.h.b16 %v1313
    %v1864 = vunpack.c.l.b16 %v1314
    %v1865 = vunpack.c.h.b16 %v1314
    %v1866 = vunpack.c.l.b16 %v1315
    %v1867 = vunpack.c.h.b16 %v1315
    %v1868 = vunpack.c.l.b16 %v1316
    %v1869 = vunpack.c.h.b16 %v1316
    %v1870 = vunpack.c.l.b16 %v1317
    %v1871 = vunpack.c.h.b16 %v1317
    %v1872 = vunpack.c.l.b16 %v1318
    %v1873 = vunpack.c.h.b16 %v1318
    %v1874 = vunpack.c.l.b16 %v1319
    %v1875 = vunpack.c.h.b16 %v1319
    %v1876 = vunpack.c.l.b16 %v1320
    %v1877 = vunpack.c.h.b16 %v1320
    %v1878 = vunpack.c.l.b16 %v1321
    %v1879 = vunpack.c.h.b16 %v1321
    %v1880 = vunpack.c.l.b16 %v1322
    %v1881 = vunpack.c.h.b16 %v1322
    %v1882 = vunpack.c.l.b16 %v1323
    %v1883 = vunpack.c.h.b16 %v1323
    %v1884 = vunpack.c.l.b16 %v1324
    %v1885 = vunpack.c.h.b16 %v1324
    %v1886 = vunpack.c.l.b16 %v1325
    %v1887 = vunpack.c.h.b16 %v1325
    %v1888 = vunpack.c.l.b16 %v1326
    %v1889 = vunpack.c.h.b16 %v1326
    %v1890 = vunpack.c.l.b16 %v1327
    %v1891 = vunpack.c.h.b16 %v1327
    %v1892 = vunpack.c.l.b16 %v1328
    %v1893 = vunpack.c.h.b16 %v1328
    %v1894 = vunpack.c.l.b16 %v1329
    %v1895 = vunpack.c.h.b16 %v1329
    %v1896 = vunpack.c.l.b16 %v1330
    %v1897 = vunpack.c.h.b16 %v1330
    %v1898 = vunpack.c.l.b16 %v1331
    %v1899 = vunpack.c.h.b16 %v1331
    %v1900 = vunpack.c.l.b16 %v1332
    %v1901 = vunpack.c.h.b16 %v1332
    %v1902 = vunpack.c.l.b16 %v1333
    %v1903 = vunpack.c.h.b16 %v1333
    %v1904 = vunpack.c.l.b16 %v1334
    %v1905 = vunpack.c.h.b16 %v1334
    %v1906 = vunpack.c.l.b16 %v1335
    %v1907 = vunpack.c.h.b16 %v1335
    %v1908 = vunpack.c.l.b16 %v1336
    %v1909 = vunpack.c.h.b16 %v1336
    %v1910 = vunpack.c.l.b16 %v1337
    %v1911 = vunpack.c.h.b16 %v1337
    %v1912 = vunpack.c.l.b16 %v1338
    %v1913 = vunpack.c.h.b16 %v1338
    %v1914 = vunpack.c.l.b16 %v1339
    %v1915 = vunpack.c.h.b16 %v1339
    %v1916 = vpack.c.b16 %v1536, %v1532
    %v1917 = vpack.c.b16 %v1537, %v1533
    %v1918 = vpack.c.b16 %v1538, %v1534
    %v1919 = vpack.c.b16 %v1539, %v1535
    %v1920 = vpack.c.b16 %v1544, %v1540
    %v1921 = vpack.c.b16 %v1545, %v1541
    %v1922 = vpack.c.b16 %v1546, %v1542
    %v1923 = vpack.c.b16 %v1547, %v1543
    %v1924 = vpack.c.b16 %v1552, %v1548
    %v1925 = vpack.c.b16 %v1553, %v1549
    %v1926 = vpack.c.b16 %v1554, %v1550
    %v1927 = vpack.c.b16 %v1555, %v1551
    %v1928 = vpack.c.b16 %v1560, %v1556
    %v1929 = vpack.c.b16 %v1561, %v1557
    %v1930 = vpack.c.b16 %v1562, %v1558
    %v1931 = vpack.c.b16 %v1563, %v1559
    %v1932 = vpack.c.b16 %v1568, %v1564
    %v1933 = vpack.c.b16 %v1569, %v1565
    %v1934 = vpack.c.b16 %v1570, %v1566
    %v1935 = vpack.c.b16 %v1571, %v1567
    %v1936 = vpack.c.b16 %v1576, %v1572
    %v1937 = vpack.c.b16 %v1577, %v1573
    %v1938 = vpack.c.b16 %v1578, %v1574
    %v1939 = vpack.c.b16 %v1579, %v1575
    %v1940 = vpack.c.b16 %v1584, %v1580
    %v1941 = vpack.c.b16 %v1585, %v1581
    %v1942 = vpack.c.b16 %v1586, %v1582
    %v1943 = vpack.c.b16 %v1587, %v1583
    %v1944 = vpack.c.b16 %v1592, %v1588
    %v1945 = vpack.c.b16 %v1593, %v1589
    %v1946 = vpack.c.b16 %v1594, %v1590
    %v1947 = vpack.c.b16 %v1595, %v1591
    %v1948 = vpack.c.b16 %v1600, %v1596
    %v1949 = vpack.c.b16 %v1601, %v1597
    %v1950 = vpack.c.b16 %v1602, %v1598
    %v1951 = vpack.c.b16 %v1603, %v1599
    %v1952 = vpack.c.b16 %v1608, %v1604
    %v1953 = vpack.c.b16 %v1609, %v1605
    %v1954 = vpack.c.b16 %v1610, %v1606
    %v1955 = vpack.c.b16 %v1611, %v1607
    %v1956 = vpack.c.b16 %v1616, %v1612
    %v1957 = vpack.c.b16 %v1617, %v1613
    %v1958 = vpack.c.b16 %v1618, %v1614
    %v1959 = vpack.c.b16 %v1619, %v1615
    %v1960 = vpack.c.b16 %v1624, %v1620
    %v1961 = vpack.c.b16 %v1625, %v1621
    %v1962 = vpack.c.b16 %v1626, %v1622
    %v1963 = vpack.c.b16 %v1627, %v1623
    %v1964 = vpack.c.b16 %v1632, %v1628
    %v1965 = vpack.c.b16 %v1633, %v1629
    %v1966 = vpack.c.b16 %v1634, %v1630
    %v1967 = vpack.c.b16 %v1635, %v1631
    %v1968 = vpack.c.b16 %v1640, %v1636
    %v1969 = vpack.c.b16 %v1641, %v1637
    %v1970 = vpack.c.b16 %v1642, %v1638
    %v1971 = vpack.c.b16 %v1643, %v1639
    %v1972 = vpack.c.b16 %v1648, %v1644
    %v1973 = vpack.c.b16 %v1649, %v1645
    %v1974 = vpack.c.b16 %v1650, %v1646
    %v1975 = vpack.c.b16 %v1651, %v1647
    %v1976 = vpack.c.b16 %v1656, %v1652
    %v1977 = vpack.c.b16 %v1657, %v1653
    %v1978 = vpack.c.b16 %v1658, %v1654
    %v1979 = vpack.c.b16 %v1659, %v1655
    %v1980 = vpack.c.b16 %v1664, %v1660
    %v1981 = vpack.c.b16 %v1665, %v1661
    %v1982 = vpack.c.b16 %v1666, %v1662
    %v1983 = vpack.c.b16 %v1667, %v1663
    %v1984 = vpack.c.b16 %v1672, %v1668
    %v1985 = vpack.c.b16 %v1673, %v1669
    %v1986 = vpack.c.b16 %v1674, %v1670
    %v1987 = vpack.c.b16 %v1675, %v1671
    %v1988 = vpack.c.b16 %v1680, %v1676
    %v1989 = vpack.c.b16 %v1681, %v1677
    %v1990 = vpack.c.b16 %v1682, %v1678
    %v1991 = vpack.c.b16 %v1683, %v1679
    %v1992 = vpack.c.b16 %v1688, %v1684
    %v1993 = vpack.c.b16 %v1689, %v1685
    %v1994 = vpack.c.b16 %v1690, %v1686
    %v1995 = vpack.c.b16 %v1691, %v1687
    %v1996 = vpack.c.b16 %v1696, %v1692
    %v1997 = vpack.c.b16 %v1697, %v1693
    %v1998 = vpack.c.b16 %v1698, %v1694
    %v1999 = vpack.c.b16 %v1699, %v1695
    %v2000 = vpack.c.b16 %v1704, %v1700
    %v2001 = vpack.c.b16 %v1705, %v1701
    %v2002 = vpack.c.b16 %v1706, %v1702
    %v2003 = vpack.c.b16 %v1707, %v1703
    %v2004 = vpack.c.b16 %v1712, %v1708
    %v2005 = vpack.c.b16 %v1713, %v1709
    %v2006 = vpack.c.b16 %v1714, %v1710
    %v2007 = vpack.c.b16 %v1715, %v1711
    %v2008 = vpack.c.b16 %v1720, %v1716
    %v2009 = vpack.c.b16 %v1721, %v1717
    %v2010 = vpack.c.b16 %v1722, %v1718
    %v2011 = vpack.c.b16 %v1723, %v1719
    %v2012 = vpack.c.b16 %v1728, %v1724
    %v2013 = vpack.c.b16 %v1729, %v1725
    %v2014 = vpack.c.b16 %v1730, %v1726
    %v2015 = vpack.c.b16 %v1731, %v1727
    %v2016 = vpack.c.b16 %v1736, %v1732
    %v2017 = vpack.c.b16 %v1737, %v1733
    %v2018 = vpack.c.b16 %v1738, %v1734
    %v2019 = vpack.c.b16 %v1739, %v1735
    %v2020 = vpack.c.b16 %v1744, %v1740
    %v2021 = vpack.c.b16 %v1745, %v1741
    %v2022 = vpack.c.b16 %v1746, %v1742
    %v2023 = vpack.c.b16 %v1747, %v1743
    %v2024 = vpack.c.b16 %v1752, %v1748
    %v2025 = vpack.c.b16 %v1753, %v1749
    %v2026 = vpack.c.b16 %v1754, %v1750
    %v2027 = vpack.c.b16 %v1755, %v1751
    %v2028 = vpack.c.b16 %v1760, %v1756
    %v2029 = vpack.c.b16 %v1761, %v1757
    %v2030 = vpack.c.b16 %v1762, %v1758
    %v2031 = vpack.c.b16 %v1763, %v1759
    %v2032 = vpack.c.b16 %v1768, %v1764
    %v2033 = vpack.c.b16 %v1769, %v1765
    %v2034 = vpack.c.b16 %v1770, %v1766
    %v2035 = vpack.c.b16 %v1771, %v1767
    %v2036 = vpack.c.b16 %v1776, %v1772
    %v2037 = vpack.c.b16 %v1777, %v1773
    %v2038 = vpack.c.b16 %v1778, %v1774
    %v2039 = vpack.c.b16 %v1779, %v1775
    %v2040 = vpack.c.b16 %v1784, %v1780
    %v2041 = vpack.c.b16 %v1785, %v1781
    %v2042 = vpack.c.b16 %v1786, %v1782
    %v2043 = vpack.c.b16 %v1787, %v1783
    %v2044 = vpack.c.b16 %v1792, %v1788
    %v2045 = vpack.c.b16 %v1793, %v1789
    %v2046 = vpack.c.b16 %v1794, %v1790
    %v2047 = vpack.c.b16 %v1795, %v1791
    %v2048 = vpack.c.b16 %v1800, %v1796
    %v2049 = vpack.c.b16 %v1801, %v1797
    %v2050 = vpack.c.b16 %v1802, %v1798
    %v2051 = vpack.c.b16 %v1803, %v1799
    %v2052 = vpack.c.b16 %v1808, %v1804
    %v2053 = vpack.c.b16 %v1809, %v1805
    %v2054 = vpack.c.b16 %v1810, %v1806
    %v2055 = vpack.c.b16 %v1811, %v1807
    %v2056 = vpack.c.b16 %v1816, %v1812
    %v2057 = vpack.c.b16 %v1817, %v1813
    %v2058 = vpack.c.b16 %v1818, %v1814
    %v2059 = vpack.c.b16 %v1819, %v1815
    %v2060 = vpack.c.b16 %v1824, %v1820
    %v2061 = vpack.c.b16 %v1825, %v1821
    %v2062 = vpack.c.b16 %v1826, %v1822
    %v2063 = vpack.c.b16 %v1827, %v1823
    %v2064 = vpack.c.b16 %v1832, %v1828
    %v2065 = vpack.c.b16 %v1833, %v1829
    %v2066 = vpack.c.b16 %v1834, %v1830
    %v2067 = vpack.c.b16 %v1835, %v1831
    %v2068 = vpack.c.b16 %v1840, %v1836
    %v2069 = vpack.c.b16 %v1841, %v1837
    %v2070 = vpack.c.b16 %v1842, %v1838
    %v2071 = vpack.c.b16 %v1843, %v1839
    %v2072 = vpack.c.b16 %v1848, %v1844
    %v2073 = vpack.c.b16 %v1849, %v1845
    %v2074 = vpack.c.b16 %v1850, %v1846
    %v2075 = vpack.c.b16 %v1851, %v1847
    %v2076 = vpack.c.b16 %v1856, %v1852
    %v2077 = vpack.c.b16 %v1857, %v1853
    %v2078 = vpack.c.b16 %v1858, %v1854
    %v2079 = vpack.c.b16 %v1859, %v1855
    %v2080 = vpack.c.b16 %v1864, %v1860
    %v2081 = vpack.c.b16 %v1865, %v1861
    %v2082 = vpack.c.b16 %v1866, %v1862
    %v2083 = vpack.c.b16 %v1867, %v1863
    %v2084 = vpack.c.b16 %v1872, %v1868
    %v2085 = vpack.c.b16 %v1873, %v1869
    %v2086 = vpack.c.b16 %v1874, %v1870
    %v2087 = vpack.c.b16 %v1875, %v1871
    %v2088 = vpack.c.b16 %v1880, %v1876
    %v2089 = vpack.c.b16 %v1881, %v1877
    %v2090 = vpack.c.b16 %v1882, %v1878
    %v2091 = vpack.c.b16 %v1883, %v1879
    %v2092 = vpack.c.b16 %v1888, %v1884
    %v2093 = vpack.c.b16 %v1889, %v1885
    %v2094 = vpack.c.b16 %v1890, %v1886
    %v2095 = vpack.c.b16 %v1891, %v1887
    %v2096 = vpack.c.b16 %v1896, %v1892
    %v2097 = vpack.c.b16 %v1897, %v1893
    %v2098 = vpack.c.b16 %v1898, %v1894
    %v2099 = vpack.c.b16 %v1899, %v1895
    %v2100 = vpack.c.b16 %v1904, %v1900
    %v2101 = vpack.c.b16 %v1905, %v1901
    %v2102 = vpack.c.b16 %v1906, %v1902
    %v2103 = vpack.c.b16 %v1907, %v1903
    %v2104 = vpack.c.b16 %v1912, %v1908
    %v2105 = vpack.c.b16 %v1913, %v1909
    %v2106 = vpack.c.b16 %v1914, %v1910
    %v2107 = vpack.c.b16 %v1915, %v1911
    %2300 = vmatprep.subr.bf16.mxu0 %v1945
    %2301 = vmatpush1.bf16.msra.mxu0 %v1944
    %2302 = vmatprep.subr.bf16.mxu0 %v1941
    %2303 = vmatpush1.bf16.msra.mxu0 %v1940
    %2304 = vmatprep.subr.bf16.mxu0 %v1937
    %2305 = vmatpush1.bf16.msra.mxu0 %v1936
    %2306 = vmatprep.subr.bf16.mxu0 %v1933
    %2307 = vmatpush1.bf16.msra.mxu0 %v1932
    %2308 = vmatprep.subr.bf16.mxu0 %v1929
    %2309 = vmatpush1.bf16.msra.mxu0 %v1928
    %2310 = vmatprep.subr.bf16.mxu0 %v1925
    %2311 = vmatpush1.bf16.msra.mxu0 %v1924
    %2312 = vmatprep.subr.bf16.mxu0 %v1921
    %2313 = vmatpush1.bf16.msra.mxu0 %v1920
    %2314 = vmatprep.subr.bf16.mxu0 %v1917
    %2315 = vmatpush1.bf16.msra.mxu0 %v1916
    %2316 = vmatprep.subr.bf16.mxu0 %v1977
    %2317 = vmatpush2.bf16.msra.mxu0 %v1976
    %2318 = vmatprep.subr.bf16.mxu0 %v1973
    %2319 = vmatpush2.bf16.msra.mxu0 %v1972
    %2320 = vmatprep.subr.bf16.mxu0 %v1969
    %2321 = vmatpush2.bf16.msra.mxu0 %v1968
    %2322 = vmatprep.subr.bf16.mxu0 %v1965
    %2323 = vmatpush2.bf16.msra.mxu0 %v1964
    %2324 = vmatprep.subr.bf16.mxu0 %v1961
    %2325 = vmatpush2.bf16.msra.mxu0 %v1960
    %2326 = vmatprep.subr.bf16.mxu0 %v1957
    %2327 = vmatpush2.bf16.msra.mxu0 %v1956
    %2328 = vmatprep.subr.bf16.mxu0 %v1953
    %2329 = vmatpush2.bf16.msra.mxu0 %v1952
    %2330 = vmatprep.subr.bf16.mxu0 %v1949
    %2331 = vmatpush2.bf16.msra.mxu0 %v1948
    %2332 = vmatprep.mubr.bf16.mxu0 %v1143
    %2333 = vmatmul.mubr.bf16.gmra.mxu0 %v1142
    %v2334 = vpop.f32.mrf.mxu0
    %v2335 = vadd.f32 %v1045, %v2334
    %v2336 = vpop.f32.mrf.mxu0
    %v2337 = vadd.f32 %v1049, %v2336
    %v2338 = vpop.f32.mrf.mxu0
    %v2339 = vadd.f32 %v1061, %v2338
    %v2340 = vpop.f32.mrf.mxu0
    %v2341 = vadd.f32 %v1065, %v2340
    %2342 = vdwg.mxu0
    %2343 = vmatprep.subr.bf16.mxu0 %v2009
    %2344 = vmatpush1.bf16.msra.mxu0 %v2008
    %2345 = vmatprep.subr.bf16.mxu0 %v2005
    %2346 = vmatpush1.bf16.msra.mxu0 %v2004
    %2347 = vmatprep.subr.bf16.mxu0 %v2001
    %2348 = vmatpush1.bf16.msra.mxu0 %v2000
    %2349 = vmatprep.subr.bf16.mxu0 %v1997
    %2350 = vmatpush1.bf16.msra.mxu0 %v1996
    %2351 = vmatprep.subr.bf16.mxu0 %v1993
    %2352 = vmatpush1.bf16.msra.mxu0 %v1992
    %2353 = vmatprep.subr.bf16.mxu0 %v1989
    %2354 = vmatpush1.bf16.msra.mxu0 %v1988
    %2355 = vmatprep.subr.bf16.mxu0 %v1985
    %2356 = vmatpush1.bf16.msra.mxu0 %v1984
    %2357 = vmatprep.subr.bf16.mxu0 %v1981
    %2358 = vmatpush1.bf16.msra.mxu0 %v1980
    %2359 = vmatprep.subr.bf16.mxu0 %v2041
    %2360 = vmatpush2.bf16.msra.mxu0 %v2040
    %2361 = vmatprep.subr.bf16.mxu0 %v2037
    %2362 = vmatpush2.bf16.msra.mxu0 %v2036
    %2363 = vmatprep.subr.bf16.mxu0 %v2033
    %2364 = vmatpush2.bf16.msra.mxu0 %v2032
    %2365 = vmatprep.subr.bf16.mxu0 %v2029
    %2366 = vmatpush2.bf16.msra.mxu0 %v2028
    %2367 = vmatprep.subr.bf16.mxu0 %v2025
    %2368 = vmatpush2.bf16.msra.mxu0 %v2024
    %2369 = vmatprep.subr.bf16.mxu0 %v2021
    %2370 = vmatpush2.bf16.msra.mxu0 %v2020
    %2371 = vmatprep.subr.bf16.mxu0 %v2017
    %2372 = vmatpush2.bf16.msra.mxu0 %v2016
    %2373 = vmatprep.subr.bf16.mxu0 %v2013
    %2374 = vmatpush2.bf16.msra.mxu0 %v2012
    %2375 = vmatprep.mubr.bf16.mxu0 %v1145
    %2376 = vmatmul.mubr.bf16.gmra.mxu0 %v1144
    %v2377 = vpop.f32.mrf.mxu0
    %v2378 = vadd.f32 %v2335, %v2377
    %v2379 = vpop.f32.mrf.mxu0
    %v2380 = vadd.f32 %v2337, %v2379
    %v2381 = vpop.f32.mrf.mxu0
    %v2382 = vadd.f32 %v2339, %v2381
    %v2383 = vpop.f32.mrf.mxu0
    %v2384 = vadd.f32 %v2341, %v2383
    %2385 = vdwg.mxu0
    %2386 = vmatprep.subr.bf16.mxu0 %v2073
    %2387 = vmatpush1.bf16.msra.mxu0 %v2072
    %2388 = vmatprep.subr.bf16.mxu0 %v2069
    %2389 = vmatpush1.bf16.msra.mxu0 %v2068
    %2390 = vmatprep.subr.bf16.mxu0 %v2065
    %2391 = vmatpush1.bf16.msra.mxu0 %v2064
    %2392 = vmatprep.subr.bf16.mxu0 %v2061
    %2393 = vmatpush1.bf16.msra.mxu0 %v2060
    %2394 = vmatprep.subr.bf16.mxu0 %v2057
    %2395 = vmatpush1.bf16.msra.mxu0 %v2056
    %2396 = vmatprep.subr.bf16.mxu0 %v2053
    %2397 = vmatpush1.bf16.msra.mxu0 %v2052
    %2398 = vmatprep.subr.bf16.mxu0 %v2049
    %2399 = vmatpush1.bf16.msra.mxu0 %v2048
    %2400 = vmatprep.subr.bf16.mxu0 %v2045
    %2401 = vmatpush1.bf16.msra.mxu0 %v2044
    %2402 = vmatprep.subr.bf16.mxu0 %v2105
    %2403 = vmatpush2.bf16.msra.mxu0 %v2104
    %2404 = vmatprep.subr.bf16.mxu0 %v2101
    %2405 = vmatpush2.bf16.msra.mxu0 %v2100
    %2406 = vmatprep.subr.bf16.mxu0 %v2097
    %2407 = vmatpush2.bf16.msra.mxu0 %v2096
    %2408 = vmatprep.subr.bf16.mxu0 %v2093
    %2409 = vmatpush2.bf16.msra.mxu0 %v2092
    %2410 = vmatprep.subr.bf16.mxu0 %v2089
    %2411 = vmatpush2.bf16.msra.mxu0 %v2088
    %2412 = vmatprep.subr.bf16.mxu0 %v2085
    %2413 = vmatpush2.bf16.msra.mxu0 %v2084
    %2414 = vmatprep.subr.bf16.mxu0 %v2081
    %2415 = vmatpush2.bf16.msra.mxu0 %v2080
    %2416 = vmatprep.subr.bf16.mxu0 %v2077
    %2417 = vmatpush2.bf16.msra.mxu0 %v2076
    %2418 = vmatprep.mubr.bf16.mxu0 %v1147
    %2419 = vmatmul.mubr.bf16.gmra.mxu0 %v1146
    %v2420 = vpop.f32.mrf.mxu0
    %v2421 = vadd.f32 %v2378, %v2420
    %v2422 = vpop.f32.mrf.mxu0
    %v2423 = vadd.f32 %v2380, %v2422
    %v2424 = vpop.f32.mrf.mxu0
    %v2425 = vadd.f32 %v2382, %v2424
    %v2426 = vpop.f32.mrf.mxu0
    %v2427 = vadd.f32 %v2384, %v2426
    %2428 = vdwg.mxu0
    %2429 = vmatprep.subr.bf16.mxu0 %v1947
    %2430 = vmatpush1.bf16.msra.mxu0 %v1946
    %2431 = vmatprep.subr.bf16.mxu0 %v1943
    %2432 = vmatpush1.bf16.msra.mxu0 %v1942
    %2433 = vmatprep.subr.bf16.mxu0 %v1939
    %2434 = vmatpush1.bf16.msra.mxu0 %v1938
    %2435 = vmatprep.subr.bf16.mxu0 %v1935
    %2436 = vmatpush1.bf16.msra.mxu0 %v1934
    %2437 = vmatprep.subr.bf16.mxu0 %v1931
    %2438 = vmatpush1.bf16.msra.mxu0 %v1930
    %2439 = vmatprep.subr.bf16.mxu0 %v1927
    %2440 = vmatpush1.bf16.msra.mxu0 %v1926
    %2441 = vmatprep.subr.bf16.mxu0 %v1923
    %2442 = vmatpush1.bf16.msra.mxu0 %v1922
    %2443 = vmatprep.subr.bf16.mxu0 %v1919
    %2444 = vmatpush1.bf16.msra.mxu0 %v1918
    %2445 = vmatprep.subr.bf16.mxu0 %v1979
    %2446 = vmatpush2.bf16.msra.mxu0 %v1978
    %2447 = vmatprep.subr.bf16.mxu0 %v1975
    %2448 = vmatpush2.bf16.msra.mxu0 %v1974
    %2449 = vmatprep.subr.bf16.mxu0 %v1971
    %2450 = vmatpush2.bf16.msra.mxu0 %v1970
    %2451 = vmatprep.subr.bf16.mxu0 %v1967
    %2452 = vmatpush2.bf16.msra.mxu0 %v1966
    %2453 = vmatprep.subr.bf16.mxu0 %v1963
    %2454 = vmatpush2.bf16.msra.mxu0 %v1962
    %2455 = vmatprep.subr.bf16.mxu0 %v1959
    %2456 = vmatpush2.bf16.msra.mxu0 %v1958
    %2457 = vmatprep.subr.bf16.mxu0 %v1955
    %2458 = vmatpush2.bf16.msra.mxu0 %v1954
    %2459 = vmatprep.subr.bf16.mxu0 %v1951
    %2460 = vmatpush2.bf16.msra.mxu0 %v1950
    %2461 = vmatprep.mubr.bf16.mxu0 %v1143
    %2462 = vmatmul.mubr.bf16.gmra.mxu0 %v1142
    %v2463 = vpop.f32.mrf.mxu0
    %v2464 = vadd.f32 %v1053, %v2463
    %v2465 = vpop.f32.mrf.mxu0
    %v2466 = vadd.f32 %v1057, %v2465
    %v2467 = vpop.f32.mrf.mxu0
    %v2468 = vadd.f32 %v1069, %v2467
    %v2469 = vpop.f32.mrf.mxu0
    %v2470 = vadd.f32 %v1073, %v2469
    %2471 = vdwg.mxu0
    %2472 = vmatprep.subr.bf16.mxu0 %v2011
    %2473 = vmatpush1.bf16.msra.mxu0 %v2010
    %2474 = vmatprep.subr.bf16.mxu0 %v2007
    %2475 = vmatpush1.bf16.msra.mxu0 %v2006
    %2476 = vmatprep.subr.bf16.mxu0 %v2003
    %2477 = vmatpush1.bf16.msra.mxu0 %v2002
    %2478 = vmatprep.subr.bf16.mxu0 %v1999
    %2479 = vmatpush1.bf16.msra.mxu0 %v1998
    %2480 = vmatprep.subr.bf16.mxu0 %v1995
    %2481 = vmatpush1.bf16.msra.mxu0 %v1994
    %2482 = vmatprep.subr.bf16.mxu0 %v1991
    %2483 = vmatpush1.bf16.msra.mxu0 %v1990
    %2484 = vmatprep.subr.bf16.mxu0 %v1987
    %2485 = vmatpush1.bf16.msra.mxu0 %v1986
    %2486 = vmatprep.subr.bf16.mxu0 %v1983
    %2487 = vmatpush1.bf16.msra.mxu0 %v1982
    %2488 = vmatprep.subr.bf16.mxu0 %v2043
    %2489 = vmatpush2.bf16.msra.mxu0 %v2042
    %2490 = vmatprep.subr.bf16.mxu0 %v2039
    %2491 = vmatpush2.bf16.msra.mxu0 %v2038
    %2492 = vmatprep.subr.bf16.mxu0 %v2035
    %2493 = vmatpush2.bf16.msra.mxu0 %v2034
    %2494 = vmatprep.subr.bf16.mxu0 %v2031
    %2495 = vmatpush2.bf16.msra.mxu0 %v2030
    %2496 = vmatprep.subr.bf16.mxu0 %v2027
    %2497 = vmatpush2.bf16.msra.mxu0 %v2026
    %2498 = vmatprep.subr.bf16.mxu0 %v2023
    %2499 = vmatpush2.bf16.msra.mxu0 %v2022
    %2500 = vmatprep.subr.bf16.mxu0 %v2019
    %2501 = vmatpush2.bf16.msra.mxu0 %v2018
    %2502 = vmatprep.subr.bf16.mxu0 %v2015
    %2503 = vmatpush2.bf16.msra.mxu0 %v2014
    %2504 = vmatprep.mubr.bf16.mxu0 %v1145
    %2505 = vmatmul.mubr.bf16.gmra.mxu0 %v1144
    %v2506 = vpop.f32.mrf.mxu0
    %v2507 = vadd.f32 %v2464, %v2506
    %v2508 = vpop.f32.mrf.mxu0
    %v2509 = vadd.f32 %v2466, %v2508
    %v2510 = vpop.f32.mrf.mxu0
    %v2511 = vadd.f32 %v2468, %v2510
    %v2512 = vpop.f32.mrf.mxu0
    %v2513 = vadd.f32 %v2470, %v2512
    %2514 = vdwg.mxu0
    %2515 = vmatprep.subr.bf16.mxu0 %v2075
    %2516 = vmatpush1.bf16.msra.mxu0 %v2074
    %2517 = vmatprep.subr.bf16.mxu0 %v2071
    %2518 = vmatpush1.bf16.msra.mxu0 %v2070
    %2519 = vmatprep.subr.bf16.mxu0 %v2067
    %2520 = vmatpush1.bf16.msra.mxu0 %v2066
    %2521 = vmatprep.subr.bf16.mxu0 %v2063
    %2522 = vmatpush1.bf16.msra.mxu0 %v2062
    %2523 = vmatprep.subr.bf16.mxu0 %v2059
    %2524 = vmatpush1.bf16.msra.mxu0 %v2058
    %2525 = vmatprep.subr.bf16.mxu0 %v2055
    %2526 = vmatpush1.bf16.msra.mxu0 %v2054
    %2527 = vmatprep.subr.bf16.mxu0 %v2051
    %2528 = vmatpush1.bf16.msra.mxu0 %v2050
    %2529 = vmatprep.subr.bf16.mxu0 %v2047
    %2530 = vmatpush1.bf16.msra.mxu0 %v2046
    %2531 = vmatprep.subr.bf16.mxu0 %v2107
    %2532 = vmatpush2.bf16.msra.mxu0 %v2106
    %2533 = vmatprep.subr.bf16.mxu0 %v2103
    %2534 = vmatpush2.bf16.msra.mxu0 %v2102
    %2535 = vmatprep.subr.bf16.mxu0 %v2099
    %2536 = vmatpush2.bf16.msra.mxu0 %v2098
    %2537 = vmatprep.subr.bf16.mxu0 %v2095
    %2538 = vmatpush2.bf16.msra.mxu0 %v2094
    %2539 = vmatprep.subr.bf16.mxu0 %v2091
    %2540 = vmatpush2.bf16.msra.mxu0 %v2090
    %2541 = vmatprep.subr.bf16.mxu0 %v2087
    %2542 = vmatpush2.bf16.msra.mxu0 %v2086
    %2543 = vmatprep.subr.bf16.mxu0 %v2083
    %2544 = vmatpush2.bf16.msra.mxu0 %v2082
    %2545 = vmatprep.subr.bf16.mxu0 %v2079
    %2546 = vmatpush2.bf16.msra.mxu0 %v2078
    %2547 = vmatprep.mubr.bf16.mxu0 %v1147
    %2548 = vmatmul.mubr.bf16.gmra.mxu0 %v1146
    %v2549 = vpop.f32.mrf.mxu0
    %v2550 = vadd.f32 %v2507, %v2549
    %v2551 = vpop.f32.mrf.mxu0
    %v2552 = vadd.f32 %v2509, %v2551
    %v2553 = vpop.f32.mrf.mxu0
    %v2554 = vadd.f32 %v2511, %v2553
    %v2555 = vpop.f32.mrf.mxu0
    %v2556 = vadd.f32 %v2513, %v2555
    %2557 = vdwg.mxu0
    %v2558 = vld [vmem:[#allocation18] sm:$0xf]
    %v2560 = vlaneseq
    %v2561 = vshrl.u32 %v2560, 7
    %v2562 = vsub.s32 0, %v2561
    %v2563 = vrot.slane %v2558, %v2562
    %v2564 = vlaneseq
    %v2565 = vshrl.u32 %v2564, 7
    %v2566 = vsub.s32 1, %v2565
    %v2567 = vrot.slane %v2558, %v2566
    %v2568 = vlaneseq
    %v2569 = vshrl.u32 %v2568, 7
    %v2570 = vsub.s32 2, %v2569
    %v2571 = vrot.slane %v2558, %v2570
    %v2572 = vlaneseq
    %v2573 = vshrl.u32 %v2572, 7
    %v2574 = vsub.s32 3, %v2573
    %v2575 = vrot.slane %v2558, %v2574
    %v2580 = vadd.f32 %v2421, %v2563
    %v2581 = vadd.f32 %v2423, %v2567
    %v2582 = vadd.f32 %v2550, %v2571
    %v2583 = vadd.f32 %v2552, %v2575
    %v2584 = vadd.f32 %v2425, %v2563
    %v2585 = vadd.f32 %v2427, %v2567
    %v2586 = vadd.f32 %v2554, %v2571
    %v2587 = vadd.f32 %v2556, %v2575
    %v2588 = vmax.f32 %v2580, 0.0
    %v2589 = vmax.f32 %v2581, 0.0
    %v2590 = vmax.f32 %v2582, 0.0
    %v2591 = vmax.f32 %v2583, 0.0
    %v2592 = vmax.f32 %v2584, 0.0
    %v2593 = vmax.f32 %v2585, 0.0
    %v2594 = vmax.f32 %v2586, 0.0
    %v2595 = vmax.f32 %v2587, 0.0
    %v2596 = vld [vmem:[#allocation20] sm:$0xf]
    %v2597 = vld [vmem:[#allocation21] sm:$0xf]
    %v2598 = vadd.f32 %v2588, %v2589
    %v2599 = vadd.f32 %v2598, %v2590
    %v2600 = vadd.f32 %v2599, %v2591
    %2601 = vadd.xlane.f32.xlu0 %v2600
    %v2602 = vpop.xlane.xlu0 %2601
    %v2603 = vadd.f32 %v2592, %v2593
    %v2604 = vadd.f32 %v2603, %v2594
    %v2605 = vadd.f32 %v2604, %v2595
    %2606 = vadd.xlane.f32.xlu0 %v2605
    %v2607 = vpop.xlane.xlu0 %2606
    %v2608 = vrcp.pop 512.0
    %v2609 = vmul.f32 %v2602, %v2608
    %v2610 = vmul.f32 %v2607, %v2608
    %v2611 = vsub.f32 %v2588, %v2609
    %v2612 = vsub.f32 %v2589, %v2609
    %v2613 = vsub.f32 %v2590, %v2609
    %v2614 = vsub.f32 %v2591, %v2609
    %v2615 = vsub.f32 %v2592, %v2610
    %v2616 = vsub.f32 %v2593, %v2610
    %v2617 = vsub.f32 %v2594, %v2610
    %v2618 = vsub.f32 %v2595, %v2610
    %v2619 = vmul.f32 %v2611, %v2611
    %v2620 = vmul.f32 %v2612, %v2612
    %v2621 = vmul.f32 %v2613, %v2613
    %v2622 = vmul.f32 %v2614, %v2614
    %v2623 = vmul.f32 %v2615, %v2615
    %v2624 = vmul.f32 %v2616, %v2616
    %v2625 = vmul.f32 %v2617, %v2617
    %v2626 = vmul.f32 %v2618, %v2618
    %v2627 = vadd.f32 %v2619, %v2620
    %v2628 = vadd.f32 %v2627, %v2621
    %v2629 = vadd.f32 %v2628, %v2622
    %2630 = vadd.xlane.f32.xlu0 %v2629
    %v2631 = vpop.xlane.xlu0 %2630
    %v2632 = vadd.f32 %v2623, %v2624
    %v2633 = vadd.f32 %v2632, %v2625
    %v2634 = vadd.f32 %v2633, %v2626
    %2635 = vadd.xlane.f32.xlu0 %v2634
    %v2636 = vpop.xlane.xlu0 %2635
    %v2637 = vmul.f32 %v2631, %v2608
    %v2638 = vmul.f32 %v2636, %v2608
    %v2639 = vadd.f32 %v2637, 1e-05
    %v2640 = vadd.f32 %v2638, 1e-05
    %v2641 = vrsqrt.pop %v2639
    %v2642 = vrsqrt.pop %v2640
    %v2643 = vmul.f32 %v2611, %v2641
    %v2644 = vmul.f32 %v2612, %v2641
    %v2645 = vmul.f32 %v2613, %v2641
    %v2646 = vmul.f32 %v2614, %v2641
    %v2647 = vmul.f32 %v2615, %v2642
    %v2648 = vmul.f32 %v2616, %v2642
    %v2649 = vmul.f32 %v2617, %v2642
    %v2650 = vmul.f32 %v2618, %v2642
    %v2652 = vlaneseq
    %v2653 = vshrl.u32 %v2652, 7
    %v2654 = vsub.s32 0, %v2653
    %v2655 = vrot.slane %v2596, %v2654
    %v2656 = vlaneseq
    %v2657 = vshrl.u32 %v2656, 7
    %v2658 = vsub.s32 1, %v2657
    %v2659 = vrot.slane %v2596, %v2658
    %v2660 = vlaneseq
    %v2661 = vshrl.u32 %v2660, 7
    %v2662 = vsub.s32 2, %v2661
    %v2663 = vrot.slane %v2596, %v2662
    %v2664 = vlaneseq
    %v2665 = vshrl.u32 %v2664, 7
    %v2666 = vsub.s32 3, %v2665
    %v2667 = vrot.slane %v2596, %v2666
    %v2672 = vmul.f32 %v2643, %v2655
    %v2673 = vmul.f32 %v2644, %v2659
    %v2674 = vmul.f32 %v2645, %v2663
    %v2675 = vmul.f32 %v2646, %v2667
    %v2676 = vmul.f32 %v2647, %v2655
    %v2677 = vmul.f32 %v2648, %v2659
    %v2678 = vmul.f32 %v2649, %v2663
    %v2679 = vmul.f32 %v2650, %v2667
    %v2681 = vlaneseq
    %v2682 = vshrl.u32 %v2681, 7
    %v2683 = vsub.s32 0, %v2682
    %v2684 = vrot.slane %v2597, %v2683
    %v2685 = vlaneseq
    %v2686 = vshrl.u32 %v2685, 7
    %v2687 = vsub.s32 1, %v2686
    %v2688 = vrot.slane %v2597, %v2687
    %v2689 = vlaneseq
    %v2690 = vshrl.u32 %v2689, 7
    %v2691 = vsub.s32 2, %v2690
    %v2692 = vrot.slane %v2597, %v2691
    %v2693 = vlaneseq
    %v2694 = vshrl.u32 %v2693, 7
    %v2695 = vsub.s32 3, %v2694
    %v2696 = vrot.slane %v2597, %v2695
    %v2701 = vadd.f32 %v2672, %v2684
    %v2702 = vadd.f32 %v2673, %v2688
    %v2703 = vadd.f32 %v2674, %v2692
    %v2704 = vadd.f32 %v2675, %v2696
    %v2705 = vadd.f32 %v2676, %v2684
    %v2706 = vadd.f32 %v2677, %v2688
    %v2707 = vadd.f32 %v2678, %v2692
    %v2708 = vadd.f32 %v2679, %v2696
    %v2709 = vpack.c.bf16 %v2705, %v2701
    %v2710 = vpack.c.bf16 %v2706, %v2702
    %v2711 = vpack.c.bf16 %v2707, %v2703
    %v2712 = vpack.c.bf16 %v2708, %v2704
    %v2713 = vld [vmem:[#allocation23] sm:$0xf]
    %v2714 = vld [vmem:[#allocation23 + $0x4] sm:$0xf]
    %v2715 = vld [vmem:[#allocation23 + $0x8] sm:$0xf]
    %v2716 = vld [vmem:[#allocation23 + $0xc] sm:$0xf]
    %v2717 = vld [vmem:[#allocation23 + $0x10] sm:$0xf]
    %v2718 = vld [vmem:[#allocation23 + $0x14] sm:$0xf]
    %v2719 = vld [vmem:[#allocation23 + $0x18] sm:$0xf]
    %v2720 = vld [vmem:[#allocation23 + $0x1c] sm:$0xf]
    %v2721 = vld [vmem:[#allocation23 + $0x20] sm:$0xf]
    %v2722 = vld [vmem:[#allocation23 + $0x24] sm:$0xf]
    %v2723 = vld [vmem:[#allocation23 + $0x28] sm:$0xf]
    %v2724 = vld [vmem:[#allocation23 + $0x2c] sm:$0xf]
    %v2725 = vld [vmem:[#allocation23 + $0x30] sm:$0xf]
    %v2726 = vld [vmem:[#allocation23 + $0x34] sm:$0xf]
    %v2727 = vld [vmem:[#allocation23 + $0x38] sm:$0xf]
    %v2728 = vld [vmem:[#allocation23 + $0x3c] sm:$0xf]
    %v2729 = vld [vmem:[#allocation23 + $0x40] sm:$0xf]
    %v2730 = vld [vmem:[#allocation23 + $0x44] sm:$0xf]
    %v2731 = vld [vmem:[#allocation23 + $0x48] sm:$0xf]
    %v2732 = vld [vmem:[#allocation23 + $0x4c] sm:$0xf]
    %v2733 = vld [vmem:[#allocation23 + $0x50] sm:$0xf]
    %v2734 = vld [vmem:[#allocation23 + $0x54] sm:$0xf]
    %v2735 = vld [vmem:[#allocation23 + $0x58] sm:$0xf]
    %v2736 = vld [vmem:[#allocation23 + $0x5c] sm:$0xf]
    %v2737 = vld [vmem:[#allocation23 + $0x60] sm:$0xf]
    %v2738 = vld [vmem:[#allocation23 + $0x64] sm:$0xf]
    %v2739 = vld [vmem:[#allocation23 + $0x68] sm:$0xf]
    %v2740 = vld [vmem:[#allocation23 + $0x6c] sm:$0xf]
    %v2741 = vld [vmem:[#allocation23 + $0x70] sm:$0xf]
    %v2742 = vld [vmem:[#allocation23 + $0x74] sm:$0xf]
    %v2743 = vld [vmem:[#allocation23 + $0x78] sm:$0xf]
    %v2744 = vld [vmem:[#allocation23 + $0x7c] sm:$0xf]
    %v2745 = vld [vmem:[#allocation23 + $0x80] sm:$0xf]
    %v2746 = vld [vmem:[#allocation23 + $0x84] sm:$0xf]
    %v2747 = vld [vmem:[#allocation23 + $0x88] sm:$0xf]
    %v2748 = vld [vmem:[#allocation23 + $0x8c] sm:$0xf]
    %v2749 = vld [vmem:[#allocation23 + $0x90] sm:$0xf]
    %v2750 = vld [vmem:[#allocation23 + $0x94] sm:$0xf]
    %v2751 = vld [vmem:[#allocation23 + $0x98] sm:$0xf]
    %v2752 = vld [vmem:[#allocation23 + $0x9c] sm:$0xf]
    %v2753 = vld [vmem:[#allocation23 + $0xa0] sm:$0xf]
    %v2754 = vld [vmem:[#allocation23 + $0xa4] sm:$0xf]
    %v2755 = vld [vmem:[#allocation23 + $0xa8] sm:$0xf]
    %v2756 = vld [vmem:[#allocation23 + $0xac] sm:$0xf]
    %v2757 = vld [vmem:[#allocation23 + $0xb0] sm:$0xf]
    %v2758 = vld [vmem:[#allocation23 + $0xb4] sm:$0xf]
    %v2759 = vld [vmem:[#allocation23 + $0xb8] sm:$0xf]
    %v2760 = vld [vmem:[#allocation23 + $0xbc] sm:$0xf]
    %v2761 = vld [vmem:[#allocation23 + $0xc0] sm:$0xf]
    %v2762 = vld [vmem:[#allocation23 + $0xc4] sm:$0xf]
    %v2763 = vld [vmem:[#allocation23 + $0xc8] sm:$0xf]
    %v2764 = vld [vmem:[#allocation23 + $0xcc] sm:$0xf]
    %v2765 = vld [vmem:[#allocation23 + $0xd0] sm:$0xf]
    %v2766 = vld [vmem:[#allocation23 + $0xd4] sm:$0xf]
    %v2767 = vld [vmem:[#allocation23 + $0xd8] sm:$0xf]
    %v2768 = vld [vmem:[#allocation23 + $0xdc] sm:$0xf]
    %v2769 = vld [vmem:[#allocation23 + $0xe0] sm:$0xf]
    %v2770 = vld [vmem:[#allocation23 + $0xe4] sm:$0xf]
    %v2771 = vld [vmem:[#allocation23 + $0xe8] sm:$0xf]
    %v2772 = vld [vmem:[#allocation23 + $0xec] sm:$0xf]
    %v2773 = vld [vmem:[#allocation23 + $0xf0] sm:$0xf]
    %v2774 = vld [vmem:[#allocation23 + $0xf4] sm:$0xf]
    %v2775 = vld [vmem:[#allocation23 + $0xf8] sm:$0xf]
    %v2776 = vld [vmem:[#allocation23 + $0xfc] sm:$0xf]
    %v2777 = vld [vmem:[#allocation24] sm:$0x1]
    %v2779 = vlaneseq
    %v2780 = vshrl.u32 %v2779, 7
    %v2781 = vsub.s32 0, %v2780
    %v2782 = vrot.slane %v2777, %v2781
    %v2848 = vunpack.c.l.b16 %v2713
    %v2849 = vunpack.c.l.b16 %v2714
    %v2850 = vunpack.c.l.b16 %v2715
    %v2851 = vunpack.c.l.b16 %v2716
    %v2852 = vunpack.c.l.b16 %v2717
    %v2853 = vunpack.c.l.b16 %v2718
    %v2854 = vunpack.c.l.b16 %v2719
    %v2855 = vunpack.c.l.b16 %v2720
    %v2856 = vunpack.c.l.b16 %v2721
    %v2857 = vunpack.c.l.b16 %v2722
    %v2858 = vunpack.c.l.b16 %v2723
    %v2859 = vunpack.c.l.b16 %v2724
    %v2860 = vunpack.c.l.b16 %v2725
    %v2861 = vunpack.c.l.b16 %v2726
    %v2862 = vunpack.c.l.b16 %v2727
    %v2863 = vunpack.c.l.b16 %v2728
    %v2864 = vunpack.c.l.b16 %v2729
    %v2865 = vunpack.c.l.b16 %v2730
    %v2866 = vunpack.c.l.b16 %v2731
    %v2867 = vunpack.c.l.b16 %v2732
    %v2868 = vunpack.c.l.b16 %v2733
    %v2869 = vunpack.c.l.b16 %v2734
    %v2870 = vunpack.c.l.b16 %v2735
    %v2871 = vunpack.c.l.b16 %v2736
    %v2872 = vunpack.c.l.b16 %v2737
    %v2873 = vunpack.c.l.b16 %v2738
    %v2874 = vunpack.c.l.b16 %v2739
    %v2875 = vunpack.c.l.b16 %v2740
    %v2876 = vunpack.c.l.b16 %v2741
    %v2877 = vunpack.c.l.b16 %v2742
    %v2878 = vunpack.c.l.b16 %v2743
    %v2879 = vunpack.c.l.b16 %v2744
    %v2880 = vunpack.c.l.b16 %v2745
    %v2881 = vunpack.c.l.b16 %v2746
    %v2882 = vunpack.c.l.b16 %v2747
    %v2883 = vunpack.c.l.b16 %v2748
    %v2884 = vunpack.c.l.b16 %v2749
    %v2885 = vunpack.c.l.b16 %v2750
    %v2886 = vunpack.c.l.b16 %v2751
    %v2887 = vunpack.c.l.b16 %v2752
    %v2888 = vunpack.c.l.b16 %v2753
    %v2889 = vunpack.c.l.b16 %v2754
    %v2890 = vunpack.c.l.b16 %v2755
    %v2891 = vunpack.c.l.b16 %v2756
    %v2892 = vunpack.c.l.b16 %v2757
    %v2893 = vunpack.c.l.b16 %v2758
    %v2894 = vunpack.c.l.b16 %v2759
    %v2895 = vunpack.c.l.b16 %v2760
    %v2896 = vunpack.c.l.b16 %v2761
    %v2897 = vunpack.c.l.b16 %v2762
    %v2898 = vunpack.c.l.b16 %v2763
    %v2899 = vunpack.c.l.b16 %v2764
    %v2900 = vunpack.c.l.b16 %v2765
    %v2901 = vunpack.c.l.b16 %v2766
    %v2902 = vunpack.c.l.b16 %v2767
    %v2903 = vunpack.c.l.b16 %v2768
    %v2904 = vunpack.c.l.b16 %v2769
    %v2905 = vunpack.c.l.b16 %v2770
    %v2906 = vunpack.c.l.b16 %v2771
    %v2907 = vunpack.c.l.b16 %v2772
    %v2908 = vunpack.c.l.b16 %v2773
    %v2909 = vunpack.c.l.b16 %v2774
    %v2910 = vunpack.c.l.b16 %v2775
    %v2911 = vunpack.c.l.b16 %v2776
    %v2912 = vpack.c.b16 %v2849, %v2848
    %v2913 = vpack.c.b16 %v2851, %v2850
    %v2914 = vpack.c.b16 %v2853, %v2852
    %v2915 = vpack.c.b16 %v2855, %v2854
    %v2916 = vpack.c.b16 %v2857, %v2856
    %v2917 = vpack.c.b16 %v2859, %v2858
    %v2918 = vpack.c.b16 %v2861, %v2860
    %v2919 = vpack.c.b16 %v2863, %v2862
    %v2920 = vpack.c.b16 %v2865, %v2864
    %v2921 = vpack.c.b16 %v2867, %v2866
    %v2922 = vpack.c.b16 %v2869, %v2868
    %v2923 = vpack.c.b16 %v2871, %v2870
    %v2924 = vpack.c.b16 %v2873, %v2872
    %v2925 = vpack.c.b16 %v2875, %v2874
    %v2926 = vpack.c.b16 %v2877, %v2876
    %v2927 = vpack.c.b16 %v2879, %v2878
    %v2928 = vpack.c.b16 %v2881, %v2880
    %v2929 = vpack.c.b16 %v2883, %v2882
    %v2930 = vpack.c.b16 %v2885, %v2884
    %v2931 = vpack.c.b16 %v2887, %v2886
    %v2932 = vpack.c.b16 %v2889, %v2888
    %v2933 = vpack.c.b16 %v2891, %v2890
    %v2934 = vpack.c.b16 %v2893, %v2892
    %v2935 = vpack.c.b16 %v2895, %v2894
    %v2936 = vpack.c.b16 %v2897, %v2896
    %v2937 = vpack.c.b16 %v2899, %v2898
    %v2938 = vpack.c.b16 %v2901, %v2900
    %v2939 = vpack.c.b16 %v2903, %v2902
    %v2940 = vpack.c.b16 %v2905, %v2904
    %v2941 = vpack.c.b16 %v2907, %v2906
    %v2942 = vpack.c.b16 %v2909, %v2908
    %v2943 = vpack.c.b16 %v2911, %v2910
    %2976 = vmatprep.subr.bf16.mxu0 0
    %2977 = vmatpush1.bf16.msra.mxu0 %v2919
    %2978 = vmatprep.subr.bf16.mxu0 0
    %2979 = vmatpush1.bf16.msra.mxu0 %v2918
    %2980 = vmatprep.subr.bf16.mxu0 0
    %2981 = vmatpush1.bf16.msra.mxu0 %v2917
    %2982 = vmatprep.subr.bf16.mxu0 0
    %2983 = vmatpush1.bf16.msra.mxu0 %v2916
    %2984 = vmatprep.subr.bf16.mxu0 0
    %2985 = vmatpush1.bf16.msra.mxu0 %v2915
    %2986 = vmatprep.subr.bf16.mxu0 0
    %2987 = vmatpush1.bf16.msra.mxu0 %v2914
    %2988 = vmatprep.subr.bf16.mxu0 0
    %2989 = vmatpush1.bf16.msra.mxu0 %v2913
    %2990 = vmatprep.subr.bf16.mxu0 0
    %2991 = vmatpush1.bf16.msra.mxu0 %v2912
    %2992 = vmatprep.subr.bf16.mxu0 0
    %2993 = vmatpush2.bf16.msra.mxu0 %v2927
    %2994 = vmatprep.subr.bf16.mxu0 0
    %2995 = vmatpush2.bf16.msra.mxu0 %v2926
    %2996 = vmatprep.subr.bf16.mxu0 0
    %2997 = vmatpush2.bf16.msra.mxu0 %v2925
    %2998 = vmatprep.subr.bf16.mxu0 0
    %2999 = vmatpush2.bf16.msra.mxu0 %v2924
    %3000 = vmatprep.subr.bf16.mxu0 0
    %3001 = vmatpush2.bf16.msra.mxu0 %v2923
    %3002 = vmatprep.subr.bf16.mxu0 0
    %3003 = vmatpush2.bf16.msra.mxu0 %v2922
    %3004 = vmatprep.subr.bf16.mxu0 0
    %3005 = vmatpush2.bf16.msra.mxu0 %v2921
    %3006 = vmatprep.subr.bf16.mxu0 0
    %3007 = vmatpush2.bf16.msra.mxu0 %v2920
    %3008 = vmatprep.mubr.bf16.mxu0 %v2710
    %3009 = vmatmul.mubr.bf16.gmra.mxu0 %v2709
    %v3010 = vpop.f32.mrf.mxu0
    %v3011 = vadd.f32 %v2782, %v3010
    %v3012 = vpop.f32.mrf.mxu0
    %v3013 = vpop.f32.mrf.mxu0
    %v3014 = vadd.f32 %v2782, %v3013
    %v3015 = vpop.f32.mrf.mxu0
    %3016 = vdwg.mxu0
    %3017 = vmatprep.subr.bf16.mxu0 0
    %3018 = vmatpush1.bf16.msra.mxu0 %v2935
    %3019 = vmatprep.subr.bf16.mxu0 0
    %3020 = vmatpush1.bf16.msra.mxu0 %v2934
    %3021 = vmatprep.subr.bf16.mxu0 0
    %3022 = vmatpush1.bf16.msra.mxu0 %v2933
    %3023 = vmatprep.subr.bf16.mxu0 0
    %3024 = vmatpush1.bf16.msra.mxu0 %v2932
    %3025 = vmatprep.subr.bf16.mxu0 0
    %3026 = vmatpush1.bf16.msra.mxu0 %v2931
    %3027 = vmatprep.subr.bf16.mxu0 0
    %3028 = vmatpush1.bf16.msra.mxu0 %v2930
    %3029 = vmatprep.subr.bf16.mxu0 0
    %3030 = vmatpush1.bf16.msra.mxu0 %v2929
    %3031 = vmatprep.subr.bf16.mxu0 0
    %3032 = vmatpush1.bf16.msra.mxu0 %v2928
    %3033 = vmatprep.subr.bf16.mxu0 0
    %3034 = vmatpush2.bf16.msra.mxu0 %v2943
    %3035 = vmatprep.subr.bf16.mxu0 0
    %3036 = vmatpush2.bf16.msra.mxu0 %v2942
    %3037 = vmatprep.subr.bf16.mxu0 0
    %3038 = vmatpush2.bf16.msra.mxu0 %v2941
    %3039 = vmatprep.subr.bf16.mxu0 0
    %3040 = vmatpush2.bf16.msra.mxu0 %v2940
    %3041 = vmatprep.subr.bf16.mxu0 0
    %3042 = vmatpush2.bf16.msra.mxu0 %v2939
    %3043 = vmatprep.subr.bf16.mxu0 0
    %3044 = vmatpush2.bf16.msra.mxu0 %v2938
    %3045 = vmatprep.subr.bf16.mxu0 0
    %3046 = vmatpush2.bf16.msra.mxu0 %v2937
    %3047 = vmatprep.subr.bf16.mxu0 0
    %3048 = vmatpush2.bf16.msra.mxu0 %v2936
    %3049 = vmatprep.mubr.bf16.mxu0 %v2712
    %3050 = vmatmul.mubr.bf16.gmra.mxu0 %v2711
    %v3051 = vpop.f32.mrf.mxu0
    %v3052 = vadd.f32 %v3011, %v3051
    %v3053 = vpop.f32.mrf.mxu0
    %v3054 = vpop.f32.mrf.mxu0
    %v3055 = vadd.f32 %v3014, %v3054
    %v3056 = vpop.f32.mrf.mxu0
    %3057 = vdwg.mxu0
    %3058 = vst [vmem:[#allocation26] sm:$0xff] %v3052
    %3059 = vst [vmem:[#allocation26 + $0x8] sm:$0xff] %v3055
    // Predicated region
    $region110: #{tpu_custom_call.1} parent=1 // pred_check
      _
    $region111: #{tpu_custom_call.1} parent=1 // pred_check_branch
      %3061 = sbr.rel (0) target = $region113
    $region112: #{tpu_custom_call.1} parent=1 // pred_region
      %s3063 = ssub.s32 256, 256
      %3064 = vsyncadd [#allocation6], %s3063
      %s3065 = sshll.u32 [#allocation26], 4
      %s3066 = int_to_ptr.vmem [resolvable:$true] %s3065
      %3071 = dma.vmem_to_hbm [thread:$0]  %s3066, 256, %s15, [#allocation6], 128, 128, 8
    $region113: #{tpu_custom_call.1} parent=1 // pred_fallthru
      _
    // Predicated region
    $region114: #{tpu_custom_call.1} parent=1 // pred_check
      _
    $region115: #{tpu_custom_call.1} parent=1 // pred_check_branch
      %3073 = sbr.rel (0) target = $region117
    $region116: #{tpu_custom_call.1} parent=1 // pred_region
      %3074 = dma.done [#allocation6], 256
    $region117: #{tpu_custom_call.1} parent=1 // pred_fallthru
      _
    %3075 = vsyncpa [#allocation5], 1
    %3076 = vsyncpa [#allocation10], 1
    %3077 = vsyncpa [#allocation13], 1
    %3078 = vsyncpa [#allocation16], 1
    %3079 = vsyncpa [#allocation19], 1
    %3080 = vsyncpa [#allocation22], 1
    %3081 = vsyncpa [#allocation25], 1
    %3082 = vsyncpa [#allocation6], 1
    %3083 = vsyncpa [#allocation7], 1
  %3084 = vsyncmov [#allocation3]
  %s3085 = vpop.sfrf %3084
  %p3086 = scmp.eq.s32.totalorder %s3085, 0
  %p3087 = pneg %p3086
  %3089 = shalt.err (%p3087)

</llo_original>
